<compile_context>
chip_gen: v7x
topology: tpu7x:2x2x1
jax: 0.10.0
libtpu: 0.0.40
codegen_flags: <defaults>
</compile_context>

<pallas_src>
import functools

import jax
import jax.numpy as jnp
from jax.experimental import pallas as pl
from jax.experimental.pallas import tpu as pltpu

_F32 = jnp.float32
_BF16 = jnp.bfloat16


def _full_spec(arr):
    """Full-array BlockSpec for a grid=(1,) pallas_call."""
    nd = arr.ndim
    return pl.BlockSpec(arr.shape, lambda i, nd=nd: (0,) * nd)


# ----------------------------------------------------------------------------
# Fused PFSPNet forward kernel:
#   encoder:  enc = relu( relu(P @ Wp + bp) @ We1 + relu(m*Wm + bm) @ We2 + be )
#   hoisted:  enc@W_ih (x-side LSTM gates), enc@W1 (attention encoder term)
#   decode:   T steps of LSTMCell -> additive pointer attention -> masked
#             log-softmax -> greedy argmax -> mask update -> gate-row gather.
# Everything stays resident in VMEM / vregs for the whole decode.
# ----------------------------------------------------------------------------
def _pfspnet_kernel(proc_ref, mvec_ref, h0_ref, c0_ref,
                    wp_ref, bp_ref, wm_ref, bm_ref,
                    we1_ref, we2_ref, be_ref,
                    wih_ref, whh_ref, bl_ref,
                    w1_ref, w2_ref, v_ref, g0_ref,
                    sel_ref, lp_ref, enc_ref):
    B, N, H = enc_ref.shape
    A = w1_ref.shape[-1]
    G = wih_ref.shape[-1]                 # 4 * H (fused gate width, 128 lanes)
    T = sel_ref.shape[-1]

    # ------------------------- encoder (runs once) --------------------------
    # bf16 MXU operands, f32 accumulation (single MXU pass on v5e/v6e/v7x).
    wp = wp_ref[...].astype(_BF16)
    we1 = we1_ref[...].astype(_BF16)
    we2 = we2_ref[...].astype(_BF16)
    wih = wih_ref[...].astype(_BF16)
    whh = whh_ref[...].astype(_BF16)
    w1 = w1_ref[...].astype(_BF16)
    w2 = w2_ref[...].astype(_BF16)

    # Part I: per-job processing-time embedding, batch flattened to MXU rows.
    p_emb = jnp.maximum(
        jnp.dot(proc_ref[...].astype(_BF16), wp, preferred_element_type=_F32)
        + bp_ref[...], 0.0)                                       # (B*N, D1)
    p_proj = jnp.dot(p_emb.astype(_BF16), we1,
                     preferred_element_type=_F32)                 # (B*N, H)

    # Part II: machine-count embedding — once per instance, not per job row.
    m_emb = jnp.maximum(mvec_ref[...] * wm_ref[...] + bm_ref[...], 0.0)  # (B, D2)
    m_proj = jnp.dot(m_emb.astype(_BF16), we2,
                     preferred_element_type=_F32)                 # (B, H)

    # Part III: fuse + ReLU (per-instance term broadcast across job rows).
    enc = jnp.maximum(
        p_proj.reshape(B, N, H) + m_proj[:, None, :]
        + be_ref[...].reshape(1, 1, H), 0.0)                      # (B, N, H)
    enc_ref[...] = enc

    # Loop-invariant decoder terms, hoisted out of the decode loop:
    #   enc @ W_ih : x-side LSTM gate projection of every candidate input.
    #   enc @ W1   : additive-attention encoder term.
    enc2d = enc.reshape(B * N, H).astype(_BF16)
    enc_wih = jnp.dot(enc2d, wih, preferred_element_type=_F32).reshape(B, N, G)
    ew1 = jnp.dot(enc2d, w1, preferred_element_type=_F32).reshape(B, N, A)

    # ----------------------- greedy pointer decode --------------------------
    bl = bl_ref[...]                                              # (1, 4H)
    v3 = v_ref[...].reshape(1, 1, A)                              # (1, 1, A)
    col = jax.lax.broadcasted_iota(jnp.int32, (B, N), 1)          # job ids
    tcol = jax.lax.broadcasted_iota(jnp.int32, (B, T), 1)         # step ids

    # Start token: its gate projection is precomputed once and broadcast.
    gx = jnp.broadcast_to(
        jnp.dot(g0_ref[...].astype(_BF16), wih, preferred_element_type=_F32),
        (B, G))                                                   # (B, 4H)
    h = h0_ref[...]                                               # (B, H)
    c = c0_ref[...]                                               # (B, H)
    mask = jnp.zeros((B, N), _F32)
    sel_acc = jnp.zeros((B, T), jnp.int32)
    lp_acc = jnp.zeros((B, T), _F32)

    # T is small and static -> fully unrolled serial decode loop.
    # TODO(synk): switch to lax.fori_loop with a small unroll if T/H grow.
    for t in range(T):
        # LSTMCell: one lane-dense (B,H)@(H,4H) matmul for the h-side; the
        # x-side projection is the gathered, precomputed enc_wih row.
        gates = gx + jnp.dot(h.astype(_BF16), whh,
                             preferred_element_type=_F32) + bl    # (B, 4H)
        i_g = jax.nn.sigmoid(gates[:, 0 * H:1 * H])
        f_g = jax.nn.sigmoid(gates[:, 1 * H:2 * H])
        g_g = jnp.tanh(gates[:, 2 * H:3 * H])
        o_g = jax.nn.sigmoid(gates[:, 3 * H:4 * H])
        c = f_g * c + i_g * g_g
        h = o_g * jnp.tanh(c)

        # Additive pointer attention: u = v . tanh(E@W1 + W2 h), E@W1 hoisted.
        q = jnp.dot(h.astype(_BF16), w2, preferred_element_type=_F32)  # (B, A)
        u = jnp.tanh(ew1 + q[:, None, :])                         # (B, N, A)
        scores = jnp.sum(u * v3, axis=-1)                         # (B, N)

        # Masked log-softmax over jobs (kept in f32; lane reduction).
        masked = scores - 1e9 * mask
        mmax = jnp.max(masked, axis=-1, keepdims=True)            # (B, 1)
        lse = mmax + jnp.log(jnp.sum(jnp.exp(masked - mmax),
                                     axis=-1, keepdims=True))
        logp = masked - lse                                       # (B, N)

        # Greedy argmax (ties -> lowest index, matching jnp.argmax).
        idx = jnp.min(jnp.where(masked == mmax, col, N), axis=-1,
                      keepdims=True)                              # (B, 1) int32
        onehot = (col == idx).astype(_F32)                        # (B, N)

        # Accumulate outputs in vregs; single full-width store after the loop.
        sel_acc = jnp.where(tcol == t, idx, sel_acc)
        lp_acc = jnp.where(tcol == t,
                           jnp.sum(logp * onehot, axis=-1, keepdims=True),
                           lp_acc)

        # Mask update + next-input gate-projection gather (stays in vregs).
        mask = mask + onehot
        gx = jnp.sum(onehot[:, :, None] * enc_wih, axis=1)        # (B, 4H)

    sel_ref[...] = sel_acc
    lp_ref[...] = lp_acc


# ----------------------------------------------------------------------------
# Full PFSPNet forward (greedy decoding; teacher_forcing_ratio == 0.0).
# ----------------------------------------------------------------------------
def pfspnet_forward(proc, m_scalar, params,
                    external_ptr_h_state=None, external_ptr_c_state=None,
                    max_decode_len=None):
    B, N, M = proc.shape
    H = params["be"].shape[-1]
    T = N if max_decode_len is None else max_decode_len
    # Greedy decode with a visited mask is only meaningful for T <= N jobs.
    assert T <= N, "max_decode_len must not exceed the number of jobs"

    proc2d = proc.reshape(B * N, M).astype(jnp.float32)
    mvec = m_scalar.reshape(B, 1).astype(jnp.float32)

    h0 = (jnp.zeros((B, H), jnp.float32) if external_ptr_h_state is None
          else external_ptr_h_state.reshape(B, H).astype(jnp.float32))
    c0 = (jnp.zeros((B, H), jnp.float32) if external_ptr_c_state is None
          else external_ptr_c_state.reshape(B, H).astype(jnp.float32))

    args = (proc2d, mvec, h0, c0,
            params["wp"], params["bp"], params["wm"], params["bm"],
            params["we1"], params["we2"], params["be"],
            params["wih"], params["whh"], params["bl"],
            params["w1"], params["w2"], params["v"], params["g0"])

    sel, lp, enc = pl.pallas_call(
        _pfspnet_kernel,
        out_shape=(jax.ShapeDtypeStruct((B, T), jnp.int32),
                   jax.ShapeDtypeStruct((B, T), jnp.float32),
                   jax.ShapeDtypeStruct((B, N, H), jnp.float32)),
        grid=(1,),
        in_specs=[_full_spec(a) for a in args],
        out_specs=(pl.BlockSpec((B, T), lambda i: (0, 0)),
                   pl.BlockSpec((B, T), lambda i: (0, 0)),
                   pl.BlockSpec((B, N, H), lambda i: (0, 0, 0))),
        compiler_params=pltpu.CompilerParams(
            dimension_semantics=("arbitrary",)),
    )(*args)

    # TODO(synk): teacher forcing / stochastic sampling path not implemented
    # (forward is exercised with teacher_forcing_ratio=0.0 → greedy decode).
    return sel, lp, enc


# ----------------------------------------------------------------------------
# Deterministic synthetic parameters.
#   LSTM weights stored gate-fused: wih/whh are (H, 4H) with gate order
#   (i, f, g, o) along lanes, bias (1, 4H), so the per-step gate math is one
#   lane-dense matmul + static lane slices.
# ----------------------------------------------------------------------------
def init_params(key, M, D1, D2, H, A):
    ks = jax.random.split(key, 10)
    s = 0.1
    p = {
        "wp":  jax.random.normal(ks[0], (M, D1)) * s,
        "bp":  jnp.zeros((1, D1)),
        "wm":  jax.random.normal(ks[1], (1, D2)) * s,
        "bm":  jnp.zeros((1, D2)),
        "we1": jax.random.normal(ks[2], (D1, H)) * s,
        "we2": jax.random.normal(ks[3], (D2, H)) * s,
        "be":  jnp.zeros((1, H)),
        "wih": jax.random.normal(ks[4], (H, 4 * H)) * s,
        "whh": jax.random.normal(ks[5], (H, 4 * H)) * s,
        "bl":  jnp.zeros((1, 4 * H)),
        "w1":  jax.random.normal(ks[6], (H, A)) * s,
        "w2":  jax.random.normal(ks[7], (H, A)) * s,
        "v":   jax.random.normal(ks[8], (1, A)) * s,
        "g0":  jax.random.normal(ks[9], (1, H)) * s,
    }
    return {k: v.astype(jnp.float32) for k, v in p.items()}


if __name__ == "__main__":
    B, N, M = 2, 8, 4          # batch, jobs, machines
    D1, D2, H, A = 32, 16, 32, 32

    key = jax.random.PRNGKey(0)
    kp, kx = jax.random.split(key, 2)
    params = init_params(kp, M, D1, D2, H, A)

    batch_instance_processing_times = jax.random.uniform(
        kx, (B, N, M), jnp.float32, minval=1.0, maxval=10.0)
    batch_num_machines_scalar = jnp.full((B,), float(M), jnp.float32)

    fwd = jax.jit(functools.partial(pfspnet_forward, max_decode_len=None))
    selected, log_probs, encoded = fwd(
        batch_instance_processing_times, batch_num_machines_scalar, params)
    jax.block_until_ready((selected, log_probs, encoded))

    assert selected.shape == (B, N)
    assert log_probs.shape == (B, N)
    assert encoded.shape == (B, N, H)
    # Greedy + mask must produce a valid permutation of jobs per instance.
    assert all(sorted(list(map(int, selected[b]))) == list(range(N))
               for b in range(B))
    # Log-probs must be valid (<= 0).
    assert bool(jnp.all(log_probs <= 1e-5))
    print("KERNEL_OK")
</pallas_src>

<mosaic_0001>
module attributes {stable_mosaic.version = 11 : i64} {
  func.func @_pfspnet_kernel(%arg0: i32, %arg1: memref<16x4xf32, #tpu.memory_space<vmem>>, %arg2: memref<2x1xf32, #tpu.memory_space<vmem>>, %arg3: memref<2x32xf32, #tpu.memory_space<vmem>>, %arg4: memref<2x32xf32, #tpu.memory_space<vmem>>, %arg5: memref<4x32xf32, #tpu.memory_space<vmem>>, %arg6: memref<1x32xf32, #tpu.memory_space<vmem>>, %arg7: memref<1x16xf32, #tpu.memory_space<vmem>>, %arg8: memref<1x16xf32, #tpu.memory_space<vmem>>, %arg9: memref<32x32xf32, #tpu.memory_space<vmem>>, %arg10: memref<16x32xf32, #tpu.memory_space<vmem>>, %arg11: memref<1x32xf32, #tpu.memory_space<vmem>>, %arg12: memref<32x128xf32, #tpu.memory_space<vmem>>, %arg13: memref<32x128xf32, #tpu.memory_space<vmem>>, %arg14: memref<1x128xf32, #tpu.memory_space<vmem>>, %arg15: memref<32x32xf32, #tpu.memory_space<vmem>>, %arg16: memref<32x32xf32, #tpu.memory_space<vmem>>, %arg17: memref<1x32xf32, #tpu.memory_space<vmem>>, %arg18: memref<1x32xf32, #tpu.memory_space<vmem>>, %arg19: memref<2x8xi32, #tpu.memory_space<vmem>>, %arg20: memref<2x8xf32, #tpu.memory_space<vmem>>, %arg21: memref<2x8x32xf32, #tpu.memory_space<vmem>>) attributes {dimension_semantics = [#tpu.dimension_semantics<arbitrary>], iteration_bounds = array<i64: 1>, scalar_prefetch = 0 : i64, scratch_operands = 0 : i64, tpu.core_type = #tpu.core_type<tc>, window_params = [{pipeline_mode = #tpu.pipeline_mode<synchronous>, transform_indices = @transform_0, window_bounds = array<i64: 16, 4>}, {pipeline_mode = #tpu.pipeline_mode<synchronous>, transform_indices = @transform_1, window_bounds = array<i64: 2, 1>}, {pipeline_mode = #tpu.pipeline_mode<synchronous>, transform_indices = @transform_2, window_bounds = array<i64: 2, 32>}, {pipeline_mode = #tpu.pipeline_mode<synchronous>, transform_indices = @transform_3, window_bounds = array<i64: 2, 32>}, {pipeline_mode = #tpu.pipeline_mode<synchronous>, transform_indices = @transform_4, window_bounds = array<i64: 4, 32>}, {pipeline_mode = #tpu.pipeline_mode<synchronous>, transform_indices = @transform_5, window_bounds = array<i64: 1, 32>}, {pipeline_mode = #tpu.pipeline_mode<synchronous>, transform_indices = @transform_6, window_bounds = array<i64: 1, 16>}, {pipeline_mode = #tpu.pipeline_mode<synchronous>, transform_indices = @transform_7, window_bounds = array<i64: 1, 16>}, {pipeline_mode = #tpu.pipeline_mode<synchronous>, transform_indices = @transform_8, window_bounds = array<i64: 32, 32>}, {pipeline_mode = #tpu.pipeline_mode<synchronous>, transform_indices = @transform_9, window_bounds = array<i64: 16, 32>}, {pipeline_mode = #tpu.pipeline_mode<synchronous>, transform_indices = @transform_10, window_bounds = array<i64: 1, 32>}, {pipeline_mode = #tpu.pipeline_mode<synchronous>, transform_indices = @transform_11, window_bounds = array<i64: 32, 128>}, {pipeline_mode = #tpu.pipeline_mode<synchronous>, transform_indices = @transform_12, window_bounds = array<i64: 32, 128>}, {pipeline_mode = #tpu.pipeline_mode<synchronous>, transform_indices = @transform_13, window_bounds = array<i64: 1, 128>}, {pipeline_mode = #tpu.pipeline_mode<synchronous>, transform_indices = @transform_14, window_bounds = array<i64: 32, 32>}, {pipeline_mode = #tpu.pipeline_mode<synchronous>, transform_indices = @transform_15, window_bounds = array<i64: 32, 32>}, {pipeline_mode = #tpu.pipeline_mode<synchronous>, transform_indices = @transform_16, window_bounds = array<i64: 1, 32>}, {pipeline_mode = #tpu.pipeline_mode<synchronous>, transform_indices = @transform_17, window_bounds = array<i64: 1, 32>}, {pipeline_mode = #tpu.pipeline_mode<synchronous>, transform_indices = @transform_18, window_bounds = array<i64: 2, 8>}, {pipeline_mode = #tpu.pipeline_mode<synchronous>, transform_indices = @transform_19, window_bounds = array<i64: 2, 8>}, {pipeline_mode = #tpu.pipeline_mode<synchronous>, transform_indices = @transform_20, window_bounds = array<i64: 2, 8, 32>}]} {
    %c0 = arith.constant 0 : index
    %c0_0 = arith.constant 0 : index
    %0 = vector.load %arg5[%c0, %c0_0] : memref<4x32xf32, #tpu.memory_space<vmem>>, vector<4x32xf32>
    %1 = arith.truncf %0 : vector<4x32xf32> to vector<4x32xbf16>
    %c0_1 = arith.constant 0 : index
    %c0_2 = arith.constant 0 : index
    %2 = vector.load %arg9[%c0_1, %c0_2] : memref<32x32xf32, #tpu.memory_space<vmem>>, vector<32x32xf32>
    %3 = arith.truncf %2 : vector<32x32xf32> to vector<32x32xbf16>
    %c0_3 = arith.constant 0 : index
    %c0_4 = arith.constant 0 : index
    %4 = vector.load %arg10[%c0_3, %c0_4] : memref<16x32xf32, #tpu.memory_space<vmem>>, vector<16x32xf32>
    %5 = arith.truncf %4 : vector<16x32xf32> to vector<16x32xbf16>
    %c0_5 = arith.constant 0 : index
    %c0_6 = arith.constant 0 : index
    %6 = vector.load %arg12[%c0_5, %c0_6] : memref<32x128xf32, #tpu.memory_space<vmem>>, vector<32x128xf32>
    %7 = arith.truncf %6 : vector<32x128xf32> to vector<32x128xbf16>
    %c0_7 = arith.constant 0 : index
    %c0_8 = arith.constant 0 : index
    %8 = vector.load %arg13[%c0_7, %c0_8] : memref<32x128xf32, #tpu.memory_space<vmem>>, vector<32x128xf32>
    %9 = arith.truncf %8 : vector<32x128xf32> to vector<32x128xbf16>
    %c0_9 = arith.constant 0 : index
    %c0_10 = arith.constant 0 : index
    %10 = vector.load %arg15[%c0_9, %c0_10] : memref<32x32xf32, #tpu.memory_space<vmem>>, vector<32x32xf32>
    %11 = arith.truncf %10 : vector<32x32xf32> to vector<32x32xbf16>
    %c0_11 = arith.constant 0 : index
    %c0_12 = arith.constant 0 : index
    %12 = vector.load %arg16[%c0_11, %c0_12] : memref<32x32xf32, #tpu.memory_space<vmem>>, vector<32x32xf32>
    %13 = arith.truncf %12 : vector<32x32xf32> to vector<32x32xbf16>
    %c0_13 = arith.constant 0 : index
    %c0_14 = arith.constant 0 : index
    %14 = vector.load %arg1[%c0_13, %c0_14] : memref<16x4xf32, #tpu.memory_space<vmem>>, vector<16x4xf32>
    %15 = arith.truncf %14 : vector<16x4xf32> to vector<16x4xbf16>
    %cst = arith.constant dense<0.000000e+00> : vector<16x32xf32>
    %16 = tpu.matmul %15, %1, %cst {dimension_numbers = #tpu.dot_dimension_numbers<[1], [0], [0], [1], [0, 0, 1, 1], [], []>} : vector<16x4xbf16>, vector<4x32xbf16>, vector<16x32xf32> -> vector<16x32xf32>
    %c0_15 = arith.constant 0 : index
    %c0_16 = arith.constant 0 : index
    %17 = vector.load %arg6[%c0_15, %c0_16] : memref<1x32xf32, #tpu.memory_space<vmem>>, vector<1x32xf32>
    %18 = vector.broadcast %17 : vector<1x32xf32> to vector<16x32xf32>
    %19 = arith.addf %16, %18 : vector<16x32xf32>
    %cst_17 = arith.constant 0.000000e+00 : f32
    %20 = vector.broadcast %cst_17 : f32 to vector<16x32xf32>
    %21 = arith.maximumf %19, %20 : vector<16x32xf32>
    %22 = arith.truncf %21 : vector<16x32xf32> to vector<16x32xbf16>
    %cst_18 = arith.constant dense<0.000000e+00> : vector<16x32xf32>
    %23 = tpu.matmul %22, %3, %cst_18 {dimension_numbers = #tpu.dot_dimension_numbers<[1], [0], [0], [1], [0, 0, 1, 1], [], []>} : vector<16x32xbf16>, vector<32x32xbf16>, vector<16x32xf32> -> vector<16x32xf32>
    %c0_19 = arith.constant 0 : index
    %c0_20 = arith.constant 0 : index
    %24 = vector.load %arg2[%c0_19, %c0_20] : memref<2x1xf32, #tpu.memory_space<vmem>>, vector<2x1xf32>
    %c0_21 = arith.constant 0 : index
    %c0_22 = arith.constant 0 : index
    %25 = vector.load %arg7[%c0_21, %c0_22] : memref<1x16xf32, #tpu.memory_space<vmem>>, vector<1x16xf32>
    %26 = vector.broadcast %24 : vector<2x1xf32> to vector<2x16xf32>
    %27 = vector.broadcast %25 : vector<1x16xf32> to vector<2x16xf32>
    %28 = arith.mulf %26, %27 : vector<2x16xf32>
    %c0_23 = arith.constant 0 : index
    %c0_24 = arith.constant 0 : index
    %29 = vector.load %arg8[%c0_23, %c0_24] : memref<1x16xf32, #tpu.memory_space<vmem>>, vector<1x16xf32>
    %30 = vector.broadcast %29 : vector<1x16xf32> to vector<2x16xf32>
    %31 = arith.addf %28, %30 : vector<2x16xf32>
    %cst_25 = arith.constant 0.000000e+00 : f32
    %32 = vector.broadcast %cst_25 : f32 to vector<2x16xf32>
    %33 = arith.maximumf %31, %32 : vector<2x16xf32>
    %34 = arith.truncf %33 : vector<2x16xf32> to vector<2x16xbf16>
    %cst_26 = arith.constant dense<0.000000e+00> : vector<2x32xf32>
    %35 = tpu.matmul %34, %5, %cst_26 {dimension_numbers = #tpu.dot_dimension_numbers<[1], [0], [0], [1], [0, 0, 1, 1], [], []>} : vector<2x16xbf16>, vector<16x32xbf16>, vector<2x32xf32> -> vector<2x32xf32>
    %36 = vector.shape_cast %23 : vector<16x32xf32> to vector<2x8x32xf32>
    %37 = vector.shape_cast %35 : vector<2x32xf32> to vector<2x1x32xf32>
    %38 = vector.broadcast %37 : vector<2x1x32xf32> to vector<2x8x32xf32>
    %39 = arith.addf %36, %38 : vector<2x8x32xf32>
    %c0_27 = arith.constant 0 : index
    %c0_28 = arith.constant 0 : index
    %40 = vector.load %arg11[%c0_27, %c0_28] : memref<1x32xf32, #tpu.memory_space<vmem>>, vector<1x32xf32>
    %41 = vector.shape_cast %40 : vector<1x32xf32> to vector<1x1x32xf32>
    %42 = vector.broadcast %41 : vector<1x1x32xf32> to vector<2x8x32xf32>
    %43 = arith.addf %39, %42 : vector<2x8x32xf32>
    %cst_29 = arith.constant 0.000000e+00 : f32
    %44 = vector.broadcast %cst_29 : f32 to vector<2x8x32xf32>
    %45 = arith.maximumf %43, %44 : vector<2x8x32xf32>
    %c0_30 = arith.constant 0 : index
    %c0_31 = arith.constant 0 : index
    %c0_32 = arith.constant 0 : index
    %46 = vector.load %arg21[%c0_30, %c0_31, %c0_32] : memref<2x8x32xf32, #tpu.memory_space<vmem>>, vector<2x8x32xf32>
    tpu.vector_store %arg21[%c0_30, %c0_31, %c0_32], %45 {strides = array<i32>} : memref<2x8x32xf32, #tpu.memory_space<vmem>>, vector<2x8x32xf32>,
    %47 = vector.shape_cast %45 : vector<2x8x32xf32> to vector<16x32xf32>
    %48 = arith.truncf %47 : vector<16x32xf32> to vector<16x32xbf16>
    %cst_33 = arith.constant dense<0.000000e+00> : vector<16x128xf32>
    %49 = tpu.matmul %48, %7, %cst_33 {dimension_numbers = #tpu.dot_dimension_numbers<[1], [0], [0], [1], [0, 0, 1, 1], [], []>} : vector<16x32xbf16>, vector<32x128xbf16>, vector<16x128xf32> -> vector<16x128xf32>
    %50 = vector.shape_cast %49 : vector<16x128xf32> to vector<2x8x128xf32>
    %cst_34 = arith.constant dense<0.000000e+00> : vector<16x32xf32>
    %51 = tpu.matmul %48, %11, %cst_34 {dimension_numbers = #tpu.dot_dimension_numbers<[1], [0], [0], [1], [0, 0, 1, 1], [], []>} : vector<16x32xbf16>, vector<32x32xbf16>, vector<16x32xf32> -> vector<16x32xf32>
    %52 = vector.shape_cast %51 : vector<16x32xf32> to vector<2x8x32xf32>
    %c0_35 = arith.constant 0 : index
    %c0_36 = arith.constant 0 : index
    %53 = vector.load %arg14[%c0_35, %c0_36] : memref<1x128xf32, #tpu.memory_space<vmem>>, vector<1x128xf32>
    %c0_37 = arith.constant 0 : index
    %c0_38 = arith.constant 0 : index
    %54 = vector.load %arg17[%c0_37, %c0_38] : memref<1x32xf32, #tpu.memory_space<vmem>>, vector<1x32xf32>
    %55 = vector.shape_cast %54 : vector<1x32xf32> to vector<1x1x32xf32>
    %56 = tpu.iota {dimensions = array<i32: 1>} : vector<2x8xi32>
    %57 = tpu.iota {dimensions = array<i32: 1>} : vector<2x8xi32>
    %c0_39 = arith.constant 0 : index
    %c0_40 = arith.constant 0 : index
    %58 = vector.load %arg18[%c0_39, %c0_40] : memref<1x32xf32, #tpu.memory_space<vmem>>, vector<1x32xf32>
    %59 = arith.truncf %58 : vector<1x32xf32> to vector<1x32xbf16>
    %cst_41 = arith.constant dense<0.000000e+00> : vector<1x128xf32>
    %60 = tpu.matmul %59, %7, %cst_41 {dimension_numbers = #tpu.dot_dimension_numbers<[1], [0], [0], [1], [0, 0, 1, 1], [], []>} : vector<1x32xbf16>, vector<32x128xbf16>, vector<1x128xf32> -> vector<1x128xf32>
    %61 = vector.shape_cast %60 : vector<1x128xf32> to vector<1x128xf32>
    %62 = vector.broadcast %61 : vector<1x128xf32> to vector<2x128xf32>
    %c0_42 = arith.constant 0 : index
    %c0_43 = arith.constant 0 : index
    %63 = vector.load %arg3[%c0_42, %c0_43] : memref<2x32xf32, #tpu.memory_space<vmem>>, vector<2x32xf32>
    %c0_44 = arith.constant 0 : index
    %c0_45 = arith.constant 0 : index
    %64 = vector.load %arg4[%c0_44, %c0_45] : memref<2x32xf32, #tpu.memory_space<vmem>>, vector<2x32xf32>
    %cst_46 = arith.constant 0.000000e+00 : f32
    %65 = vector.broadcast %cst_46 : f32 to vector<2x8xf32>
    %c0_i32 = arith.constant 0 : i32
    %66 = vector.broadcast %c0_i32 : i32 to vector<2x8xi32>
    %cst_47 = arith.constant 0.000000e+00 : f32
    %67 = vector.broadcast %cst_47 : f32 to vector<2x8xf32>
    %68 = arith.truncf %63 : vector<2x32xf32> to vector<2x32xbf16>
    %cst_48 = arith.constant dense<0.000000e+00> : vector<2x128xf32>
    %69 = tpu.matmul %68, %9, %cst_48 {dimension_numbers = #tpu.dot_dimension_numbers<[1], [0], [0], [1], [0, 0, 1, 1], [], []>} : vector<2x32xbf16>, vector<32x128xbf16>, vector<2x128xf32> -> vector<2x128xf32>
    %70 = arith.addf %62, %69 : vector<2x128xf32>
    %71 = vector.broadcast %53 : vector<1x128xf32> to vector<2x128xf32>
    %72 = arith.addf %70, %71 : vector<2x128xf32>
    %73 = vector.extract_strided_slice %72 {offsets = [0, 0], sizes = [2, 32], strides = [1, 1]} : vector<2x128xf32> to vector<2x32xf32>
    %74 = arith.negf %73 : vector<2x32xf32>
    %75 = math.exp %74 : vector<2x32xf32>
    %cst_49 = arith.constant 1.000000e+00 : f32
    %76 = vector.broadcast %cst_49 : f32 to vector<2x32xf32>
    %77 = arith.addf %76, %75 : vector<2x32xf32>
    %78 = arith.divf %76, %77 : vector<2x32xf32>
    %79 = vector.extract_strided_slice %72 {offsets = [0, 32], sizes = [2, 32], strides = [1, 1]} : vector<2x128xf32> to vector<2x32xf32>
    %80 = arith.negf %79 : vector<2x32xf32>
    %81 = math.exp %80 : vector<2x32xf32>
    %cst_50 = arith.constant 1.000000e+00 : f32
    %82 = vector.broadcast %cst_50 : f32 to vector<2x32xf32>
    %83 = arith.addf %82, %81 : vector<2x32xf32>
    %84 = arith.divf %82, %83 : vector<2x32xf32>
    %85 = vector.extract_strided_slice %72 {offsets = [0, 64], sizes = [2, 32], strides = [1, 1]} : vector<2x128xf32> to vector<2x32xf32>
    %86 = math.tanh %85 : vector<2x32xf32>
    %87 = vector.extract_strided_slice %72 {offsets = [0, 96], sizes = [2, 32], strides = [1, 1]} : vector<2x128xf32> to vector<2x32xf32>
    %88 = arith.negf %87 : vector<2x32xf32>
    %89 = math.exp %88 : vector<2x32xf32>
    %cst_51 = arith.constant 1.000000e+00 : f32
    %90 = vector.broadcast %cst_51 : f32 to vector<2x32xf32>
    %91 = arith.addf %90, %89 : vector<2x32xf32>
    %92 = arith.divf %90, %91 : vector<2x32xf32>
    %93 = arith.mulf %84, %64 : vector<2x32xf32>
    %94 = arith.mulf %78, %86 : vector<2x32xf32>
    %95 = arith.addf %93, %94 : vector<2x32xf32>
    %96 = math.tanh %95 : vector<2x32xf32>
    %97 = arith.mulf %92, %96 : vector<2x32xf32>
    %98 = arith.truncf %97 : vector<2x32xf32> to vector<2x32xbf16>
    %cst_52 = arith.constant dense<0.000000e+00> : vector<2x32xf32>
    %99 = tpu.matmul %98, %13, %cst_52 {dimension_numbers = #tpu.dot_dimension_numbers<[1], [0], [0], [1], [0, 0, 1, 1], [], []>} : vector<2x32xbf16>, vector<32x32xbf16>, vector<2x32xf32> -> vector<2x32xf32>
    %100 = vector.shape_cast %99 : vector<2x32xf32> to vector<2x1x32xf32>
    %101 = vector.broadcast %100 : vector<2x1x32xf32> to vector<2x8x32xf32>
    %102 = arith.addf %52, %101 : vector<2x8x32xf32>
    %103 = math.tanh %102 : vector<2x8x32xf32>
    %104 = vector.broadcast %55 : vector<1x1x32xf32> to vector<2x8x32xf32>
    %105 = arith.mulf %103, %104 : vector<2x8x32xf32>
    %cst_53 = arith.constant dense<0.000000e+00> : vector<2x8xf32>
    %106 = vector.multi_reduction <add>, %105, %cst_53 [2] : vector<2x8x32xf32> to vector<2x8xf32>
    %cst_54 = arith.constant 1.000000e+09 : f32
    %107 = vector.broadcast %cst_54 : f32 to vector<2x8xf32>
    %108 = arith.mulf %107, %65 : vector<2x8xf32>
    %109 = arith.subf %106, %108 : vector<2x8xf32>
    %cst_55 = arith.constant dense<0xFF800000> : vector<2xf32>
    %110 = vector.multi_reduction <maximumf>, %109, %cst_55 [1] : vector<2x8xf32> to vector<2xf32>
    %111 = vector.shape_cast %110 : vector<2xf32> to vector<2x1xf32>
    %112 = vector.broadcast %111 : vector<2x1xf32> to vector<2x8xf32>
    %113 = arith.subf %109, %112 : vector<2x8xf32>
    %114 = math.exp %113 : vector<2x8xf32>
    %cst_56 = arith.constant dense<0.000000e+00> : vector<2xf32>
    %115 = vector.multi_reduction <add>, %114, %cst_56 [1] : vector<2x8xf32> to vector<2xf32>
    %116 = vector.shape_cast %115 : vector<2xf32> to vector<2x1xf32>
    %117 = math.log %116 : vector<2x1xf32>
    %118 = arith.addf %111, %117 : vector<2x1xf32>
    %119 = vector.broadcast %118 : vector<2x1xf32> to vector<2x8xf32>
    %120 = arith.subf %109, %119 : vector<2x8xf32>
    %121 = vector.broadcast %111 : vector<2x1xf32> to vector<2x8xf32>
    %122 = arith.cmpf oeq, %109, %121 : vector<2x8xf32>
    %c8_i32 = arith.constant 8 : i32
    %123 = vector.broadcast %c8_i32 : i32 to vector<2x8xi32>
    %124 = arith.select %122, %56, %123 : vector<2x8xi1>, vector<2x8xi32>
    %cst_57 = arith.constant dense<2147483647> : vector<2xi32>
    %125 = vector.multi_reduction <minsi>, %124, %cst_57 [1] : vector<2x8xi32> to vector<2xi32>
    %126 = vector.shape_cast %125 : vector<2xi32> to vector<2x1xi32>
    %127 = vector.broadcast %126 : vector<2x1xi32> to vector<2x8xi32>
    %128 = arith.cmpi eq, %56, %127 : vector<2x8xi32>
    %129 = arith.extui %128 : vector<2x8xi1> to vector<2x8xi32>
    %130 = arith.sitofp %129 : vector<2x8xi32> to vector<2x8xf32>
    %c0_i32_58 = arith.constant 0 : i32
    %131 = vector.broadcast %c0_i32_58 : i32 to vector<2x8xi32>
    %132 = arith.cmpi eq, %57, %131 : vector<2x8xi32>
    %133 = vector.shape_cast %126 : vector<2x1xi32> to vector<2x1xi32>
    %134 = vector.broadcast %133 : vector<2x1xi32> to vector<2x8xi32>
    %135 = arith.select %132, %134, %66 : vector<2x8xi1>, vector<2x8xi32>
    %c0_i32_59 = arith.constant 0 : i32
    %136 = vector.broadcast %c0_i32_59 : i32 to vector<2x8xi32>
    %137 = arith.cmpi eq, %57, %136 : vector<2x8xi32>
    %138 = arith.mulf %120, %130 : vector<2x8xf32>
    %cst_60 = arith.constant dense<0.000000e+00> : vector<2xf32>
    %139 = vector.multi_reduction <add>, %138, %cst_60 [1] : vector<2x8xf32> to vector<2xf32>
    %140 = vector.shape_cast %139 : vector<2xf32> to vector<2x1xf32>
    %141 = vector.shape_cast %140 : vector<2x1xf32> to vector<2x1xf32>
    %142 = vector.broadcast %141 : vector<2x1xf32> to vector<2x8xf32>
    %143 = arith.select %137, %142, %67 : vector<2x8xi1>, vector<2x8xf32>
    %144 = arith.addf %65, %130 : vector<2x8xf32>
    %145 = vector.shape_cast %130 : vector<2x8xf32> to vector<2x8x1xf32>
    %146 = vector.broadcast %145 : vector<2x8x1xf32> to vector<2x8x128xf32>
    %147 = arith.mulf %146, %50 : vector<2x8x128xf32>
    %cst_61 = arith.constant dense<0.000000e+00> : vector<2x128xf32>
    %148 = vector.multi_reduction <add>, %147, %cst_61 [1] : vector<2x8x128xf32> to vector<2x128xf32>
    %149 = arith.truncf %97 : vector<2x32xf32> to vector<2x32xbf16>
    %cst_62 = arith.constant dense<0.000000e+00> : vector<2x128xf32>
    %150 = tpu.matmul %149, %9, %cst_62 {dimension_numbers = #tpu.dot_dimension_numbers<[1], [0], [0], [1], [0, 0, 1, 1], [], []>} : vector<2x32xbf16>, vector<32x128xbf16>, vector<2x128xf32> -> vector<2x128xf32>
    %151 = arith.addf %148, %150 : vector<2x128xf32>
    %152 = vector.broadcast %53 : vector<1x128xf32> to vector<2x128xf32>
    %153 = arith.addf %151, %152 : vector<2x128xf32>
    %154 = vector.extract_strided_slice %153 {offsets = [0, 0], sizes = [2, 32], strides = [1, 1]} : vector<2x128xf32> to vector<2x32xf32>
    %155 = arith.negf %154 : vector<2x32xf32>
    %156 = math.exp %155 : vector<2x32xf32>
    %cst_63 = arith.constant 1.000000e+00 : f32
    %157 = vector.broadcast %cst_63 : f32 to vector<2x32xf32>
    %158 = arith.addf %157, %156 : vector<2x32xf32>
    %159 = arith.divf %157, %158 : vector<2x32xf32>
    %160 = vector.extract_strided_slice %153 {offsets = [0, 32], sizes = [2, 32], strides = [1, 1]} : vector<2x128xf32> to vector<2x32xf32>
    %161 = arith.negf %160 : vector<2x32xf32>
    %162 = math.exp %161 : vector<2x32xf32>
    %cst_64 = arith.constant 1.000000e+00 : f32
    %163 = vector.broadcast %cst_64 : f32 to vector<2x32xf32>
    %164 = arith.addf %163, %162 : vector<2x32xf32>
    %165 = arith.divf %163, %164 : vector<2x32xf32>
    %166 = vector.extract_strided_slice %153 {offsets = [0, 64], sizes = [2, 32], strides = [1, 1]} : vector<2x128xf32> to vector<2x32xf32>
    %167 = math.tanh %166 : vector<2x32xf32>
    %168 = vector.extract_strided_slice %153 {offsets = [0, 96], sizes = [2, 32], strides = [1, 1]} : vector<2x128xf32> to vector<2x32xf32>
    %169 = arith.negf %168 : vector<2x32xf32>
    %170 = math.exp %169 : vector<2x32xf32>
    %cst_65 = arith.constant 1.000000e+00 : f32
    %171 = vector.broadcast %cst_65 : f32 to vector<2x32xf32>
    %172 = arith.addf %171, %170 : vector<2x32xf32>
    %173 = arith.divf %171, %172 : vector<2x32xf32>
    %174 = arith.mulf %165, %95 : vector<2x32xf32>
    %175 = arith.mulf %159, %167 : vector<2x32xf32>
    %176 = arith.addf %174, %175 : vector<2x32xf32>
    %177 = math.tanh %176 : vector<2x32xf32>
    %178 = arith.mulf %173, %177 : vector<2x32xf32>
    %179 = arith.truncf %178 : vector<2x32xf32> to vector<2x32xbf16>
    %cst_66 = arith.constant dense<0.000000e+00> : vector<2x32xf32>
    %180 = tpu.matmul %179, %13, %cst_66 {dimension_numbers = #tpu.dot_dimension_numbers<[1], [0], [0], [1], [0, 0, 1, 1], [], []>} : vector<2x32xbf16>, vector<32x32xbf16>, vector<2x32xf32> -> vector<2x32xf32>
    %181 = vector.shape_cast %180 : vector<2x32xf32> to vector<2x1x32xf32>
    %182 = vector.broadcast %181 : vector<2x1x32xf32> to vector<2x8x32xf32>
    %183 = arith.addf %52, %182 : vector<2x8x32xf32>
    %184 = math.tanh %183 : vector<2x8x32xf32>
    %185 = vector.broadcast %55 : vector<1x1x32xf32> to vector<2x8x32xf32>
    %186 = arith.mulf %184, %185 : vector<2x8x32xf32>
    %cst_67 = arith.constant dense<0.000000e+00> : vector<2x8xf32>
    %187 = vector.multi_reduction <add>, %186, %cst_67 [2] : vector<2x8x32xf32> to vector<2x8xf32>
    %cst_68 = arith.constant 1.000000e+09 : f32
    %188 = vector.broadcast %cst_68 : f32 to vector<2x8xf32>
    %189 = arith.mulf %188, %144 : vector<2x8xf32>
    %190 = arith.subf %187, %189 : vector<2x8xf32>
    %cst_69 = arith.constant dense<0xFF800000> : vector<2xf32>
    %191 = vector.multi_reduction <maximumf>, %190, %cst_69 [1] : vector<2x8xf32> to vector<2xf32>
    %192 = vector.shape_cast %191 : vector<2xf32> to vector<2x1xf32>
    %193 = vector.broadcast %192 : vector<2x1xf32> to vector<2x8xf32>
    %194 = arith.subf %190, %193 : vector<2x8xf32>
    %195 = math.exp %194 : vector<2x8xf32>
    %cst_70 = arith.constant dense<0.000000e+00> : vector<2xf32>
    %196 = vector.multi_reduction <add>, %195, %cst_70 [1] : vector<2x8xf32> to vector<2xf32>
    %197 = vector.shape_cast %196 : vector<2xf32> to vector<2x1xf32>
    %198 = math.log %197 : vector<2x1xf32>
    %199 = arith.addf %192, %198 : vector<2x1xf32>
    %200 = vector.broadcast %199 : vector<2x1xf32> to vector<2x8xf32>
    %201 = arith.subf %190, %200 : vector<2x8xf32>
    %202 = vector.broadcast %192 : vector<2x1xf32> to vector<2x8xf32>
    %203 = arith.cmpf oeq, %190, %202 : vector<2x8xf32>
    %c8_i32_71 = arith.constant 8 : i32
    %204 = vector.broadcast %c8_i32_71 : i32 to vector<2x8xi32>
    %205 = arith.select %203, %56, %204 : vector<2x8xi1>, vector<2x8xi32>
    %cst_72 = arith.constant dense<2147483647> : vector<2xi32>
    %206 = vector.multi_reduction <minsi>, %205, %cst_72 [1] : vector<2x8xi32> to vector<2xi32>
    %207 = vector.shape_cast %206 : vector<2xi32> to vector<2x1xi32>
    %208 = vector.broadcast %207 : vector<2x1xi32> to vector<2x8xi32>
    %209 = arith.cmpi eq, %56, %208 : vector<2x8xi32>
    %210 = arith.extui %209 : vector<2x8xi1> to vector<2x8xi32>
    %211 = arith.sitofp %210 : vector<2x8xi32> to vector<2x8xf32>
    %c1_i32 = arith.constant 1 : i32
    %212 = vector.broadcast %c1_i32 : i32 to vector<2x8xi32>
    %213 = arith.cmpi eq, %57, %212 : vector<2x8xi32>
    %214 = vector.shape_cast %207 : vector<2x1xi32> to vector<2x1xi32>
    %215 = vector.broadcast %214 : vector<2x1xi32> to vector<2x8xi32>
    %216 = arith.select %213, %215, %135 : vector<2x8xi1>, vector<2x8xi32>
    %c1_i32_73 = arith.constant 1 : i32
    %217 = vector.broadcast %c1_i32_73 : i32 to vector<2x8xi32>
    %218 = arith.cmpi eq, %57, %217 : vector<2x8xi32>
    %219 = arith.mulf %201, %211 : vector<2x8xf32>
    %cst_74 = arith.constant dense<0.000000e+00> : vector<2xf32>
    %220 = vector.multi_reduction <add>, %219, %cst_74 [1] : vector<2x8xf32> to vector<2xf32>
    %221 = vector.shape_cast %220 : vector<2xf32> to vector<2x1xf32>
    %222 = vector.shape_cast %221 : vector<2x1xf32> to vector<2x1xf32>
    %223 = vector.broadcast %222 : vector<2x1xf32> to vector<2x8xf32>
    %224 = arith.select %218, %223, %143 : vector<2x8xi1>, vector<2x8xf32>
    %225 = arith.addf %144, %211 : vector<2x8xf32>
    %226 = vector.shape_cast %211 : vector<2x8xf32> to vector<2x8x1xf32>
    %227 = vector.broadcast %226 : vector<2x8x1xf32> to vector<2x8x128xf32>
    %228 = arith.mulf %227, %50 : vector<2x8x128xf32>
    %cst_75 = arith.constant dense<0.000000e+00> : vector<2x128xf32>
    %229 = vector.multi_reduction <add>, %228, %cst_75 [1] : vector<2x8x128xf32> to vector<2x128xf32>
    %230 = arith.truncf %178 : vector<2x32xf32> to vector<2x32xbf16>
    %cst_76 = arith.constant dense<0.000000e+00> : vector<2x128xf32>
    %231 = tpu.matmul %230, %9, %cst_76 {dimension_numbers = #tpu.dot_dimension_numbers<[1], [0], [0], [1], [0, 0, 1, 1], [], []>} : vector<2x32xbf16>, vector<32x128xbf16>, vector<2x128xf32> -> vector<2x128xf32>
    %232 = arith.addf %229, %231 : vector<2x128xf32>
    %233 = vector.broadcast %53 : vector<1x128xf32> to vector<2x128xf32>
    %234 = arith.addf %232, %233 : vector<2x128xf32>
    %235 = vector.extract_strided_slice %234 {offsets = [0, 0], sizes = [2, 32], strides = [1, 1]} : vector<2x128xf32> to vector<2x32xf32>
    %236 = arith.negf %235 : vector<2x32xf32>
    %237 = math.exp %236 : vector<2x32xf32>
    %cst_77 = arith.constant 1.000000e+00 : f32
    %238 = vector.broadcast %cst_77 : f32 to vector<2x32xf32>
    %239 = arith.addf %238, %237 : vector<2x32xf32>
    %240 = arith.divf %238, %239 : vector<2x32xf32>
    %241 = vector.extract_strided_slice %234 {offsets = [0, 32], sizes = [2, 32], strides = [1, 1]} : vector<2x128xf32> to vector<2x32xf32>
    %242 = arith.negf %241 : vector<2x32xf32>
    %243 = math.exp %242 : vector<2x32xf32>
    %cst_78 = arith.constant 1.000000e+00 : f32
    %244 = vector.broadcast %cst_78 : f32 to vector<2x32xf32>
    %245 = arith.addf %244, %243 : vector<2x32xf32>
    %246 = arith.divf %244, %245 : vector<2x32xf32>
    %247 = vector.extract_strided_slice %234 {offsets = [0, 64], sizes = [2, 32], strides = [1, 1]} : vector<2x128xf32> to vector<2x32xf32>
    %248 = math.tanh %247 : vector<2x32xf32>
    %249 = vector.extract_strided_slice %234 {offsets = [0, 96], sizes = [2, 32], strides = [1, 1]} : vector<2x128xf32> to vector<2x32xf32>
    %250 = arith.negf %249 : vector<2x32xf32>
    %251 = math.exp %250 : vector<2x32xf32>
    %cst_79 = arith.constant 1.000000e+00 : f32
    %252 = vector.broadcast %cst_79 : f32 to vector<2x32xf32>
    %253 = arith.addf %252, %251 : vector<2x32xf32>
    %254 = arith.divf %252, %253 : vector<2x32xf32>
    %255 = arith.mulf %246, %176 : vector<2x32xf32>
    %256 = arith.mulf %240, %248 : vector<2x32xf32>
    %257 = arith.addf %255, %256 : vector<2x32xf32>
    %258 = math.tanh %257 : vector<2x32xf32>
    %259 = arith.mulf %254, %258 : vector<2x32xf32>
    %260 = arith.truncf %259 : vector<2x32xf32> to vector<2x32xbf16>
    %cst_80 = arith.constant dense<0.000000e+00> : vector<2x32xf32>
    %261 = tpu.matmul %260, %13, %cst_80 {dimension_numbers = #tpu.dot_dimension_numbers<[1], [0], [0], [1], [0, 0, 1, 1], [], []>} : vector<2x32xbf16>, vector<32x32xbf16>, vector<2x32xf32> -> vector<2x32xf32>
    %262 = vector.shape_cast %261 : vector<2x32xf32> to vector<2x1x32xf32>
    %263 = vector.broadcast %262 : vector<2x1x32xf32> to vector<2x8x32xf32>
    %264 = arith.addf %52, %263 : vector<2x8x32xf32>
    %265 = math.tanh %264 : vector<2x8x32xf32>
    %266 = vector.broadcast %55 : vector<1x1x32xf32> to vector<2x8x32xf32>
    %267 = arith.mulf %265, %266 : vector<2x8x32xf32>
    %cst_81 = arith.constant dense<0.000000e+00> : vector<2x8xf32>
    %268 = vector.multi_reduction <add>, %267, %cst_81 [2] : vector<2x8x32xf32> to vector<2x8xf32>
    %cst_82 = arith.constant 1.000000e+09 : f32
    %269 = vector.broadcast %cst_82 : f32 to vector<2x8xf32>
    %270 = arith.mulf %269, %225 : vector<2x8xf32>
    %271 = arith.subf %268, %270 : vector<2x8xf32>
    %cst_83 = arith.constant dense<0xFF800000> : vector<2xf32>
    %272 = vector.multi_reduction <maximumf>, %271, %cst_83 [1] : vector<2x8xf32> to vector<2xf32>
    %273 = vector.shape_cast %272 : vector<2xf32> to vector<2x1xf32>
    %274 = vector.broadcast %273 : vector<2x1xf32> to vector<2x8xf32>
    %275 = arith.subf %271, %274 : vector<2x8xf32>
    %276 = math.exp %275 : vector<2x8xf32>
    %cst_84 = arith.constant dense<0.000000e+00> : vector<2xf32>
    %277 = vector.multi_reduction <add>, %276, %cst_84 [1] : vector<2x8xf32> to vector<2xf32>
    %278 = vector.shape_cast %277 : vector<2xf32> to vector<2x1xf32>
    %279 = math.log %278 : vector<2x1xf32>
    %280 = arith.addf %273, %279 : vector<2x1xf32>
    %281 = vector.broadcast %280 : vector<2x1xf32> to vector<2x8xf32>
    %282 = arith.subf %271, %281 : vector<2x8xf32>
    %283 = vector.broadcast %273 : vector<2x1xf32> to vector<2x8xf32>
    %284 = arith.cmpf oeq, %271, %283 : vector<2x8xf32>
    %c8_i32_85 = arith.constant 8 : i32
    %285 = vector.broadcast %c8_i32_85 : i32 to vector<2x8xi32>
    %286 = arith.select %284, %56, %285 : vector<2x8xi1>, vector<2x8xi32>
    %cst_86 = arith.constant dense<2147483647> : vector<2xi32>
    %287 = vector.multi_reduction <minsi>, %286, %cst_86 [1] : vector<2x8xi32> to vector<2xi32>
    %288 = vector.shape_cast %287 : vector<2xi32> to vector<2x1xi32>
    %289 = vector.broadcast %288 : vector<2x1xi32> to vector<2x8xi32>
    %290 = arith.cmpi eq, %56, %289 : vector<2x8xi32>
    %291 = arith.extui %290 : vector<2x8xi1> to vector<2x8xi32>
    %292 = arith.sitofp %291 : vector<2x8xi32> to vector<2x8xf32>
    %c2_i32 = arith.constant 2 : i32
    %293 = vector.broadcast %c2_i32 : i32 to vector<2x8xi32>
    %294 = arith.cmpi eq, %57, %293 : vector<2x8xi32>
    %295 = vector.shape_cast %288 : vector<2x1xi32> to vector<2x1xi32>
    %296 = vector.broadcast %295 : vector<2x1xi32> to vector<2x8xi32>
    %297 = arith.select %294, %296, %216 : vector<2x8xi1>, vector<2x8xi32>
    %c2_i32_87 = arith.constant 2 : i32
    %298 = vector.broadcast %c2_i32_87 : i32 to vector<2x8xi32>
    %299 = arith.cmpi eq, %57, %298 : vector<2x8xi32>
    %300 = arith.mulf %282, %292 : vector<2x8xf32>
    %cst_88 = arith.constant dense<0.000000e+00> : vector<2xf32>
    %301 = vector.multi_reduction <add>, %300, %cst_88 [1] : vector<2x8xf32> to vector<2xf32>
    %302 = vector.shape_cast %301 : vector<2xf32> to vector<2x1xf32>
    %303 = vector.shape_cast %302 : vector<2x1xf32> to vector<2x1xf32>
    %304 = vector.broadcast %303 : vector<2x1xf32> to vector<2x8xf32>
    %305 = arith.select %299, %304, %224 : vector<2x8xi1>, vector<2x8xf32>
    %306 = arith.addf %225, %292 : vector<2x8xf32>
    %307 = vector.shape_cast %292 : vector<2x8xf32> to vector<2x8x1xf32>
    %308 = vector.broadcast %307 : vector<2x8x1xf32> to vector<2x8x128xf32>
    %309 = arith.mulf %308, %50 : vector<2x8x128xf32>
    %cst_89 = arith.constant dense<0.000000e+00> : vector<2x128xf32>
    %310 = vector.multi_reduction <add>, %309, %cst_89 [1] : vector<2x8x128xf32> to vector<2x128xf32>
    %311 = arith.truncf %259 : vector<2x32xf32> to vector<2x32xbf16>
    %cst_90 = arith.constant dense<0.000000e+00> : vector<2x128xf32>
    %312 = tpu.matmul %311, %9, %cst_90 {dimension_numbers = #tpu.dot_dimension_numbers<[1], [0], [0], [1], [0, 0, 1, 1], [], []>} : vector<2x32xbf16>, vector<32x128xbf16>, vector<2x128xf32> -> vector<2x128xf32>
    %313 = arith.addf %310, %312 : vector<2x128xf32>
    %314 = vector.broadcast %53 : vector<1x128xf32> to vector<2x128xf32>
    %315 = arith.addf %313, %314 : vector<2x128xf32>
    %316 = vector.extract_strided_slice %315 {offsets = [0, 0], sizes = [2, 32], strides = [1, 1]} : vector<2x128xf32> to vector<2x32xf32>
    %317 = arith.negf %316 : vector<2x32xf32>
    %318 = math.exp %317 : vector<2x32xf32>
    %cst_91 = arith.constant 1.000000e+00 : f32
    %319 = vector.broadcast %cst_91 : f32 to vector<2x32xf32>
    %320 = arith.addf %319, %318 : vector<2x32xf32>
    %321 = arith.divf %319, %320 : vector<2x32xf32>
    %322 = vector.extract_strided_slice %315 {offsets = [0, 32], sizes = [2, 32], strides = [1, 1]} : vector<2x128xf32> to vector<2x32xf32>
    %323 = arith.negf %322 : vector<2x32xf32>
    %324 = math.exp %323 : vector<2x32xf32>
    %cst_92 = arith.constant 1.000000e+00 : f32
    %325 = vector.broadcast %cst_92 : f32 to vector<2x32xf32>
    %326 = arith.addf %325, %324 : vector<2x32xf32>
    %327 = arith.divf %325, %326 : vector<2x32xf32>
    %328 = vector.extract_strided_slice %315 {offsets = [0, 64], sizes = [2, 32], strides = [1, 1]} : vector<2x128xf32> to vector<2x32xf32>
    %329 = math.tanh %328 : vector<2x32xf32>
    %330 = vector.extract_strided_slice %315 {offsets = [0, 96], sizes = [2, 32], strides = [1, 1]} : vector<2x128xf32> to vector<2x32xf32>
    %331 = arith.negf %330 : vector<2x32xf32>
    %332 = math.exp %331 : vector<2x32xf32>
    %cst_93 = arith.constant 1.000000e+00 : f32
    %333 = vector.broadcast %cst_93 : f32 to vector<2x32xf32>
    %334 = arith.addf %333, %332 : vector<2x32xf32>
    %335 = arith.divf %333, %334 : vector<2x32xf32>
    %336 = arith.mulf %327, %257 : vector<2x32xf32>
    %337 = arith.mulf %321, %329 : vector<2x32xf32>
    %338 = arith.addf %336, %337 : vector<2x32xf32>
    %339 = math.tanh %338 : vector<2x32xf32>
    %340 = arith.mulf %335, %339 : vector<2x32xf32>
    %341 = arith.truncf %340 : vector<2x32xf32> to vector<2x32xbf16>
    %cst_94 = arith.constant dense<0.000000e+00> : vector<2x32xf32>
    %342 = tpu.matmul %341, %13, %cst_94 {dimension_numbers = #tpu.dot_dimension_numbers<[1], [0], [0], [1], [0, 0, 1, 1], [], []>} : vector<2x32xbf16>, vector<32x32xbf16>, vector<2x32xf32> -> vector<2x32xf32>
    %343 = vector.shape_cast %342 : vector<2x32xf32> to vector<2x1x32xf32>
    %344 = vector.broadcast %343 : vector<2x1x32xf32> to vector<2x8x32xf32>
    %345 = arith.addf %52, %344 : vector<2x8x32xf32>
    %346 = math.tanh %345 : vector<2x8x32xf32>
    %347 = vector.broadcast %55 : vector<1x1x32xf32> to vector<2x8x32xf32>
    %348 = arith.mulf %346, %347 : vector<2x8x32xf32>
    %cst_95 = arith.constant dense<0.000000e+00> : vector<2x8xf32>
    %349 = vector.multi_reduction <add>, %348, %cst_95 [2] : vector<2x8x32xf32> to vector<2x8xf32>
    %cst_96 = arith.constant 1.000000e+09 : f32
    %350 = vector.broadcast %cst_96 : f32 to vector<2x8xf32>
    %351 = arith.mulf %350, %306 : vector<2x8xf32>
    %352 = arith.subf %349, %351 : vector<2x8xf32>
    %cst_97 = arith.constant dense<0xFF800000> : vector<2xf32>
    %353 = vector.multi_reduction <maximumf>, %352, %cst_97 [1] : vector<2x8xf32> to vector<2xf32>
    %354 = vector.shape_cast %353 : vector<2xf32> to vector<2x1xf32>
    %355 = vector.broadcast %354 : vector<2x1xf32> to vector<2x8xf32>
    %356 = arith.subf %352, %355 : vector<2x8xf32>
    %357 = math.exp %356 : vector<2x8xf32>
    %cst_98 = arith.constant dense<0.000000e+00> : vector<2xf32>
    %358 = vector.multi_reduction <add>, %357, %cst_98 [1] : vector<2x8xf32> to vector<2xf32>
    %359 = vector.shape_cast %358 : vector<2xf32> to vector<2x1xf32>
    %360 = math.log %359 : vector<2x1xf32>
    %361 = arith.addf %354, %360 : vector<2x1xf32>
    %362 = vector.broadcast %361 : vector<2x1xf32> to vector<2x8xf32>
    %363 = arith.subf %352, %362 : vector<2x8xf32>
    %364 = vector.broadcast %354 : vector<2x1xf32> to vector<2x8xf32>
    %365 = arith.cmpf oeq, %352, %364 : vector<2x8xf32>
    %c8_i32_99 = arith.constant 8 : i32
    %366 = vector.broadcast %c8_i32_99 : i32 to vector<2x8xi32>
    %367 = arith.select %365, %56, %366 : vector<2x8xi1>, vector<2x8xi32>
    %cst_100 = arith.constant dense<2147483647> : vector<2xi32>
    %368 = vector.multi_reduction <minsi>, %367, %cst_100 [1] : vector<2x8xi32> to vector<2xi32>
    %369 = vector.shape_cast %368 : vector<2xi32> to vector<2x1xi32>
    %370 = vector.broadcast %369 : vector<2x1xi32> to vector<2x8xi32>
    %371 = arith.cmpi eq, %56, %370 : vector<2x8xi32>
    %372 = arith.extui %371 : vector<2x8xi1> to vector<2x8xi32>
    %373 = arith.sitofp %372 : vector<2x8xi32> to vector<2x8xf32>
    %c3_i32 = arith.constant 3 : i32
    %374 = vector.broadcast %c3_i32 : i32 to vector<2x8xi32>
    %375 = arith.cmpi eq, %57, %374 : vector<2x8xi32>
    %376 = vector.shape_cast %369 : vector<2x1xi32> to vector<2x1xi32>
    %377 = vector.broadcast %376 : vector<2x1xi32> to vector<2x8xi32>
    %378 = arith.select %375, %377, %297 : vector<2x8xi1>, vector<2x8xi32>
    %c3_i32_101 = arith.constant 3 : i32
    %379 = vector.broadcast %c3_i32_101 : i32 to vector<2x8xi32>
    %380 = arith.cmpi eq, %57, %379 : vector<2x8xi32>
    %381 = arith.mulf %363, %373 : vector<2x8xf32>
    %cst_102 = arith.constant dense<0.000000e+00> : vector<2xf32>
    %382 = vector.multi_reduction <add>, %381, %cst_102 [1] : vector<2x8xf32> to vector<2xf32>
    %383 = vector.shape_cast %382 : vector<2xf32> to vector<2x1xf32>
    %384 = vector.shape_cast %383 : vector<2x1xf32> to vector<2x1xf32>
    %385 = vector.broadcast %384 : vector<2x1xf32> to vector<2x8xf32>
    %386 = arith.select %380, %385, %305 : vector<2x8xi1>, vector<2x8xf32>
    %387 = arith.addf %306, %373 : vector<2x8xf32>
    %388 = vector.shape_cast %373 : vector<2x8xf32> to vector<2x8x1xf32>
    %389 = vector.broadcast %388 : vector<2x8x1xf32> to vector<2x8x128xf32>
    %390 = arith.mulf %389, %50 : vector<2x8x128xf32>
    %cst_103 = arith.constant dense<0.000000e+00> : vector<2x128xf32>
    %391 = vector.multi_reduction <add>, %390, %cst_103 [1] : vector<2x8x128xf32> to vector<2x128xf32>
    %392 = arith.truncf %340 : vector<2x32xf32> to vector<2x32xbf16>
    %cst_104 = arith.constant dense<0.000000e+00> : vector<2x128xf32>
    %393 = tpu.matmul %392, %9, %cst_104 {dimension_numbers = #tpu.dot_dimension_numbers<[1], [0], [0], [1], [0, 0, 1, 1], [], []>} : vector<2x32xbf16>, vector<32x128xbf16>, vector<2x128xf32> -> vector<2x128xf32>
    %394 = arith.addf %391, %393 : vector<2x128xf32>
    %395 = vector.broadcast %53 : vector<1x128xf32> to vector<2x128xf32>
    %396 = arith.addf %394, %395 : vector<2x128xf32>
    %397 = vector.extract_strided_slice %396 {offsets = [0, 0], sizes = [2, 32], strides = [1, 1]} : vector<2x128xf32> to vector<2x32xf32>
    %398 = arith.negf %397 : vector<2x32xf32>
    %399 = math.exp %398 : vector<2x32xf32>
    %cst_105 = arith.constant 1.000000e+00 : f32
    %400 = vector.broadcast %cst_105 : f32 to vector<2x32xf32>
    %401 = arith.addf %400, %399 : vector<2x32xf32>
    %402 = arith.divf %400, %401 : vector<2x32xf32>
    %403 = vector.extract_strided_slice %396 {offsets = [0, 32], sizes = [2, 32], strides = [1, 1]} : vector<2x128xf32> to vector<2x32xf32>
    %404 = arith.negf %403 : vector<2x32xf32>
    %405 = math.exp %404 : vector<2x32xf32>
    %cst_106 = arith.constant 1.000000e+00 : f32
    %406 = vector.broadcast %cst_106 : f32 to vector<2x32xf32>
    %407 = arith.addf %406, %405 : vector<2x32xf32>
    %408 = arith.divf %406, %407 : vector<2x32xf32>
    %409 = vector.extract_strided_slice %396 {offsets = [0, 64], sizes = [2, 32], strides = [1, 1]} : vector<2x128xf32> to vector<2x32xf32>
    %410 = math.tanh %409 : vector<2x32xf32>
    %411 = vector.extract_strided_slice %396 {offsets = [0, 96], sizes = [2, 32], strides = [1, 1]} : vector<2x128xf32> to vector<2x32xf32>
    %412 = arith.negf %411 : vector<2x32xf32>
    %413 = math.exp %412 : vector<2x32xf32>
    %cst_107 = arith.constant 1.000000e+00 : f32
    %414 = vector.broadcast %cst_107 : f32 to vector<2x32xf32>
    %415 = arith.addf %414, %413 : vector<2x32xf32>
    %416 = arith.divf %414, %415 : vector<2x32xf32>
    %417 = arith.mulf %408, %338 : vector<2x32xf32>
    %418 = arith.mulf %402, %410 : vector<2x32xf32>
    %419 = arith.addf %417, %418 : vector<2x32xf32>
    %420 = math.tanh %419 : vector<2x32xf32>
    %421 = arith.mulf %416, %420 : vector<2x32xf32>
    %422 = arith.truncf %421 : vector<2x32xf32> to vector<2x32xbf16>
    %cst_108 = arith.constant dense<0.000000e+00> : vector<2x32xf32>
    %423 = tpu.matmul %422, %13, %cst_108 {dimension_numbers = #tpu.dot_dimension_numbers<[1], [0], [0], [1], [0, 0, 1, 1], [], []>} : vector<2x32xbf16>, vector<32x32xbf16>, vector<2x32xf32> -> vector<2x32xf32>
    %424 = vector.shape_cast %423 : vector<2x32xf32> to vector<2x1x32xf32>
    %425 = vector.broadcast %424 : vector<2x1x32xf32> to vector<2x8x32xf32>
    %426 = arith.addf %52, %425 : vector<2x8x32xf32>
    %427 = math.tanh %426 : vector<2x8x32xf32>
    %428 = vector.broadcast %55 : vector<1x1x32xf32> to vector<2x8x32xf32>
    %429 = arith.mulf %427, %428 : vector<2x8x32xf32>
    %cst_109 = arith.constant dense<0.000000e+00> : vector<2x8xf32>
    %430 = vector.multi_reduction <add>, %429, %cst_109 [2] : vector<2x8x32xf32> to vector<2x8xf32>
    %cst_110 = arith.constant 1.000000e+09 : f32
    %431 = vector.broadcast %cst_110 : f32 to vector<2x8xf32>
    %432 = arith.mulf %431, %387 : vector<2x8xf32>
    %433 = arith.subf %430, %432 : vector<2x8xf32>
    %cst_111 = arith.constant dense<0xFF800000> : vector<2xf32>
    %434 = vector.multi_reduction <maximumf>, %433, %cst_111 [1] : vector<2x8xf32> to vector<2xf32>
    %435 = vector.shape_cast %434 : vector<2xf32> to vector<2x1xf32>
    %436 = vector.broadcast %435 : vector<2x1xf32> to vector<2x8xf32>
    %437 = arith.subf %433, %436 : vector<2x8xf32>
    %438 = math.exp %437 : vector<2x8xf32>
    %cst_112 = arith.constant dense<0.000000e+00> : vector<2xf32>
    %439 = vector.multi_reduction <add>, %438, %cst_112 [1] : vector<2x8xf32> to vector<2xf32>
    %440 = vector.shape_cast %439 : vector<2xf32> to vector<2x1xf32>
    %441 = math.log %440 : vector<2x1xf32>
    %442 = arith.addf %435, %441 : vector<2x1xf32>
    %443 = vector.broadcast %442 : vector<2x1xf32> to vector<2x8xf32>
    %444 = arith.subf %433, %443 : vector<2x8xf32>
    %445 = vector.broadcast %435 : vector<2x1xf32> to vector<2x8xf32>
    %446 = arith.cmpf oeq, %433, %445 : vector<2x8xf32>
    %c8_i32_113 = arith.constant 8 : i32
    %447 = vector.broadcast %c8_i32_113 : i32 to vector<2x8xi32>
    %448 = arith.select %446, %56, %447 : vector<2x8xi1>, vector<2x8xi32>
    %cst_114 = arith.constant dense<2147483647> : vector<2xi32>
    %449 = vector.multi_reduction <minsi>, %448, %cst_114 [1] : vector<2x8xi32> to vector<2xi32>
    %450 = vector.shape_cast %449 : vector<2xi32> to vector<2x1xi32>
    %451 = vector.broadcast %450 : vector<2x1xi32> to vector<2x8xi32>
    %452 = arith.cmpi eq, %56, %451 : vector<2x8xi32>
    %453 = arith.extui %452 : vector<2x8xi1> to vector<2x8xi32>
    %454 = arith.sitofp %453 : vector<2x8xi32> to vector<2x8xf32>
    %c4_i32 = arith.constant 4 : i32
    %455 = vector.broadcast %c4_i32 : i32 to vector<2x8xi32>
    %456 = arith.cmpi eq, %57, %455 : vector<2x8xi32>
    %457 = vector.shape_cast %450 : vector<2x1xi32> to vector<2x1xi32>
    %458 = vector.broadcast %457 : vector<2x1xi32> to vector<2x8xi32>
    %459 = arith.select %456, %458, %378 : vector<2x8xi1>, vector<2x8xi32>
    %c4_i32_115 = arith.constant 4 : i32
    %460 = vector.broadcast %c4_i32_115 : i32 to vector<2x8xi32>
    %461 = arith.cmpi eq, %57, %460 : vector<2x8xi32>
    %462 = arith.mulf %444, %454 : vector<2x8xf32>
    %cst_116 = arith.constant dense<0.000000e+00> : vector<2xf32>
    %463 = vector.multi_reduction <add>, %462, %cst_116 [1] : vector<2x8xf32> to vector<2xf32>
    %464 = vector.shape_cast %463 : vector<2xf32> to vector<2x1xf32>
    %465 = vector.shape_cast %464 : vector<2x1xf32> to vector<2x1xf32>
    %466 = vector.broadcast %465 : vector<2x1xf32> to vector<2x8xf32>
    %467 = arith.select %461, %466, %386 : vector<2x8xi1>, vector<2x8xf32>
    %468 = arith.addf %387, %454 : vector<2x8xf32>
    %469 = vector.shape_cast %454 : vector<2x8xf32> to vector<2x8x1xf32>
    %470 = vector.broadcast %469 : vector<2x8x1xf32> to vector<2x8x128xf32>
    %471 = arith.mulf %470, %50 : vector<2x8x128xf32>
    %cst_117 = arith.constant dense<0.000000e+00> : vector<2x128xf32>
    %472 = vector.multi_reduction <add>, %471, %cst_117 [1] : vector<2x8x128xf32> to vector<2x128xf32>
    %473 = arith.truncf %421 : vector<2x32xf32> to vector<2x32xbf16>
    %cst_118 = arith.constant dense<0.000000e+00> : vector<2x128xf32>
    %474 = tpu.matmul %473, %9, %cst_118 {dimension_numbers = #tpu.dot_dimension_numbers<[1], [0], [0], [1], [0, 0, 1, 1], [], []>} : vector<2x32xbf16>, vector<32x128xbf16>, vector<2x128xf32> -> vector<2x128xf32>
    %475 = arith.addf %472, %474 : vector<2x128xf32>
    %476 = vector.broadcast %53 : vector<1x128xf32> to vector<2x128xf32>
    %477 = arith.addf %475, %476 : vector<2x128xf32>
    %478 = vector.extract_strided_slice %477 {offsets = [0, 0], sizes = [2, 32], strides = [1, 1]} : vector<2x128xf32> to vector<2x32xf32>
    %479 = arith.negf %478 : vector<2x32xf32>
    %480 = math.exp %479 : vector<2x32xf32>
    %cst_119 = arith.constant 1.000000e+00 : f32
    %481 = vector.broadcast %cst_119 : f32 to vector<2x32xf32>
    %482 = arith.addf %481, %480 : vector<2x32xf32>
    %483 = arith.divf %481, %482 : vector<2x32xf32>
    %484 = vector.extract_strided_slice %477 {offsets = [0, 32], sizes = [2, 32], strides = [1, 1]} : vector<2x128xf32> to vector<2x32xf32>
    %485 = arith.negf %484 : vector<2x32xf32>
    %486 = math.exp %485 : vector<2x32xf32>
    %cst_120 = arith.constant 1.000000e+00 : f32
    %487 = vector.broadcast %cst_120 : f32 to vector<2x32xf32>
    %488 = arith.addf %487, %486 : vector<2x32xf32>
    %489 = arith.divf %487, %488 : vector<2x32xf32>
    %490 = vector.extract_strided_slice %477 {offsets = [0, 64], sizes = [2, 32], strides = [1, 1]} : vector<2x128xf32> to vector<2x32xf32>
    %491 = math.tanh %490 : vector<2x32xf32>
    %492 = vector.extract_strided_slice %477 {offsets = [0, 96], sizes = [2, 32], strides = [1, 1]} : vector<2x128xf32> to vector<2x32xf32>
    %493 = arith.negf %492 : vector<2x32xf32>
    %494 = math.exp %493 : vector<2x32xf32>
    %cst_121 = arith.constant 1.000000e+00 : f32
    %495 = vector.broadcast %cst_121 : f32 to vector<2x32xf32>
    %496 = arith.addf %495, %494 : vector<2x32xf32>
    %497 = arith.divf %495, %496 : vector<2x32xf32>
    %498 = arith.mulf %489, %419 : vector<2x32xf32>
    %499 = arith.mulf %483, %491 : vector<2x32xf32>
    %500 = arith.addf %498, %499 : vector<2x32xf32>
    %501 = math.tanh %500 : vector<2x32xf32>
    %502 = arith.mulf %497, %501 : vector<2x32xf32>
    %503 = arith.truncf %502 : vector<2x32xf32> to vector<2x32xbf16>
    %cst_122 = arith.constant dense<0.000000e+00> : vector<2x32xf32>
    %504 = tpu.matmul %503, %13, %cst_122 {dimension_numbers = #tpu.dot_dimension_numbers<[1], [0], [0], [1], [0, 0, 1, 1], [], []>} : vector<2x32xbf16>, vector<32x32xbf16>, vector<2x32xf32> -> vector<2x32xf32>
    %505 = vector.shape_cast %504 : vector<2x32xf32> to vector<2x1x32xf32>
    %506 = vector.broadcast %505 : vector<2x1x32xf32> to vector<2x8x32xf32>
    %507 = arith.addf %52, %506 : vector<2x8x32xf32>
    %508 = math.tanh %507 : vector<2x8x32xf32>
    %509 = vector.broadcast %55 : vector<1x1x32xf32> to vector<2x8x32xf32>
    %510 = arith.mulf %508, %509 : vector<2x8x32xf32>
    %cst_123 = arith.constant dense<0.000000e+00> : vector<2x8xf32>
    %511 = vector.multi_reduction <add>, %510, %cst_123 [2] : vector<2x8x32xf32> to vector<2x8xf32>
    %cst_124 = arith.constant 1.000000e+09 : f32
    %512 = vector.broadcast %cst_124 : f32 to vector<2x8xf32>
    %513 = arith.mulf %512, %468 : vector<2x8xf32>
    %514 = arith.subf %511, %513 : vector<2x8xf32>
    %cst_125 = arith.constant dense<0xFF800000> : vector<2xf32>
    %515 = vector.multi_reduction <maximumf>, %514, %cst_125 [1] : vector<2x8xf32> to vector<2xf32>
    %516 = vector.shape_cast %515 : vector<2xf32> to vector<2x1xf32>
    %517 = vector.broadcast %516 : vector<2x1xf32> to vector<2x8xf32>
    %518 = arith.subf %514, %517 : vector<2x8xf32>
    %519 = math.exp %518 : vector<2x8xf32>
    %cst_126 = arith.constant dense<0.000000e+00> : vector<2xf32>
    %520 = vector.multi_reduction <add>, %519, %cst_126 [1] : vector<2x8xf32> to vector<2xf32>
    %521 = vector.shape_cast %520 : vector<2xf32> to vector<2x1xf32>
    %522 = math.log %521 : vector<2x1xf32>
    %523 = arith.addf %516, %522 : vector<2x1xf32>
    %524 = vector.broadcast %523 : vector<2x1xf32> to vector<2x8xf32>
    %525 = arith.subf %514, %524 : vector<2x8xf32>
    %526 = vector.broadcast %516 : vector<2x1xf32> to vector<2x8xf32>
    %527 = arith.cmpf oeq, %514, %526 : vector<2x8xf32>
    %c8_i32_127 = arith.constant 8 : i32
    %528 = vector.broadcast %c8_i32_127 : i32 to vector<2x8xi32>
    %529 = arith.select %527, %56, %528 : vector<2x8xi1>, vector<2x8xi32>
    %cst_128 = arith.constant dense<2147483647> : vector<2xi32>
    %530 = vector.multi_reduction <minsi>, %529, %cst_128 [1] : vector<2x8xi32> to vector<2xi32>
    %531 = vector.shape_cast %530 : vector<2xi32> to vector<2x1xi32>
    %532 = vector.broadcast %531 : vector<2x1xi32> to vector<2x8xi32>
    %533 = arith.cmpi eq, %56, %532 : vector<2x8xi32>
    %534 = arith.extui %533 : vector<2x8xi1> to vector<2x8xi32>
    %535 = arith.sitofp %534 : vector<2x8xi32> to vector<2x8xf32>
    %c5_i32 = arith.constant 5 : i32
    %536 = vector.broadcast %c5_i32 : i32 to vector<2x8xi32>
    %537 = arith.cmpi eq, %57, %536 : vector<2x8xi32>
    %538 = vector.shape_cast %531 : vector<2x1xi32> to vector<2x1xi32>
    %539 = vector.broadcast %538 : vector<2x1xi32> to vector<2x8xi32>
    %540 = arith.select %537, %539, %459 : vector<2x8xi1>, vector<2x8xi32>
    %c5_i32_129 = arith.constant 5 : i32
    %541 = vector.broadcast %c5_i32_129 : i32 to vector<2x8xi32>
    %542 = arith.cmpi eq, %57, %541 : vector<2x8xi32>
    %543 = arith.mulf %525, %535 : vector<2x8xf32>
    %cst_130 = arith.constant dense<0.000000e+00> : vector<2xf32>
    %544 = vector.multi_reduction <add>, %543, %cst_130 [1] : vector<2x8xf32> to vector<2xf32>
    %545 = vector.shape_cast %544 : vector<2xf32> to vector<2x1xf32>
    %546 = vector.shape_cast %545 : vector<2x1xf32> to vector<2x1xf32>
    %547 = vector.broadcast %546 : vector<2x1xf32> to vector<2x8xf32>
    %548 = arith.select %542, %547, %467 : vector<2x8xi1>, vector<2x8xf32>
    %549 = arith.addf %468, %535 : vector<2x8xf32>
    %550 = vector.shape_cast %535 : vector<2x8xf32> to vector<2x8x1xf32>
    %551 = vector.broadcast %550 : vector<2x8x1xf32> to vector<2x8x128xf32>
    %552 = arith.mulf %551, %50 : vector<2x8x128xf32>
    %cst_131 = arith.constant dense<0.000000e+00> : vector<2x128xf32>
    %553 = vector.multi_reduction <add>, %552, %cst_131 [1] : vector<2x8x128xf32> to vector<2x128xf32>
    %554 = arith.truncf %502 : vector<2x32xf32> to vector<2x32xbf16>
    %cst_132 = arith.constant dense<0.000000e+00> : vector<2x128xf32>
    %555 = tpu.matmul %554, %9, %cst_132 {dimension_numbers = #tpu.dot_dimension_numbers<[1], [0], [0], [1], [0, 0, 1, 1], [], []>} : vector<2x32xbf16>, vector<32x128xbf16>, vector<2x128xf32> -> vector<2x128xf32>
    %556 = arith.addf %553, %555 : vector<2x128xf32>
    %557 = vector.broadcast %53 : vector<1x128xf32> to vector<2x128xf32>
    %558 = arith.addf %556, %557 : vector<2x128xf32>
    %559 = vector.extract_strided_slice %558 {offsets = [0, 0], sizes = [2, 32], strides = [1, 1]} : vector<2x128xf32> to vector<2x32xf32>
    %560 = arith.negf %559 : vector<2x32xf32>
    %561 = math.exp %560 : vector<2x32xf32>
    %cst_133 = arith.constant 1.000000e+00 : f32
    %562 = vector.broadcast %cst_133 : f32 to vector<2x32xf32>
    %563 = arith.addf %562, %561 : vector<2x32xf32>
    %564 = arith.divf %562, %563 : vector<2x32xf32>
    %565 = vector.extract_strided_slice %558 {offsets = [0, 32], sizes = [2, 32], strides = [1, 1]} : vector<2x128xf32> to vector<2x32xf32>
    %566 = arith.negf %565 : vector<2x32xf32>
    %567 = math.exp %566 : vector<2x32xf32>
    %cst_134 = arith.constant 1.000000e+00 : f32
    %568 = vector.broadcast %cst_134 : f32 to vector<2x32xf32>
    %569 = arith.addf %568, %567 : vector<2x32xf32>
    %570 = arith.divf %568, %569 : vector<2x32xf32>
    %571 = vector.extract_strided_slice %558 {offsets = [0, 64], sizes = [2, 32], strides = [1, 1]} : vector<2x128xf32> to vector<2x32xf32>
    %572 = math.tanh %571 : vector<2x32xf32>
    %573 = vector.extract_strided_slice %558 {offsets = [0, 96], sizes = [2, 32], strides = [1, 1]} : vector<2x128xf32> to vector<2x32xf32>
    %574 = arith.negf %573 : vector<2x32xf32>
    %575 = math.exp %574 : vector<2x32xf32>
    %cst_135 = arith.constant 1.000000e+00 : f32
    %576 = vector.broadcast %cst_135 : f32 to vector<2x32xf32>
    %577 = arith.addf %576, %575 : vector<2x32xf32>
    %578 = arith.divf %576, %577 : vector<2x32xf32>
    %579 = arith.mulf %570, %500 : vector<2x32xf32>
    %580 = arith.mulf %564, %572 : vector<2x32xf32>
    %581 = arith.addf %579, %580 : vector<2x32xf32>
    %582 = math.tanh %581 : vector<2x32xf32>
    %583 = arith.mulf %578, %582 : vector<2x32xf32>
    %584 = arith.truncf %583 : vector<2x32xf32> to vector<2x32xbf16>
    %cst_136 = arith.constant dense<0.000000e+00> : vector<2x32xf32>
    %585 = tpu.matmul %584, %13, %cst_136 {dimension_numbers = #tpu.dot_dimension_numbers<[1], [0], [0], [1], [0, 0, 1, 1], [], []>} : vector<2x32xbf16>, vector<32x32xbf16>, vector<2x32xf32> -> vector<2x32xf32>
    %586 = vector.shape_cast %585 : vector<2x32xf32> to vector<2x1x32xf32>
    %587 = vector.broadcast %586 : vector<2x1x32xf32> to vector<2x8x32xf32>
    %588 = arith.addf %52, %587 : vector<2x8x32xf32>
    %589 = math.tanh %588 : vector<2x8x32xf32>
    %590 = vector.broadcast %55 : vector<1x1x32xf32> to vector<2x8x32xf32>
    %591 = arith.mulf %589, %590 : vector<2x8x32xf32>
    %cst_137 = arith.constant dense<0.000000e+00> : vector<2x8xf32>
    %592 = vector.multi_reduction <add>, %591, %cst_137 [2] : vector<2x8x32xf32> to vector<2x8xf32>
    %cst_138 = arith.constant 1.000000e+09 : f32
    %593 = vector.broadcast %cst_138 : f32 to vector<2x8xf32>
    %594 = arith.mulf %593, %549 : vector<2x8xf32>
    %595 = arith.subf %592, %594 : vector<2x8xf32>
    %cst_139 = arith.constant dense<0xFF800000> : vector<2xf32>
    %596 = vector.multi_reduction <maximumf>, %595, %cst_139 [1] : vector<2x8xf32> to vector<2xf32>
    %597 = vector.shape_cast %596 : vector<2xf32> to vector<2x1xf32>
    %598 = vector.broadcast %597 : vector<2x1xf32> to vector<2x8xf32>
    %599 = arith.subf %595, %598 : vector<2x8xf32>
    %600 = math.exp %599 : vector<2x8xf32>
    %cst_140 = arith.constant dense<0.000000e+00> : vector<2xf32>
    %601 = vector.multi_reduction <add>, %600, %cst_140 [1] : vector<2x8xf32> to vector<2xf32>
    %602 = vector.shape_cast %601 : vector<2xf32> to vector<2x1xf32>
    %603 = math.log %602 : vector<2x1xf32>
    %604 = arith.addf %597, %603 : vector<2x1xf32>
    %605 = vector.broadcast %604 : vector<2x1xf32> to vector<2x8xf32>
    %606 = arith.subf %595, %605 : vector<2x8xf32>
    %607 = vector.broadcast %597 : vector<2x1xf32> to vector<2x8xf32>
    %608 = arith.cmpf oeq, %595, %607 : vector<2x8xf32>
    %c8_i32_141 = arith.constant 8 : i32
    %609 = vector.broadcast %c8_i32_141 : i32 to vector<2x8xi32>
    %610 = arith.select %608, %56, %609 : vector<2x8xi1>, vector<2x8xi32>
    %cst_142 = arith.constant dense<2147483647> : vector<2xi32>
    %611 = vector.multi_reduction <minsi>, %610, %cst_142 [1] : vector<2x8xi32> to vector<2xi32>
    %612 = vector.shape_cast %611 : vector<2xi32> to vector<2x1xi32>
    %613 = vector.broadcast %612 : vector<2x1xi32> to vector<2x8xi32>
    %614 = arith.cmpi eq, %56, %613 : vector<2x8xi32>
    %615 = arith.extui %614 : vector<2x8xi1> to vector<2x8xi32>
    %616 = arith.sitofp %615 : vector<2x8xi32> to vector<2x8xf32>
    %c6_i32 = arith.constant 6 : i32
    %617 = vector.broadcast %c6_i32 : i32 to vector<2x8xi32>
    %618 = arith.cmpi eq, %57, %617 : vector<2x8xi32>
    %619 = vector.shape_cast %612 : vector<2x1xi32> to vector<2x1xi32>
    %620 = vector.broadcast %619 : vector<2x1xi32> to vector<2x8xi32>
    %621 = arith.select %618, %620, %540 : vector<2x8xi1>, vector<2x8xi32>
    %c6_i32_143 = arith.constant 6 : i32
    %622 = vector.broadcast %c6_i32_143 : i32 to vector<2x8xi32>
    %623 = arith.cmpi eq, %57, %622 : vector<2x8xi32>
    %624 = arith.mulf %606, %616 : vector<2x8xf32>
    %cst_144 = arith.constant dense<0.000000e+00> : vector<2xf32>
    %625 = vector.multi_reduction <add>, %624, %cst_144 [1] : vector<2x8xf32> to vector<2xf32>
    %626 = vector.shape_cast %625 : vector<2xf32> to vector<2x1xf32>
    %627 = vector.shape_cast %626 : vector<2x1xf32> to vector<2x1xf32>
    %628 = vector.broadcast %627 : vector<2x1xf32> to vector<2x8xf32>
    %629 = arith.select %623, %628, %548 : vector<2x8xi1>, vector<2x8xf32>
    %630 = arith.addf %549, %616 : vector<2x8xf32>
    %631 = vector.shape_cast %616 : vector<2x8xf32> to vector<2x8x1xf32>
    %632 = vector.broadcast %631 : vector<2x8x1xf32> to vector<2x8x128xf32>
    %633 = arith.mulf %632, %50 : vector<2x8x128xf32>
    %cst_145 = arith.constant dense<0.000000e+00> : vector<2x128xf32>
    %634 = vector.multi_reduction <add>, %633, %cst_145 [1] : vector<2x8x128xf32> to vector<2x128xf32>
    %635 = arith.truncf %583 : vector<2x32xf32> to vector<2x32xbf16>
    %cst_146 = arith.constant dense<0.000000e+00> : vector<2x128xf32>
    %636 = tpu.matmul %635, %9, %cst_146 {dimension_numbers = #tpu.dot_dimension_numbers<[1], [0], [0], [1], [0, 0, 1, 1], [], []>} : vector<2x32xbf16>, vector<32x128xbf16>, vector<2x128xf32> -> vector<2x128xf32>
    %637 = arith.addf %634, %636 : vector<2x128xf32>
    %638 = vector.broadcast %53 : vector<1x128xf32> to vector<2x128xf32>
    %639 = arith.addf %637, %638 : vector<2x128xf32>
    %640 = vector.extract_strided_slice %639 {offsets = [0, 0], sizes = [2, 32], strides = [1, 1]} : vector<2x128xf32> to vector<2x32xf32>
    %641 = arith.negf %640 : vector<2x32xf32>
    %642 = math.exp %641 : vector<2x32xf32>
    %cst_147 = arith.constant 1.000000e+00 : f32
    %643 = vector.broadcast %cst_147 : f32 to vector<2x32xf32>
    %644 = arith.addf %643, %642 : vector<2x32xf32>
    %645 = arith.divf %643, %644 : vector<2x32xf32>
    %646 = vector.extract_strided_slice %639 {offsets = [0, 32], sizes = [2, 32], strides = [1, 1]} : vector<2x128xf32> to vector<2x32xf32>
    %647 = arith.negf %646 : vector<2x32xf32>
    %648 = math.exp %647 : vector<2x32xf32>
    %cst_148 = arith.constant 1.000000e+00 : f32
    %649 = vector.broadcast %cst_148 : f32 to vector<2x32xf32>
    %650 = arith.addf %649, %648 : vector<2x32xf32>
    %651 = arith.divf %649, %650 : vector<2x32xf32>
    %652 = vector.extract_strided_slice %639 {offsets = [0, 64], sizes = [2, 32], strides = [1, 1]} : vector<2x128xf32> to vector<2x32xf32>
    %653 = math.tanh %652 : vector<2x32xf32>
    %654 = vector.extract_strided_slice %639 {offsets = [0, 96], sizes = [2, 32], strides = [1, 1]} : vector<2x128xf32> to vector<2x32xf32>
    %655 = arith.negf %654 : vector<2x32xf32>
    %656 = math.exp %655 : vector<2x32xf32>
    %cst_149 = arith.constant 1.000000e+00 : f32
    %657 = vector.broadcast %cst_149 : f32 to vector<2x32xf32>
    %658 = arith.addf %657, %656 : vector<2x32xf32>
    %659 = arith.divf %657, %658 : vector<2x32xf32>
    %660 = arith.mulf %651, %581 : vector<2x32xf32>
    %661 = arith.mulf %645, %653 : vector<2x32xf32>
    %662 = arith.addf %660, %661 : vector<2x32xf32>
    %663 = math.tanh %662 : vector<2x32xf32>
    %664 = arith.mulf %659, %663 : vector<2x32xf32>
    %665 = arith.truncf %664 : vector<2x32xf32> to vector<2x32xbf16>
    %cst_150 = arith.constant dense<0.000000e+00> : vector<2x32xf32>
    %666 = tpu.matmul %665, %13, %cst_150 {dimension_numbers = #tpu.dot_dimension_numbers<[1], [0], [0], [1], [0, 0, 1, 1], [], []>} : vector<2x32xbf16>, vector<32x32xbf16>, vector<2x32xf32> -> vector<2x32xf32>
    %667 = vector.shape_cast %666 : vector<2x32xf32> to vector<2x1x32xf32>
    %668 = vector.broadcast %667 : vector<2x1x32xf32> to vector<2x8x32xf32>
    %669 = arith.addf %52, %668 : vector<2x8x32xf32>
    %670 = math.tanh %669 : vector<2x8x32xf32>
    %671 = vector.broadcast %55 : vector<1x1x32xf32> to vector<2x8x32xf32>
    %672 = arith.mulf %670, %671 : vector<2x8x32xf32>
    %cst_151 = arith.constant dense<0.000000e+00> : vector<2x8xf32>
    %673 = vector.multi_reduction <add>, %672, %cst_151 [2] : vector<2x8x32xf32> to vector<2x8xf32>
    %cst_152 = arith.constant 1.000000e+09 : f32
    %674 = vector.broadcast %cst_152 : f32 to vector<2x8xf32>
    %675 = arith.mulf %674, %630 : vector<2x8xf32>
    %676 = arith.subf %673, %675 : vector<2x8xf32>
    %cst_153 = arith.constant dense<0xFF800000> : vector<2xf32>
    %677 = vector.multi_reduction <maximumf>, %676, %cst_153 [1] : vector<2x8xf32> to vector<2xf32>
    %678 = vector.shape_cast %677 : vector<2xf32> to vector<2x1xf32>
    %679 = vector.broadcast %678 : vector<2x1xf32> to vector<2x8xf32>
    %680 = arith.subf %676, %679 : vector<2x8xf32>
    %681 = math.exp %680 : vector<2x8xf32>
    %cst_154 = arith.constant dense<0.000000e+00> : vector<2xf32>
    %682 = vector.multi_reduction <add>, %681, %cst_154 [1] : vector<2x8xf32> to vector<2xf32>
    %683 = vector.shape_cast %682 : vector<2xf32> to vector<2x1xf32>
    %684 = math.log %683 : vector<2x1xf32>
    %685 = arith.addf %678, %684 : vector<2x1xf32>
    %686 = vector.broadcast %685 : vector<2x1xf32> to vector<2x8xf32>
    %687 = arith.subf %676, %686 : vector<2x8xf32>
    %688 = vector.broadcast %678 : vector<2x1xf32> to vector<2x8xf32>
    %689 = arith.cmpf oeq, %676, %688 : vector<2x8xf32>
    %c8_i32_155 = arith.constant 8 : i32
    %690 = vector.broadcast %c8_i32_155 : i32 to vector<2x8xi32>
    %691 = arith.select %689, %56, %690 : vector<2x8xi1>, vector<2x8xi32>
    %cst_156 = arith.constant dense<2147483647> : vector<2xi32>
    %692 = vector.multi_reduction <minsi>, %691, %cst_156 [1] : vector<2x8xi32> to vector<2xi32>
    %693 = vector.shape_cast %692 : vector<2xi32> to vector<2x1xi32>
    %694 = vector.broadcast %693 : vector<2x1xi32> to vector<2x8xi32>
    %695 = arith.cmpi eq, %56, %694 : vector<2x8xi32>
    %696 = arith.extui %695 : vector<2x8xi1> to vector<2x8xi32>
    %697 = arith.sitofp %696 : vector<2x8xi32> to vector<2x8xf32>
    %c7_i32 = arith.constant 7 : i32
    %698 = vector.broadcast %c7_i32 : i32 to vector<2x8xi32>
    %699 = arith.cmpi eq, %57, %698 : vector<2x8xi32>
    %700 = vector.shape_cast %693 : vector<2x1xi32> to vector<2x1xi32>
    %701 = vector.broadcast %700 : vector<2x1xi32> to vector<2x8xi32>
    %702 = arith.select %699, %701, %621 : vector<2x8xi1>, vector<2x8xi32>
    %c7_i32_157 = arith.constant 7 : i32
    %703 = vector.broadcast %c7_i32_157 : i32 to vector<2x8xi32>
    %704 = arith.cmpi eq, %57, %703 : vector<2x8xi32>
    %705 = arith.mulf %687, %697 : vector<2x8xf32>
    %cst_158 = arith.constant dense<0.000000e+00> : vector<2xf32>
    %706 = vector.multi_reduction <add>, %705, %cst_158 [1] : vector<2x8xf32> to vector<2xf32>
    %707 = vector.shape_cast %706 : vector<2xf32> to vector<2x1xf32>
    %708 = vector.shape_cast %707 : vector<2x1xf32> to vector<2x1xf32>
    %709 = vector.broadcast %708 : vector<2x1xf32> to vector<2x8xf32>
    %710 = arith.select %704, %709, %629 : vector<2x8xi1>, vector<2x8xf32>
    %c0_159 = arith.constant 0 : index
    %c0_160 = arith.constant 0 : index
    %711 = vector.load %arg19[%c0_159, %c0_160] : memref<2x8xi32, #tpu.memory_space<vmem>>, vector<2x8xi32>
    tpu.vector_store %arg19[%c0_159, %c0_160], %702 {strides = array<i32>} : memref<2x8xi32, #tpu.memory_space<vmem>>, vector<2x8xi32>,
    %c0_161 = arith.constant 0 : index
    %c0_162 = arith.constant 0 : index
    %712 = vector.load %arg20[%c0_161, %c0_162] : memref<2x8xf32, #tpu.memory_space<vmem>>, vector<2x8xf32>
    tpu.vector_store %arg20[%c0_161, %c0_162], %710 {strides = array<i32>} : memref<2x8xf32, #tpu.memory_space<vmem>>, vector<2x8xf32>,
    return
  }
  func.func @transform_0(%arg0: i32) -> (i32, i32) {
    %c0_i32 = arith.constant 0 : i32
    %c0_i32_0 = arith.constant 0 : i32
    %c0_i32_1 = arith.constant 0 : i32
    return %c0_i32, %c0_i32_0 : i32, i32
  }
  func.func @transform_1(%arg0: i32) -> (i32, i32) {
    %c0_i32 = arith.constant 0 : i32
    %c0_i32_0 = arith.constant 0 : i32
    %c0_i32_1 = arith.constant 0 : i32
    return %c0_i32, %c0_i32_0 : i32, i32
  }
  func.func @transform_2(%arg0: i32) -> (i32, i32) {
    %c0_i32 = arith.constant 0 : i32
    %c0_i32_0 = arith.constant 0 : i32
    %c0_i32_1 = arith.constant 0 : i32
    return %c0_i32, %c0_i32_0 : i32, i32
  }
  func.func @transform_3(%arg0: i32) -> (i32, i32) {
    %c0_i32 = arith.constant 0 : i32
    %c0_i32_0 = arith.constant 0 : i32
    %c0_i32_1 = arith.constant 0 : i32
    return %c0_i32, %c0_i32_0 : i32, i32
  }
  func.func @transform_4(%arg0: i32) -> (i32, i32) {
    %c0_i32 = arith.constant 0 : i32
    %c0_i32_0 = arith.constant 0 : i32
    %c0_i32_1 = arith.constant 0 : i32
    return %c0_i32, %c0_i32_0 : i32, i32
  }
  func.func @transform_5(%arg0: i32) -> (i32, i32) {
    %c0_i32 = arith.constant 0 : i32
    %c0_i32_0 = arith.constant 0 : i32
    %c0_i32_1 = arith.constant 0 : i32
    return %c0_i32, %c0_i32_0 : i32, i32
  }
  func.func @transform_6(%arg0: i32) -> (i32, i32) {
    %c0_i32 = arith.constant 0 : i32
    %c0_i32_0 = arith.constant 0 : i32
    %c0_i32_1 = arith.constant 0 : i32
    return %c0_i32, %c0_i32_0 : i32, i32
  }
  func.func @transform_7(%arg0: i32) -> (i32, i32) {
    %c0_i32 = arith.constant 0 : i32
    %c0_i32_0 = arith.constant 0 : i32
    %c0_i32_1 = arith.constant 0 : i32
    return %c0_i32, %c0_i32_0 : i32, i32
  }
  func.func @transform_8(%arg0: i32) -> (i32, i32) {
    %c0_i32 = arith.constant 0 : i32
    %c0_i32_0 = arith.constant 0 : i32
    %c0_i32_1 = arith.constant 0 : i32
    return %c0_i32, %c0_i32_0 : i32, i32
  }
  func.func @transform_9(%arg0: i32) -> (i32, i32) {
    %c0_i32 = arith.constant 0 : i32
    %c0_i32_0 = arith.constant 0 : i32
    %c0_i32_1 = arith.constant 0 : i32
    return %c0_i32, %c0_i32_0 : i32, i32
  }
  func.func @transform_10(%arg0: i32) -> (i32, i32) {
    %c0_i32 = arith.constant 0 : i32
    %c0_i32_0 = arith.constant 0 : i32
    %c0_i32_1 = arith.constant 0 : i32
    return %c0_i32, %c0_i32_0 : i32, i32
  }
  func.func @transform_11(%arg0: i32) -> (i32, i32) {
    %c0_i32 = arith.constant 0 : i32
    %c0_i32_0 = arith.constant 0 : i32
    %c0_i32_1 = arith.constant 0 : i32
    return %c0_i32, %c0_i32_0 : i32, i32
  }
  func.func @transform_12(%arg0: i32) -> (i32, i32) {
    %c0_i32 = arith.constant 0 : i32
    %c0_i32_0 = arith.constant 0 : i32
    %c0_i32_1 = arith.constant 0 : i32
    return %c0_i32, %c0_i32_0 : i32, i32
  }
  func.func @transform_13(%arg0: i32) -> (i32, i32) {
    %c0_i32 = arith.constant 0 : i32
    %c0_i32_0 = arith.constant 0 : i32
    %c0_i32_1 = arith.constant 0 : i32
    return %c0_i32, %c0_i32_0 : i32, i32
  }
  func.func @transform_14(%arg0: i32) -> (i32, i32) {
    %c0_i32 = arith.constant 0 : i32
    %c0_i32_0 = arith.constant 0 : i32
    %c0_i32_1 = arith.constant 0 : i32
    return %c0_i32, %c0_i32_0 : i32, i32
  }
  func.func @transform_15(%arg0: i32) -> (i32, i32) {
    %c0_i32 = arith.constant 0 : i32
    %c0_i32_0 = arith.constant 0 : i32
    %c0_i32_1 = arith.constant 0 : i32
    return %c0_i32, %c0_i32_0 : i32, i32
  }
  func.func @transform_16(%arg0: i32) -> (i32, i32) {
    %c0_i32 = arith.constant 0 : i32
    %c0_i32_0 = arith.constant 0 : i32
    %c0_i32_1 = arith.constant 0 : i32
    return %c0_i32, %c0_i32_0 : i32, i32
  }
  func.func @transform_17(%arg0: i32) -> (i32, i32) {
    %c0_i32 = arith.constant 0 : i32
    %c0_i32_0 = arith.constant 0 : i32
    %c0_i32_1 = arith.constant 0 : i32
    return %c0_i32, %c0_i32_0 : i32, i32
  }
  func.func @transform_18(%arg0: i32) -> (i32, i32) {
    %c0_i32 = arith.constant 0 : i32
    %c0_i32_0 = arith.constant 0 : i32
    %c0_i32_1 = arith.constant 0 : i32
    return %c0_i32, %c0_i32_0 : i32, i32
  }
  func.func @transform_19(%arg0: i32) -> (i32, i32) {
    %c0_i32 = arith.constant 0 : i32
    %c0_i32_0 = arith.constant 0 : i32
    %c0_i32_1 = arith.constant 0 : i32
    return %c0_i32, %c0_i32_0 : i32, i32
  }
  func.func @transform_20(%arg0: i32) -> (i32, i32, i32) {
    %c0_i32 = arith.constant 0 : i32
    %c0_i32_0 = arith.constant 0 : i32
    %c0_i32_1 = arith.constant 0 : i32
    %c0_i32_2 = arith.constant 0 : i32
    return %c0_i32, %c0_i32_0, %c0_i32_1 : i32, i32, i32
  }
}

</mosaic_0001>

<llo_original>
// kernel: pfspnet_forward.1
$region0: #{pfspnet_forward.1}
  #allocation0 [shape = 'u32[]', space=smem, size = 0x4, offset = 0x4, fixed_abs, tag = 'smem constant byte address 0x4 - core index']
  #allocation1 [shape = 'u32[144,128]{1,0:T(1,128)}', space=vmem, size = 0x12000, scoped, tag = 'internal scratch']
  %s0 = inlined_call_operand.vmem [shape: f32[16,4], index: 0, kind: input, shape index: {}]
  %s1 = inlined_call_operand.vmem [shape: f32[2,1], index: 1, kind: input, shape index: {}]
  %s2 = inlined_call_operand.vmem [shape: f32[2,32], index: 2, kind: input, shape index: {}, may-alias: {2,3}]
  %s3 = inlined_call_operand.vmem [shape: f32[2,32], index: 3, kind: input, shape index: {}, may-alias: {2,3}]
  %s4 = inlined_call_operand.vmem [shape: f32[4,32], index: 4, kind: input, shape index: {}]
  %s5 = inlined_call_operand.hbm [shape: f32[1,32], index: 5, kind: input, shape index: {}]
  %s6 = inlined_call_operand.vmem [shape: f32[1,16], index: 6, kind: input, shape index: {}]
  %s7 = inlined_call_operand.hbm [shape: f32[1,16], index: 7, kind: input, shape index: {}]
  %s8 = inlined_call_operand.vmem [shape: f32[32,32], index: 8, kind: input, shape index: {}]
  %s9 = inlined_call_operand.vmem [shape: f32[16,32], index: 9, kind: input, shape index: {}]
  %s10 = inlined_call_operand.hbm [shape: f32[1,32], index: 10, kind: input, shape index: {}]
  %s11 = inlined_call_operand.vmem [shape: f32[32,128], index: 11, kind: input, shape index: {}]
  %s12 = inlined_call_operand.hbm [shape: f32[32,128], index: 12, kind: input, shape index: {}]
  %s13 = inlined_call_operand.hbm [shape: f32[1,128], index: 13, kind: input, shape index: {}]
  %s14 = inlined_call_operand.hbm [shape: f32[32,32], index: 14, kind: input, shape index: {}]
  %s15 = inlined_call_operand.hbm [shape: f32[32,32], index: 15, kind: input, shape index: {}]
  %s16 = inlined_call_operand.hbm [shape: f32[1,32], index: 16, kind: input, shape index: {}]
  %s17 = inlined_call_operand.hbm [shape: f32[1,32], index: 17, kind: input, shape index: {}]
  %s18 = inlined_call_operand.hbm [shape: s32[2,8], index: 18, kind: output, shape index: {0}]
  %s19 = inlined_call_operand.hbm [shape: f32[2,8], index: 19, kind: output, shape index: {1}]
  %s20 = inlined_call_operand.hbm [shape: f32[2,8,32], index: 20, kind: output, shape index: {2}]
  %21 = xla_tuple %s18, %s19, %s20
  %s22 = sld [smem:[#allocation0]]
  $region134: #{pfspnet_forward.1} parent=0
    _
  %s24 = ssub.s32 1, %s22
  %s25 = scalar_select 0, %s24, %s22
  $region1: #{pfspnet_forward.1} parent=0
    #allocation2 [shape = 'u8[512]{0}', space=vmem, size = 0x400, scoped, tag = 'input window, operand 5, single buffered']
    #allocation3 [shape = 's32[1]{0}', space=sflag, size = 0x4, scoped, tag = 'scoped memory for pfspnet_forward.1']
    #allocation4 [shape = 's32[1]{0}', space=sflag, size = 0x4, scoped, tag = 'scoped memory for pfspnet_forward.1']
    #allocation5 [shape = 'u8[512]{0}', space=vmem, size = 0x400, scoped, tag = 'input window, operand 7, single buffered']
    #allocation6 [shape = 's32[1]{0}', space=sflag, size = 0x4, scoped, tag = 'scoped memory for pfspnet_forward.1']
    #allocation7 [shape = 'u8[512]{0}', space=vmem, size = 0x400, scoped, tag = 'input window, operand 10, single buffered']
    #allocation8 [shape = 'u8[16384]{0}', space=vmem, size = 0x4000, scoped, tag = 'input window, operand 12, single buffered']
    #allocation9 [shape = 's32[1]{0}', space=sflag, size = 0x4, scoped, tag = 'scoped memory for pfspnet_forward.1']
    #allocation10 [shape = 'u8[512]{0}', space=vmem, size = 0x400, scoped, tag = 'input window, operand 13, single buffered']
    #allocation11 [shape = 'u8[16384]{0}', space=vmem, size = 0x4000, scoped, tag = 'input window, operand 14, single buffered']
    #allocation12 [shape = 's32[1]{0}', space=sflag, size = 0x4, scoped, tag = 'scoped memory for pfspnet_forward.1']
    #allocation13 [shape = 'u8[16384]{0}', space=vmem, size = 0x4000, scoped, tag = 'input window, operand 15, single buffered']
    #allocation14 [shape = 'u8[512]{0}', space=vmem, size = 0x400, scoped, tag = 'input window, operand 16, single buffered']
    #allocation15 [shape = 's32[1]{0}', space=sflag, size = 0x4, scoped, tag = 'scoped memory for pfspnet_forward.1']
    #allocation16 [shape = 'u8[512]{0}', space=vmem, size = 0x400, scoped, tag = 'input window, operand 17, single buffered']
    #allocation17 [shape = 'u8[1024]{0}', space=vmem, size = 0x400, scoped, tag = 'output window, operand 0, single buffered']
    #allocation18 [shape = 'u8[1024]{0}', space=vmem, size = 0x400, scoped, tag = 'output window, operand 1, single buffered']
    #allocation19 [shape = 's32[1]{0}', space=sflag, size = 0x4, scoped, tag = 'scoped memory for pfspnet_forward.1']
    #allocation20 [shape = 'u8[8192]{0}', space=vmem, size = 0x2000, scoped, tag = 'output window, operand 2, single buffered']
    %26 = vsyncpa [#allocation3], 0
    %27 = vsyncpa [#allocation6], 0
    %28 = vsyncpa [#allocation9], 0
    %29 = vsyncpa [#allocation12], 0
    %30 = vsyncpa [#allocation15], 0
    %31 = vsyncpa [#allocation4], 0
    %32 = vsyncpa [#allocation19], 0
    // Predicated region
    $region2: #{pfspnet_forward.1} parent=1 // pred_check
      _
    $region3: #{pfspnet_forward.1} parent=1 // pred_check_branch
      %34 = sbr.rel (0) target = $region5
    $region4: #{pfspnet_forward.1} parent=1 // pred_region
      _
    $region5: #{pfspnet_forward.1} parent=1 // pred_fallthru
      _
    // Predicated region
    $region6: #{pfspnet_forward.1} parent=1 // pred_check
      _
    $region7: #{pfspnet_forward.1} parent=1 // pred_check_branch
      %36 = sbr.rel (0) target = $region9
    $region8: #{pfspnet_forward.1} parent=1 // pred_region
      _
    $region9: #{pfspnet_forward.1} parent=1 // pred_fallthru
      _
    // Predicated region
    $region10: #{pfspnet_forward.1} parent=1 // pred_check
      _
    $region11: #{pfspnet_forward.1} parent=1 // pred_check_branch
      %38 = sbr.rel (0) target = $region13
    $region12: #{pfspnet_forward.1} parent=1 // pred_region
      _
    $region13: #{pfspnet_forward.1} parent=1 // pred_fallthru
      _
    // Predicated region
    $region14: #{pfspnet_forward.1} parent=1 // pred_check
      _
    $region15: #{pfspnet_forward.1} parent=1 // pred_check_branch
      %40 = sbr.rel (0) target = $region17
    $region16: #{pfspnet_forward.1} parent=1 // pred_region
      _
    $region17: #{pfspnet_forward.1} parent=1 // pred_fallthru
      _
    // Predicated region
    $region18: #{pfspnet_forward.1} parent=1 // pred_check
      _
    $region19: #{pfspnet_forward.1} parent=1 // pred_check_branch
      %42 = sbr.rel (0) target = $region21
    $region20: #{pfspnet_forward.1} parent=1 // pred_region
      _
    $region21: #{pfspnet_forward.1} parent=1 // pred_fallthru
      _
    // Predicated region
    $region22: #{pfspnet_forward.1} parent=1 // pred_check
      _
    $region23: #{pfspnet_forward.1} parent=1 // pred_check_branch
      %44 = sbr.rel (0) target = $region25
    $region24: #{pfspnet_forward.1} parent=1 // pred_region
      %s46 = ssub.s32 16, 16
      %47 = vsyncadd [#allocation3], %s46
      %s49 = sshll.u32 [#allocation2], 4
      %s50 = int_to_ptr.vmem [resolvable:$true] %s49
      %52 = dma.hbm_to_vmem [thread:$0]  %s5, 16, %s50, [#allocation3]
    $region25: #{pfspnet_forward.1} parent=1 // pred_fallthru
      _
    // Predicated region
    $region26: #{pfspnet_forward.1} parent=1 // pred_check
      _
    $region27: #{pfspnet_forward.1} parent=1 // pred_check_branch
      %54 = sbr.rel (0) target = $region29
    $region28: #{pfspnet_forward.1} parent=1 // pred_region
      _
    $region29: #{pfspnet_forward.1} parent=1 // pred_fallthru
      _
    // Predicated region
    $region30: #{pfspnet_forward.1} parent=1 // pred_check
      _
    $region31: #{pfspnet_forward.1} parent=1 // pred_check_branch
      %56 = sbr.rel (0) target = $region33
    $region32: #{pfspnet_forward.1} parent=1 // pred_region
      %s58 = ssub.s32 16, 16
      %59 = vsyncadd [#allocation6], %s58
      %s61 = sshll.u32 [#allocation5], 4
      %s62 = int_to_ptr.vmem [resolvable:$true] %s61
      %64 = dma.hbm_to_vmem [thread:$0]  %s7, 16, %s62, [#allocation6]
    $region33: #{pfspnet_forward.1} parent=1 // pred_fallthru
      _
    // Predicated region
    $region34: #{pfspnet_forward.1} parent=1 // pred_check
      _
    $region35: #{pfspnet_forward.1} parent=1 // pred_check_branch
      %66 = sbr.rel (0) target = $region37
    $region36: #{pfspnet_forward.1} parent=1 // pred_region
      _
    $region37: #{pfspnet_forward.1} parent=1 // pred_fallthru
      _
    // Predicated region
    $region38: #{pfspnet_forward.1} parent=1 // pred_check
      _
    $region39: #{pfspnet_forward.1} parent=1 // pred_check_branch
      %68 = sbr.rel (0) target = $region41
    $region40: #{pfspnet_forward.1} parent=1 // pred_region
      _
    $region41: #{pfspnet_forward.1} parent=1 // pred_fallthru
      _
    // Predicated region
    $region42: #{pfspnet_forward.1} parent=1 // pred_check
      _
    $region43: #{pfspnet_forward.1} parent=1 // pred_check_branch
      %70 = sbr.rel (0) target = $region45
    $region44: #{pfspnet_forward.1} parent=1 // pred_region
      %s72 = ssub.s32 16, 16
      %73 = vsyncadd [#allocation6], %s72
      %s75 = sshll.u32 [#allocation7], 4
      %s76 = int_to_ptr.vmem [resolvable:$true] %s75
      %78 = dma.hbm_to_vmem [thread:$0]  %s10, 16, %s76, [#allocation6]
    $region45: #{pfspnet_forward.1} parent=1 // pred_fallthru
      _
    // Predicated region
    $region46: #{pfspnet_forward.1} parent=1 // pred_check
      _
    $region47: #{pfspnet_forward.1} parent=1 // pred_check_branch
      %80 = sbr.rel (0) target = $region49
    $region48: #{pfspnet_forward.1} parent=1 // pred_region
      _
    $region49: #{pfspnet_forward.1} parent=1 // pred_fallthru
      _
    // Predicated region
    $region50: #{pfspnet_forward.1} parent=1 // pred_check
      _
    $region51: #{pfspnet_forward.1} parent=1 // pred_check_branch
      %82 = sbr.rel (0) target = $region53
    $region52: #{pfspnet_forward.1} parent=1 // pred_region
      %s84 = ssub.s32 512, 512
      %85 = vsyncadd [#allocation9], %s84
      %s86 = sshll.u32 [#allocation8], 4
      %s87 = int_to_ptr.vmem [resolvable:$true] %s86
      %92 = dma.hbm_to_vmem [thread:$0]  %s12, 512, %s87, [#allocation9], 128, 128, 8
    $region53: #{pfspnet_forward.1} parent=1 // pred_fallthru
      _
    // Predicated region
    $region54: #{pfspnet_forward.1} parent=1 // pred_check
      _
    $region55: #{pfspnet_forward.1} parent=1 // pred_check_branch
      %94 = sbr.rel (0) target = $region57
    $region56: #{pfspnet_forward.1} parent=1 // pred_region
      %s96 = ssub.s32 16, 16
      %97 = vsyncadd [#allocation9], %s96
      %s99 = sshll.u32 [#allocation10], 4
      %s100 = int_to_ptr.vmem [resolvable:$true] %s99
      %102 = dma.hbm_to_vmem [thread:$0]  %s13, 16, %s100, [#allocation9]
    $region57: #{pfspnet_forward.1} parent=1 // pred_fallthru
      _
    // Predicated region
    $region58: #{pfspnet_forward.1} parent=1 // pred_check
      _
    $region59: #{pfspnet_forward.1} parent=1 // pred_check_branch
      %104 = sbr.rel (0) target = $region61
    $region60: #{pfspnet_forward.1} parent=1 // pred_region
      %s106 = ssub.s32 512, 512
      %107 = vsyncadd [#allocation12], %s106
      %s108 = sshll.u32 [#allocation11], 4
      %s109 = int_to_ptr.vmem [resolvable:$true] %s108
      %114 = dma.hbm_to_vmem [thread:$0]  %s14, 512, %s109, [#allocation12], 128, 128, 8
    $region61: #{pfspnet_forward.1} parent=1 // pred_fallthru
      _
    // Predicated region
    $region62: #{pfspnet_forward.1} parent=1 // pred_check
      _
    $region63: #{pfspnet_forward.1} parent=1 // pred_check_branch
      %116 = sbr.rel (0) target = $region65
    $region64: #{pfspnet_forward.1} parent=1 // pred_region
      %s118 = ssub.s32 512, 512
      %119 = vsyncadd [#allocation12], %s118
      %s120 = sshll.u32 [#allocation13], 4
      %s121 = int_to_ptr.vmem [resolvable:$true] %s120
      %126 = dma.hbm_to_vmem [thread:$0]  %s15, 512, %s121, [#allocation12], 128, 128, 8
    $region65: #{pfspnet_forward.1} parent=1 // pred_fallthru
      _
    // Predicated region
    $region66: #{pfspnet_forward.1} parent=1 // pred_check
      _
    $region67: #{pfspnet_forward.1} parent=1 // pred_check_branch
      %128 = sbr.rel (0) target = $region69
    $region68: #{pfspnet_forward.1} parent=1 // pred_region
      %s130 = ssub.s32 16, 16
      %131 = vsyncadd [#allocation15], %s130
      %s133 = sshll.u32 [#allocation14], 4
      %s134 = int_to_ptr.vmem [resolvable:$true] %s133
      %136 = dma.hbm_to_vmem [thread:$0]  %s16, 16, %s134, [#allocation15]
    $region69: #{pfspnet_forward.1} parent=1 // pred_fallthru
      _
    // Predicated region
    $region70: #{pfspnet_forward.1} parent=1 // pred_check
      _
    $region71: #{pfspnet_forward.1} parent=1 // pred_check_branch
      %138 = sbr.rel (0) target = $region73
    $region72: #{pfspnet_forward.1} parent=1 // pred_region
      %s140 = ssub.s32 16, 16
      %141 = vsyncadd [#allocation15], %s140
      %s143 = sshll.u32 [#allocation16], 4
      %s144 = int_to_ptr.vmem [resolvable:$true] %s143
      %146 = dma.hbm_to_vmem [thread:$0]  %s17, 16, %s144, [#allocation15]
    $region73: #{pfspnet_forward.1} parent=1 // pred_fallthru
      _
    // Predicated region
    $region74: #{pfspnet_forward.1} parent=1 // pred_check
      _
    $region75: #{pfspnet_forward.1} parent=1 // pred_check_branch
      %148 = sbr.rel (0) target = $region77
    $region76: #{pfspnet_forward.1} parent=1 // pred_region
      %149 = dma.done [#allocation3], 16
    $region77: #{pfspnet_forward.1} parent=1 // pred_fallthru
      _
    // Predicated region
    $region78: #{pfspnet_forward.1} parent=1 // pred_check
      _
    $region79: #{pfspnet_forward.1} parent=1 // pred_check_branch
      %151 = sbr.rel (0) target = $region81
    $region80: #{pfspnet_forward.1} parent=1 // pred_region
      %152 = dma.done [#allocation6], 16
    $region81: #{pfspnet_forward.1} parent=1 // pred_fallthru
      _
    // Predicated region
    $region82: #{pfspnet_forward.1} parent=1 // pred_check
      _
    $region83: #{pfspnet_forward.1} parent=1 // pred_check_branch
      %154 = sbr.rel (0) target = $region85
    $region84: #{pfspnet_forward.1} parent=1 // pred_region
      %155 = dma.done [#allocation6], 16
    $region85: #{pfspnet_forward.1} parent=1 // pred_fallthru
      _
    // Predicated region
    $region86: #{pfspnet_forward.1} parent=1 // pred_check
      _
    $region87: #{pfspnet_forward.1} parent=1 // pred_check_branch
      %157 = sbr.rel (0) target = $region89
    $region88: #{pfspnet_forward.1} parent=1 // pred_region
      %158 = dma.done [#allocation9], 512
    $region89: #{pfspnet_forward.1} parent=1 // pred_fallthru
      _
    // Predicated region
    $region90: #{pfspnet_forward.1} parent=1 // pred_check
      _
    $region91: #{pfspnet_forward.1} parent=1 // pred_check_branch
      %160 = sbr.rel (0) target = $region93
    $region92: #{pfspnet_forward.1} parent=1 // pred_region
      %161 = dma.done [#allocation9], 16
    $region93: #{pfspnet_forward.1} parent=1 // pred_fallthru
      _
    // Predicated region
    $region94: #{pfspnet_forward.1} parent=1 // pred_check
      _
    $region95: #{pfspnet_forward.1} parent=1 // pred_check_branch
      %163 = sbr.rel (0) target = $region97
    $region96: #{pfspnet_forward.1} parent=1 // pred_region
      %164 = dma.done [#allocation12], 512
    $region97: #{pfspnet_forward.1} parent=1 // pred_fallthru
      _
    // Predicated region
    $region98: #{pfspnet_forward.1} parent=1 // pred_check
      _
    $region99: #{pfspnet_forward.1} parent=1 // pred_check_branch
      %166 = sbr.rel (0) target = $region101
    $region100: #{pfspnet_forward.1} parent=1 // pred_region
      %167 = dma.done [#allocation12], 512
    $region101: #{pfspnet_forward.1} parent=1 // pred_fallthru
      _
    // Predicated region
    $region102: #{pfspnet_forward.1} parent=1 // pred_check
      _
    $region103: #{pfspnet_forward.1} parent=1 // pred_check_branch
      %169 = sbr.rel (0) target = $region105
    $region104: #{pfspnet_forward.1} parent=1 // pred_region
      %170 = dma.done [#allocation15], 16
    $region105: #{pfspnet_forward.1} parent=1 // pred_fallthru
      _
    // Predicated region
    $region106: #{pfspnet_forward.1} parent=1 // pred_check
      _
    $region107: #{pfspnet_forward.1} parent=1 // pred_check_branch
      %172 = sbr.rel (0) target = $region109
    $region108: #{pfspnet_forward.1} parent=1 // pred_region
      %173 = dma.done [#allocation15], 16
    $region109: #{pfspnet_forward.1} parent=1 // pred_fallthru
      _
    %v175 = vld [vmem:[%s4] sm:$0xf]
    %v176 = vpack.c.bf16 %v175, %v175
    %v177 = vld [vmem:[%s8] sm:$0xff]
    %v178 = vld [vmem:[%s8 + $0x8] sm:$0xff]
    %v179 = vld [vmem:[%s8 + $0x10] sm:$0xff]
    %v180 = vld [vmem:[%s8 + $0x18] sm:$0xff]
    %v181 = vpack.c.bf16 %v178, %v177
    %v182 = vpack.c.bf16 %v180, %v179
    %v183 = vld [vmem:[%s9] sm:$0xff]
    %v184 = vld [vmem:[%s9 + $0x8] sm:$0xff]
    %v185 = vpack.c.bf16 %v184, %v183
    %v186 = vld [vmem:[%s11] sm:$0xff]
    %v187 = vld [vmem:[%s11 + $0x8] sm:$0xff]
    %v188 = vld [vmem:[%s11 + $0x10] sm:$0xff]
    %v189 = vld [vmem:[%s11 + $0x18] sm:$0xff]
    %v190 = vpack.c.bf16 %v187, %v186
    %v191 = vpack.c.bf16 %v189, %v188
    %v192 = vld [vmem:[#allocation8] sm:$0xff]
    %v193 = vld [vmem:[#allocation8 + $0x8] sm:$0xff]
    %v194 = vld [vmem:[#allocation8 + $0x10] sm:$0xff]
    %v195 = vld [vmem:[#allocation8 + $0x18] sm:$0xff]
    %v196 = vpack.c.bf16 %v193, %v192
    %v197 = vpack.c.bf16 %v195, %v194
    %v198 = vld [vmem:[#allocation11] sm:$0xff]
    %v199 = vld [vmem:[#allocation11 + $0x8] sm:$0xff]
    %v200 = vld [vmem:[#allocation11 + $0x10] sm:$0xff]
    %v201 = vld [vmem:[#allocation11 + $0x18] sm:$0xff]
    %v202 = vpack.c.bf16 %v199, %v198
    %v203 = vpack.c.bf16 %v201, %v200
    %v204 = vld [vmem:[#allocation13] sm:$0xff]
    %v205 = vld [vmem:[#allocation13 + $0x8] sm:$0xff]
    %v206 = vld [vmem:[#allocation13 + $0x10] sm:$0xff]
    %v207 = vld [vmem:[#allocation13 + $0x18] sm:$0xff]
    %v208 = vpack.c.bf16 %v205, %v204
    %v209 = vpack.c.bf16 %v207, %v206
    %v210 = vld [vmem:[%s0] sm:$0xff]
    %v211 = vld [vmem:[%s0 + $0x8] sm:$0xff]
    %v212 = vpack.c.bf16 %v211, %v210
    %v213 = vld [vmem:[#allocation2] sm:$0x1]
    %v215 = vlaneseq
    %v216 = vshrl.u32 %v215, 7
    %v217 = vsub.s32 0, %v216
    %v218 = vrot.slane %v213, %v217
    %vm220 = vcmask 31744
    %v222 = vsel %vm220, %v212, 0
    %vm224 = vcmask 1041408
    %v226 = vsel %vm224, %v176, 0
    %228 = vmatprep.subr.bf16.mxu0 0
    %229 = vmatpush1.bf16.msra.mxu0 %v226
    %230 = vmatprep.subr.bf16.mxu0 0
    %231 = vmatpush1.bf16.msra.mxu0 0
    %232 = vmatprep.subr.bf16.mxu0 0
    %233 = vmatpush1.bf16.msra.mxu0 0
    %234 = vmatprep.subr.bf16.mxu0 0
    %235 = vmatpush1.bf16.msra.mxu0 0
    %236 = vmatprep.subr.bf16.mxu0 0
    %237 = vmatpush1.bf16.msra.mxu0 0
    %238 = vmatprep.subr.bf16.mxu0 0
    %239 = vmatpush1.bf16.msra.mxu0 0
    %240 = vmatprep.subr.bf16.mxu0 0
    %241 = vmatpush1.bf16.msra.mxu0 0
    %242 = vmatprep.subr.bf16.mxu0 0
    %243 = vmatpush1.bf16.msra.mxu0 0
    %244 = vmatprep.subr.bf16.mxu0 0
    %245 = vmatpush1.bf16.msra.mxu0 0
    %246 = vmatprep.subr.bf16.mxu0 0
    %247 = vmatpush1.bf16.msra.mxu0 0
    %248 = vmatprep.subr.bf16.mxu0 0
    %249 = vmatpush1.bf16.msra.mxu0 0
    %250 = vmatprep.subr.bf16.mxu0 0
    %251 = vmatpush1.bf16.msra.mxu0 0
    %252 = vmatprep.subr.bf16.mxu0 0
    %253 = vmatpush1.bf16.msra.mxu0 0
    %254 = vmatprep.subr.bf16.mxu0 0
    %255 = vmatpush1.bf16.msra.mxu0 0
    %256 = vmatprep.subr.bf16.mxu0 0
    %257 = vmatpush1.bf16.msra.mxu0 0
    %258 = vmatprep.subr.bf16.mxu0 0
    %259 = vmatpush1.bf16.msra.mxu0 0
    %260 = vmatprep.mubr.bf16.mxu0 0
    %261 = vmatmul.mubr.bf16.gmra.mrb[0].mxu0 %v222
    %v262 = vpop.f32.mrb[0].mxu0
    %v263 = vadd.f32 %v218, %v262
    %v264 = vpop.f32.mrb[0].mxu0
    %v265 = vpop.f32.mrb[0].mxu0
    %v266 = vadd.f32 %v218, %v265
    %v267 = vpop.f32.mrb[0].mxu0
    %268 = vdwg.mxu0
    %v269 = vmax.f32 %v263, 0.0
    %v270 = vmax.f32 %v266, 0.0
    %v271 = vpack.c.bf16 %v270, %v269
    %vm272 = vcmask 261120
    %v274 = vsel %vm272, %v271, 0
    %276 = vmatprep.subr.bf16.mxu0 0
    %277 = vmatpush1.bf16.msra.mxu0 %v181
    %278 = vmatprep.subr.bf16.mxu0 0
    %279 = vmatpush1.bf16.msra.mxu0 %v182
    %280 = vmatprep.subr.bf16.mxu0 0
    %281 = vmatpush1.bf16.msra.mxu0 0
    %282 = vmatprep.subr.bf16.mxu0 0
    %283 = vmatpush1.bf16.msra.mxu0 0
    %284 = vmatprep.subr.bf16.mxu0 0
    %285 = vmatpush1.bf16.msra.mxu0 0
    %286 = vmatprep.subr.bf16.mxu0 0
    %287 = vmatpush1.bf16.msra.mxu0 0
    %288 = vmatprep.subr.bf16.mxu0 0
    %289 = vmatpush1.bf16.msra.mxu0 0
    %290 = vmatprep.subr.bf16.mxu0 0
    %291 = vmatpush1.bf16.msra.mxu0 0
    %292 = vmatprep.subr.bf16.mxu0 0
    %293 = vmatpush1.bf16.msra.mxu0 0
    %294 = vmatprep.subr.bf16.mxu0 0
    %295 = vmatpush1.bf16.msra.mxu0 0
    %296 = vmatprep.subr.bf16.mxu0 0
    %297 = vmatpush1.bf16.msra.mxu0 0
    %298 = vmatprep.subr.bf16.mxu0 0
    %299 = vmatpush1.bf16.msra.mxu0 0
    %300 = vmatprep.subr.bf16.mxu0 0
    %301 = vmatpush1.bf16.msra.mxu0 0
    %302 = vmatprep.subr.bf16.mxu0 0
    %303 = vmatpush1.bf16.msra.mxu0 0
    %304 = vmatprep.subr.bf16.mxu0 0
    %305 = vmatpush1.bf16.msra.mxu0 0
    %306 = vmatprep.subr.bf16.mxu0 0
    %307 = vmatpush1.bf16.msra.mxu0 0
    %308 = vmatprep.mubr.bf16.mxu0 0
    %309 = vmatmul.mubr.bf16.gmra.mrb[0].mxu0 %v274
    %v310 = vpop.f32.mrb[0].mxu0
    %v311 = vadd.f32 0.0, %v310
    %v312 = vpop.f32.mrb[0].mxu0
    %v313 = vpop.f32.mrb[0].mxu0
    %v314 = vadd.f32 0.0, %v313
    %v315 = vpop.f32.mrb[0].mxu0
    %316 = vdwg.mxu0
    %v317 = vld [vmem:[%s1] sm:$0x3]
    %v318 = vld [vmem:[%s6] sm:$0x1]
    %320 = vset.pattern.permute.xlu0 0
    %321 = vperm.xlu0 %320, %v317
    %v322 = vpop.permute.xlu0 %321
    %v325 = vlaneseq
    %v326 = vshrl.u32 %v325, 7
    %v327 = vsub.s32 0, %v326
    %v328 = vrot.slane %v318, %v327
    %v330 = vmul.f32 %v322, %v328
    %v331 = vld [vmem:[#allocation5] sm:$0x1]
    %v333 = vlaneseq
    %v334 = vshrl.u32 %v333, 7
    %v335 = vsub.s32 0, %v334
    %v336 = vrot.slane %v331, %v335
    %v338 = vadd.f32 %v330, %v336
    %v339 = vmax.f32 %v338, 0.0
    %v340 = vpack.c.bf16 %v339, %v339
    %vm341 = vcmask 130048
    %v343 = vsel %vm341, %v340, 0
    %345 = vmatprep.subr.bf16.mxu0 0
    %346 = vmatpush1.bf16.msra.mxu0 %v185
    %347 = vmatprep.subr.bf16.mxu0 0
    %348 = vmatpush1.bf16.msra.mxu0 0
    %349 = vmatprep.subr.bf16.mxu0 0
    %350 = vmatpush1.bf16.msra.mxu0 0
    %351 = vmatprep.subr.bf16.mxu0 0
    %352 = vmatpush1.bf16.msra.mxu0 0
    %353 = vmatprep.subr.bf16.mxu0 0
    %354 = vmatpush1.bf16.msra.mxu0 0
    %355 = vmatprep.subr.bf16.mxu0 0
    %356 = vmatpush1.bf16.msra.mxu0 0
    %357 = vmatprep.subr.bf16.mxu0 0
    %358 = vmatpush1.bf16.msra.mxu0 0
    %359 = vmatprep.subr.bf16.mxu0 0
    %360 = vmatpush1.bf16.msra.mxu0 0
    %361 = vmatprep.subr.bf16.mxu0 0
    %362 = vmatpush1.bf16.msra.mxu0 0
    %363 = vmatprep.subr.bf16.mxu0 0
    %364 = vmatpush1.bf16.msra.mxu0 0
    %365 = vmatprep.subr.bf16.mxu0 0
    %366 = vmatpush1.bf16.msra.mxu0 0
    %367 = vmatprep.subr.bf16.mxu0 0
    %368 = vmatpush1.bf16.msra.mxu0 0
    %369 = vmatprep.subr.bf16.mxu0 0
    %370 = vmatpush1.bf16.msra.mxu0 0
    %371 = vmatprep.subr.bf16.mxu0 0
    %372 = vmatpush1.bf16.msra.mxu0 0
    %373 = vmatprep.subr.bf16.mxu0 0
    %374 = vmatpush1.bf16.msra.mxu0 0
    %375 = vmatprep.subr.bf16.mxu0 0
    %376 = vmatpush1.bf16.msra.mxu0 0
    %377 = vmatprep.mubr.bf16.mxu0 0
    %378 = vmatmul.mubr.bf16.gmra.mrb[0].mxu0 %v343
    %v379 = vpop.f32.mrb[0].mxu0
    %v380 = vadd.f32 0.0, %v379
    %v381 = vpop.f32.mrb[0].mxu0
    %v382 = vpop.f32.mrb[0].mxu0
    %v383 = vpop.f32.mrb[0].mxu0
    %384 = vdwg.mxu0
    %v387 = vunpack.c.l.s4 1966171168
    %v388 = vunpack.c.0.s8 %v387
    %v389 = vlaneseq
    %v390 = vshrl.u32 %v389, 7
    %v391 = vsub.s32 %v388, %v390
    %v392 = vrot.slane %v380, %v391
    %v393 = vcombine.high %v392, %v392
    %v395 = vunpack.c.l.s4 1966171168
    %v396 = vunpack.c.0.s8 %v395
    %v397 = vlaneseq
    %v398 = vshrl.u32 %v397, 7
    %v399 = vsub.s32 %v396, %v398
    %v400 = vrot.slane %v392, %v399
    %v402 = vunpack.c.l.s4 1966171168
    %v403 = vunpack.c.0.s8 %v402
    %v404 = vlaneseq
    %v405 = vshrl.u32 %v404, 7
    %v406 = vsub.s32 %v403, %v405
    %v407 = vrot.slane %v393, %v406
    %v408 = vlaneseq
    %v409 = vshrl.u32 %v408, 7
    %v410 = vsub.s32 0, %v409
    %v411 = vrot.slane %v400, %v410
    %v412 = vlaneseq
    %v413 = vshrl.u32 %v412, 7
    %v414 = vsub.s32 0, %v413
    %v415 = vrot.slane %v407, %v414
    %v418 = vadd.f32 %v311, %v411
    %v419 = vadd.f32 %v314, %v415
    %v420 = vld [vmem:[#allocation7] sm:$0x1]
    %v422 = vlaneseq
    %v423 = vshrl.u32 %v422, 7
    %v424 = vsub.s32 0, %v423
    %v425 = vrot.slane %v420, %v424
    %v427 = vadd.f32 %v418, %v425
    %v428 = vadd.f32 %v419, %v425
    %v429 = vmax.f32 %v427, 0.0
    %v430 = vmax.f32 %v428, 0.0
    %431 = vst.msk [vmem:[#allocation20] sm:$0xff] %vm272, %v429
    %432 = vst.msk [vmem:[#allocation20 + $0x8] sm:$0xff] %vm272, %v430
    %v433 = vpack.c.bf16 %v430, %v429
    %v435 = vsel %vm272, %v433, 0
    %437 = vmatprep.subr.bf16.mxu0 0
    %438 = vmatpush1.bf16.msra.mxu0 %v190
    %439 = vmatprep.subr.bf16.mxu0 0
    %440 = vmatpush1.bf16.msra.mxu0 %v191
    %441 = vmatprep.subr.bf16.mxu0 0
    %442 = vmatpush1.bf16.msra.mxu0 0
    %443 = vmatprep.subr.bf16.mxu0 0
    %444 = vmatpush1.bf16.msra.mxu0 0
    %445 = vmatprep.subr.bf16.mxu0 0
    %446 = vmatpush1.bf16.msra.mxu0 0
    %447 = vmatprep.subr.bf16.mxu0 0
    %448 = vmatpush1.bf16.msra.mxu0 0
    %449 = vmatprep.subr.bf16.mxu0 0
    %450 = vmatpush1.bf16.msra.mxu0 0
    %451 = vmatprep.subr.bf16.mxu0 0
    %452 = vmatpush1.bf16.msra.mxu0 0
    %453 = vmatprep.subr.bf16.mxu0 0
    %454 = vmatpush1.bf16.msra.mxu0 0
    %455 = vmatprep.subr.bf16.mxu0 0
    %456 = vmatpush1.bf16.msra.mxu0 0
    %457 = vmatprep.subr.bf16.mxu0 0
    %458 = vmatpush1.bf16.msra.mxu0 0
    %459 = vmatprep.subr.bf16.mxu0 0
    %460 = vmatpush1.bf16.msra.mxu0 0
    %461 = vmatprep.subr.bf16.mxu0 0
    %462 = vmatpush1.bf16.msra.mxu0 0
    %463 = vmatprep.subr.bf16.mxu0 0
    %464 = vmatpush1.bf16.msra.mxu0 0
    %465 = vmatprep.subr.bf16.mxu0 0
    %466 = vmatpush1.bf16.msra.mxu0 0
    %467 = vmatprep.subr.bf16.mxu0 0
    %468 = vmatpush1.bf16.msra.mxu0 0
    %469 = vmatprep.mubr.bf16.mxu0 0
    %470 = vmatmul.mubr.bf16.gmra.mrb[0].mxu0 %v435
    %v471 = vpop.f32.mrb[0].mxu0
    %v472 = vadd.f32 0.0, %v471
    %v473 = vpop.f32.mrb[0].mxu0
    %v474 = vpop.f32.mrb[0].mxu0
    %v475 = vadd.f32 0.0, %v474
    %v476 = vpop.f32.mrb[0].mxu0
    %477 = vdwg.mxu0
    %478 = vmatprep.subr.bf16.mxu0 0
    %479 = vmatpush1.bf16.msra.mxu0 %v202
    %480 = vmatprep.subr.bf16.mxu0 0
    %481 = vmatpush1.bf16.msra.mxu0 %v203
    %482 = vmatprep.subr.bf16.mxu0 0
    %483 = vmatpush1.bf16.msra.mxu0 0
    %484 = vmatprep.subr.bf16.mxu0 0
    %485 = vmatpush1.bf16.msra.mxu0 0
    %486 = vmatprep.subr.bf16.mxu0 0
    %487 = vmatpush1.bf16.msra.mxu0 0
    %488 = vmatprep.subr.bf16.mxu0 0
    %489 = vmatpush1.bf16.msra.mxu0 0
    %490 = vmatprep.subr.bf16.mxu0 0
    %491 = vmatpush1.bf16.msra.mxu0 0
    %492 = vmatprep.subr.bf16.mxu0 0
    %493 = vmatpush1.bf16.msra.mxu0 0
    %494 = vmatprep.subr.bf16.mxu0 0
    %495 = vmatpush1.bf16.msra.mxu0 0
    %496 = vmatprep.subr.bf16.mxu0 0
    %497 = vmatpush1.bf16.msra.mxu0 0
    %498 = vmatprep.subr.bf16.mxu0 0
    %499 = vmatpush1.bf16.msra.mxu0 0
    %500 = vmatprep.subr.bf16.mxu0 0
    %501 = vmatpush1.bf16.msra.mxu0 0
    %502 = vmatprep.subr.bf16.mxu0 0
    %503 = vmatpush1.bf16.msra.mxu0 0
    %504 = vmatprep.subr.bf16.mxu0 0
    %505 = vmatpush1.bf16.msra.mxu0 0
    %506 = vmatprep.subr.bf16.mxu0 0
    %507 = vmatpush1.bf16.msra.mxu0 0
    %508 = vmatprep.subr.bf16.mxu0 0
    %509 = vmatpush1.bf16.msra.mxu0 0
    %510 = vmatprep.mubr.bf16.mxu0 0
    %511 = vmatmul.mubr.bf16.gmra.mrb[0].mxu0 %v435
    %v512 = vpop.f32.mrb[0].mxu0
    %v513 = vadd.f32 0.0, %v512
    %v514 = vpop.f32.mrb[0].mxu0
    %v515 = vpop.f32.mrb[0].mxu0
    %v516 = vadd.f32 0.0, %v515
    %v517 = vpop.f32.mrb[0].mxu0
    %518 = vdwg.mxu0
    %v519 = vld [vmem:[#allocation10] sm:$0x1]
    %v520 = vld [vmem:[#allocation14] sm:$0x1]
    %v521 = vlaneseq
    %v522 = vand.u32 %v521, 127
    %v523 = vld [vmem:[#allocation16] sm:$0x1]
    %v524 = vpack.c.bf16 %v523, %v523
    %v526 = vsel %vm272, %v524, 0
    %528 = vmatprep.subr.bf16.mxu0 0
    %529 = vmatpush1.bf16.msra.mxu0 %v190
    %530 = vmatprep.subr.bf16.mxu0 0
    %531 = vmatpush1.bf16.msra.mxu0 %v191
    %532 = vmatprep.subr.bf16.mxu0 0
    %533 = vmatpush1.bf16.msra.mxu0 0
    %534 = vmatprep.subr.bf16.mxu0 0
    %535 = vmatpush1.bf16.msra.mxu0 0
    %536 = vmatprep.subr.bf16.mxu0 0
    %537 = vmatpush1.bf16.msra.mxu0 0
    %538 = vmatprep.subr.bf16.mxu0 0
    %539 = vmatpush1.bf16.msra.mxu0 0
    %540 = vmatprep.subr.bf16.mxu0 0
    %541 = vmatpush1.bf16.msra.mxu0 0
    %542 = vmatprep.subr.bf16.mxu0 0
    %543 = vmatpush1.bf16.msra.mxu0 0
    %544 = vmatprep.subr.bf16.mxu0 0
    %545 = vmatpush1.bf16.msra.mxu0 0
    %546 = vmatprep.subr.bf16.mxu0 0
    %547 = vmatpush1.bf16.msra.mxu0 0
    %548 = vmatprep.subr.bf16.mxu0 0
    %549 = vmatpush1.bf16.msra.mxu0 0
    %550 = vmatprep.subr.bf16.mxu0 0
    %551 = vmatpush1.bf16.msra.mxu0 0
    %552 = vmatprep.subr.bf16.mxu0 0
    %553 = vmatpush1.bf16.msra.mxu0 0
    %554 = vmatprep.subr.bf16.mxu0 0
    %555 = vmatpush1.bf16.msra.mxu0 0
    %556 = vmatprep.subr.bf16.mxu0 0
    %557 = vmatpush1.bf16.msra.mxu0 0
    %558 = vmatprep.subr.bf16.mxu0 0
    %559 = vmatpush1.bf16.msra.mxu0 0
    %560 = vmatprep.mubr.bf16.mxu0 0
    %561 = vmatmul.mubr.bf16.gmra.mrb[0].mxu0 %v526
    %v562 = vpop.f32.mrb[0].mxu0
    %v563 = vadd.f32 0.0, %v562
    %v564 = vpop.f32.mrb[0].mxu0
    %v565 = vpop.f32.mrb[0].mxu0
    %v566 = vpop.f32.mrb[0].mxu0
    %567 = vdwg.mxu0
    %v568 = vlaneseq
    %v569 = vshrl.u32 %v568, 7
    %v570 = vsub.s32 0, %v569
    %v571 = vrot.slane %v563, %v570
    %v572 = vld [vmem:[%s2] sm:$0x3]
    %v573 = vld [vmem:[%s3] sm:$0x3]
    %v574 = vpack.c.bf16 %v572, %v572
    %v576 = vsel %vm272, %v574, 0
    %578 = vmatprep.subr.bf16.mxu0 0
    %579 = vmatpush1.bf16.msra.mxu0 %v196
    %580 = vmatprep.subr.bf16.mxu0 0
    %581 = vmatpush1.bf16.msra.mxu0 %v197
    %582 = vmatprep.subr.bf16.mxu0 0
    %583 = vmatpush1.bf16.msra.mxu0 0
    %584 = vmatprep.subr.bf16.mxu0 0
    %585 = vmatpush1.bf16.msra.mxu0 0
    %586 = vmatprep.subr.bf16.mxu0 0
    %587 = vmatpush1.bf16.msra.mxu0 0
    %588 = vmatprep.subr.bf16.mxu0 0
    %589 = vmatpush1.bf16.msra.mxu0 0
    %590 = vmatprep.subr.bf16.mxu0 0
    %591 = vmatpush1.bf16.msra.mxu0 0
    %592 = vmatprep.subr.bf16.mxu0 0
    %593 = vmatpush1.bf16.msra.mxu0 0
    %594 = vmatprep.subr.bf16.mxu0 0
    %595 = vmatpush1.bf16.msra.mxu0 0
    %596 = vmatprep.subr.bf16.mxu0 0
    %597 = vmatpush1.bf16.msra.mxu0 0
    %598 = vmatprep.subr.bf16.mxu0 0
    %599 = vmatpush1.bf16.msra.mxu0 0
    %600 = vmatprep.subr.bf16.mxu0 0
    %601 = vmatpush1.bf16.msra.mxu0 0
    %602 = vmatprep.subr.bf16.mxu0 0
    %603 = vmatpush1.bf16.msra.mxu0 0
    %604 = vmatprep.subr.bf16.mxu0 0
    %605 = vmatpush1.bf16.msra.mxu0 0
    %606 = vmatprep.subr.bf16.mxu0 0
    %607 = vmatpush1.bf16.msra.mxu0 0
    %608 = vmatprep.subr.bf16.mxu0 0
    %609 = vmatpush1.bf16.msra.mxu0 0
    %610 = vmatprep.mubr.bf16.mxu0 0
    %611 = vmatmul.mubr.bf16.gmra.mrb[0].mxu0 %v576
    %v612 = vpop.f32.mrb[0].mxu0
    %v613 = vadd.f32 0.0, %v612
    %v614 = vpop.f32.mrb[0].mxu0
    %v615 = vpop.f32.mrb[0].mxu0
    %v616 = vpop.f32.mrb[0].mxu0
    %617 = vdwg.mxu0
    %v618 = vadd.f32 %v571, %v613
    %v620 = vlaneseq
    %v621 = vshrl.u32 %v620, 7
    %v622 = vsub.s32 0, %v621
    %v623 = vrot.slane %v519, %v622
    %v625 = vadd.f32 %v618, %v623
    %v626 = vxor.u32 %v625, 2147483648
    %v627 = vmul.f32 %v626, 1.442695
    %v628 = vpow.pop %v627
    %v629 = vadd.f32 %v628, 1.0
    %v630 = vrcp.pop %v629
    %v631 = vmul.f32 1.0, %v630
    %v632 = vtanh.pop %v625
    %634 = vrot.lane.b32.xlu0 %v573, 32
    %v635 = vpop.permute.xlu0 %634
    %v637 = vmul.f32 %v631, %v635
    %639 = vrot.lane.b32.xlu0 %v632, 64
    %v640 = vpop.permute.xlu0 %639
    %v642 = vmul.f32 %v631, %v640
    %644 = vrot.lane.b32.xlu0 %v642, 32
    %v645 = vpop.permute.xlu0 %644
    %v647 = vadd.f32 %v637, %v645
    %v648 = vtanh.pop %v647
    %650 = vrot.lane.b32.xlu0 %v648, 64
    %v651 = vpop.permute.xlu0 %650
    %v653 = vmul.f32 %v631, %v651
    %v654 = vpack.c.bf16 %v653, %v653
    %656 = vrot.lane.b32.xlu0 %v654, 32
    %v657 = vpop.permute.xlu0 %656
    %v659 = vsel %vm272, %v657, 0
    %661 = vmatprep.subr.bf16.mxu0 0
    %662 = vmatpush1.bf16.msra.mxu0 %v208
    %663 = vmatprep.subr.bf16.mxu0 0
    %664 = vmatpush1.bf16.msra.mxu0 %v209
    %665 = vmatprep.subr.bf16.mxu0 0
    %666 = vmatpush1.bf16.msra.mxu0 0
    %667 = vmatprep.subr.bf16.mxu0 0
    %668 = vmatpush1.bf16.msra.mxu0 0
    %669 = vmatprep.subr.bf16.mxu0 0
    %670 = vmatpush1.bf16.msra.mxu0 0
    %671 = vmatprep.subr.bf16.mxu0 0
    %672 = vmatpush1.bf16.msra.mxu0 0
    %673 = vmatprep.subr.bf16.mxu0 0
    %674 = vmatpush1.bf16.msra.mxu0 0
    %675 = vmatprep.subr.bf16.mxu0 0
    %676 = vmatpush1.bf16.msra.mxu0 0
    %677 = vmatprep.subr.bf16.mxu0 0
    %678 = vmatpush1.bf16.msra.mxu0 0
    %679 = vmatprep.subr.bf16.mxu0 0
    %680 = vmatpush1.bf16.msra.mxu0 0
    %681 = vmatprep.subr.bf16.mxu0 0
    %682 = vmatpush1.bf16.msra.mxu0 0
    %683 = vmatprep.subr.bf16.mxu0 0
    %684 = vmatpush1.bf16.msra.mxu0 0
    %685 = vmatprep.subr.bf16.mxu0 0
    %686 = vmatpush1.bf16.msra.mxu0 0
    %687 = vmatprep.subr.bf16.mxu0 0
    %688 = vmatpush1.bf16.msra.mxu0 0
    %689 = vmatprep.subr.bf16.mxu0 0
    %690 = vmatpush1.bf16.msra.mxu0 0
    %691 = vmatprep.subr.bf16.mxu0 0
    %692 = vmatpush1.bf16.msra.mxu0 0
    %693 = vmatprep.mubr.bf16.mxu0 0
    %694 = vmatmul.mubr.bf16.gmra.mrb[0].mxu0 %v659
    %v695 = vpop.f32.mrb[0].mxu0
    %v696 = vadd.f32 0.0, %v695
    %v697 = vpop.f32.mrb[0].mxu0
    %v698 = vpop.f32.mrb[0].mxu0
    %v699 = vpop.f32.mrb[0].mxu0
    %700 = vdwg.mxu0
    %v703 = vunpack.c.l.s4 1966171168
    %v704 = vunpack.c.0.s8 %v703
    %v705 = vlaneseq
    %v706 = vshrl.u32 %v705, 7
    %v707 = vsub.s32 %v704, %v706
    %v708 = vrot.slane %v696, %v707
    %v709 = vcombine.high %v708, %v708
    %v711 = vunpack.c.l.s4 1966171168
    %v712 = vunpack.c.0.s8 %v711
    %v713 = vlaneseq
    %v714 = vshrl.u32 %v713, 7
    %v715 = vsub.s32 %v712, %v714
    %v716 = vrot.slane %v708, %v715
    %v718 = vunpack.c.l.s4 1966171168
    %v719 = vunpack.c.0.s8 %v718
    %v720 = vlaneseq
    %v721 = vshrl.u32 %v720, 7
    %v722 = vsub.s32 %v719, %v721
    %v723 = vrot.slane %v709, %v722
    %v724 = vlaneseq
    %v725 = vshrl.u32 %v724, 7
    %v726 = vsub.s32 0, %v725
    %v727 = vrot.slane %v716, %v726
    %v728 = vlaneseq
    %v729 = vshrl.u32 %v728, 7
    %v730 = vsub.s32 0, %v729
    %v731 = vrot.slane %v723, %v730
    %v734 = vadd.f32 %v513, %v727
    %v735 = vadd.f32 %v516, %v731
    %v736 = vtanh.pop %v734
    %v737 = vtanh.pop %v735
    %v739 = vlaneseq
    %v740 = vshrl.u32 %v739, 7
    %v741 = vsub.s32 0, %v740
    %v742 = vrot.slane %v520, %v741
    %v744 = vmul.f32 %v736, %v742
    %v745 = vmul.f32 %v737, %v742
    %v746 = vsel %vm272, %v744, 0.0
    %747 = vadd.xlane.f32.xlu0 %v746
    %v748 = vpop.xlane.xlu0 %747
    %v749 = vsel %vm272, %v745, 0.0
    %750 = vadd.xlane.f32.xlu0 %v749
    %v751 = vpop.xlane.xlu0 %750
    %v754 = vlaneseq
    %v755 = vshrl.u32 %v754, 7
    %v756 = vsub.s32 %v522, %v755
    %v757 = vrot.slane %v748, %v756
    %v758 = vlaneseq
    %v759 = vshrl.u32 %v758, 7
    %v760 = vsub.s32 %v522, %v759
    %v761 = vrot.slane %v751, %v760
    %vm762 = vcmask 1041409
    %v763 = vsel %vm762, %v761, %v757
    %vm765 = vcmask 58368
    %v766 = vsel %vm765, %v763, -inf
    %767 = vmax.xlane.f32.xlu0 %v766
    %v768 = vpop.xlane.xlu0 %767
    %v770 = vlaneseq
    %v771 = vshrl.u32 %v770, 7
    %v772 = vsub.s32 0, %v771
    %v773 = vrot.slane %v768, %v772
    %v774 = vlaneseq
    %v775 = vshrl.u32 %v774, 7
    %v776 = vsub.s32 1, %v775
    %v777 = vrot.slane %v768, %v776
    %v780 = vsub.f32 %v748, %v773
    %v781 = vsub.f32 %v751, %v777
    %v782 = vmul.f32 %v780, 1.442695
    %v783 = vpow.pop %v782
    %v784 = vmul.f32 %v781, 1.442695
    %v785 = vpow.pop %v784
    %788 = vset.pattern.permute.xlu0 0
    %789 = vperm.xlu0 %788, %v783
    %v790 = vpop.permute.xlu0 %789
    %791 = vset.pattern.permute.xlu0 0
    %792 = vperm.xlu0 %791, %v785
    %v793 = vpop.permute.xlu0 %792
    %v794 = vlaneseq
    %v795 = vshrl.u32 %v794, 7
    %v796 = vsub.s32 %v522, %v795
    %v797 = vrot.slane %v790, %v796
    %v798 = vlaneseq
    %v799 = vshrl.u32 %v798, 7
    %v800 = vsub.s32 %v522, %v799
    %v801 = vrot.slane %v793, %v800
    %v802 = vsel %vm762, %v801, %v797
    %v804 = vsel %vm765, %v802, 0.0
    %805 = vadd.xlane.f32.xlu0 %v804
    %v806 = vpop.xlane.xlu0 %805
    %v807 = vlog2.pop %v806
    %v808 = vmul.f32 %v807, 0.6931472
    %v809 = vadd.f32 %v768, %v808
    %v811 = vlaneseq
    %v812 = vshrl.u32 %v811, 7
    %v813 = vsub.s32 0, %v812
    %v814 = vrot.slane %v809, %v813
    %v815 = vlaneseq
    %v816 = vshrl.u32 %v815, 7
    %v817 = vsub.s32 1, %v816
    %v818 = vrot.slane %v809, %v817
    %v821 = vsub.f32 %v748, %v814
    %v822 = vsub.f32 %v751, %v818
    %vm823 = vcmp.eq.f32.partialorder %v748, %v773
    %vm824 = vcmp.eq.f32.partialorder %v751, %v777
    %826 = vbcast.lane.b32.xlu0 %v522, 256
    %v827 = vpop.permute.xlu0 %826
    %v828 = vsel %vm823, %v827, 8
    %v829 = vsel %vm824, %v827, 8
    %830 = vset.pattern.permute.xlu0 0
    %831 = vperm.xlu0 %830, %v828
    %v832 = vpop.permute.xlu0 %831
    %833 = vset.pattern.permute.xlu0 0
    %834 = vperm.xlu0 %833, %v829
    %v835 = vpop.permute.xlu0 %834
    %v836 = vlaneseq
    %v837 = vshrl.u32 %v836, 7
    %v838 = vsub.s32 %v522, %v837
    %v839 = vrot.slane %v832, %v838
    %v840 = vlaneseq
    %v841 = vshrl.u32 %v840, 7
    %v842 = vsub.s32 %v522, %v841
    %v843 = vrot.slane %v835, %v842
    %v844 = vsel %vm762, %v843, %v839
    %v845 = vsel %vm765, %v844, 2147483647
    %v846 = vand.u32 %v845, 65535
    %v847 = vshra.s32 %v845, 16
    %v848 = vcvt.s32.f32 %v846
    %v849 = vcvt.s32.f32 %v847
    %850 = vmin.xlane.f32.xlu0 %v849
    %v851 = vpop.xlane.xlu0 %850
    %vm852 = vcmp.eq.f32.partialorder %v849, %v851
    %v853 = vsel %vm852, %v848, inf
    %854 = vmin.xlane.f32.xlu0 %v853
    %v855 = vpop.xlane.xlu0 %854
    %v856 = vcvt.f32.s32 %v855
    %v857 = vcvt.f32.s32 %v851
    %v858 = vshll.u32 %v857, 16
    %v859 = vadd.s32 %v858, %v856
    %vm860 = vcmp.eq.s32.totalorder %v522, %v859
    %v861 = vsel %vm860, 1, 0
    %v862 = vcvt.s32.f32 %v861
    %vm863 = vcmp.eq.s32.totalorder %v522, 0
    %v864 = vsel %vm863, %v859, 0
    %v866 = vlaneseq
    %v867 = vshrl.u32 %v866, 7
    %v868 = vsub.s32 0, %v867
    %v869 = vrot.slane %v862, %v868
    %871 = vbcast.lane.b32.xlu0 %v869, 256
    %v872 = vpop.permute.xlu0 %871
    %v873 = vlaneseq
    %v874 = vshrl.u32 %v873, 7
    %v875 = vsub.s32 1, %v874
    %v876 = vrot.slane %v862, %v875
    %878 = vbcast.lane.b32.xlu0 %v876, 256
    %v879 = vpop.permute.xlu0 %878
    %v882 = vmul.f32 %v821, %v872
    %v883 = vmul.f32 %v822, %v879
    %886 = vset.pattern.permute.xlu0 0
    %887 = vperm.xlu0 %886, %v882
    %v888 = vpop.permute.xlu0 %887
    %889 = vset.pattern.permute.xlu0 0
    %890 = vperm.xlu0 %889, %v883
    %v891 = vpop.permute.xlu0 %890
    %v892 = vlaneseq
    %v893 = vshrl.u32 %v892, 7
    %v894 = vsub.s32 %v522, %v893
    %v895 = vrot.slane %v888, %v894
    %v896 = vlaneseq
    %v897 = vshrl.u32 %v896, 7
    %v898 = vsub.s32 %v522, %v897
    %v899 = vrot.slane %v891, %v898
    %v900 = vsel %vm762, %v899, %v895
    %v902 = vsel %vm765, %v900, 0.0
    %903 = vadd.xlane.f32.xlu0 %v902
    %v904 = vpop.xlane.xlu0 %903
    %v905 = vsel %vm863, %v904, 0.0
    %v906 = vadd.f32 %v862, 0.0
    %v907 = vlaneseq
    %v908 = vshrl.u32 %v907, 7
    %v909 = vsub.s32 0, %v908
    %v910 = vrot.slane %v862, %v909
    %912 = vbcast.lane.b32.xlu0 %v910, 256
    %v913 = vpop.permute.xlu0 %912
    %v914 = vlaneseq
    %v915 = vshrl.u32 %v914, 7
    %v916 = vsub.s32 1, %v915
    %v917 = vrot.slane %v862, %v916
    %919 = vbcast.lane.b32.xlu0 %v917, 256
    %v920 = vpop.permute.xlu0 %919
    %v921 = vmul.f32 %v913, %v472
    %v922 = vmul.f32 %v920, %v475
    %v923 = vrot.slane %v921, 4
    %v924 = vadd.f32 %v921, %v923
    %v925 = vrot.slane %v924, 2
    %v926 = vadd.f32 %v924, %v925
    %v927 = vrot.slane %v926, 1
    %v928 = vadd.f32 %v926, %v927
    %v929 = vrot.slane %v922, 4
    %v930 = vadd.f32 %v922, %v929
    %v931 = vrot.slane %v930, 2
    %v932 = vadd.f32 %v930, %v931
    %v933 = vrot.slane %v932, 1
    %v934 = vadd.f32 %v932, %v933
    %935 = vmatprep.subr.bf16.mxu0 0
    %936 = vmatpush1.bf16.msra.mxu0 %v196
    %937 = vmatprep.subr.bf16.mxu0 0
    %938 = vmatpush1.bf16.msra.mxu0 %v197
    %939 = vmatprep.subr.bf16.mxu0 0
    %940 = vmatpush1.bf16.msra.mxu0 0
    %941 = vmatprep.subr.bf16.mxu0 0
    %942 = vmatpush1.bf16.msra.mxu0 0
    %943 = vmatprep.subr.bf16.mxu0 0
    %944 = vmatpush1.bf16.msra.mxu0 0
    %945 = vmatprep.subr.bf16.mxu0 0
    %946 = vmatpush1.bf16.msra.mxu0 0
    %947 = vmatprep.subr.bf16.mxu0 0
    %948 = vmatpush1.bf16.msra.mxu0 0
    %949 = vmatprep.subr.bf16.mxu0 0
    %950 = vmatpush1.bf16.msra.mxu0 0
    %951 = vmatprep.subr.bf16.mxu0 0
    %952 = vmatpush1.bf16.msra.mxu0 0
    %953 = vmatprep.subr.bf16.mxu0 0
    %954 = vmatpush1.bf16.msra.mxu0 0
    %955 = vmatprep.subr.bf16.mxu0 0
    %956 = vmatpush1.bf16.msra.mxu0 0
    %957 = vmatprep.subr.bf16.mxu0 0
    %958 = vmatpush1.bf16.msra.mxu0 0
    %959 = vmatprep.subr.bf16.mxu0 0
    %960 = vmatpush1.bf16.msra.mxu0 0
    %961 = vmatprep.subr.bf16.mxu0 0
    %962 = vmatpush1.bf16.msra.mxu0 0
    %963 = vmatprep.subr.bf16.mxu0 0
    %964 = vmatpush1.bf16.msra.mxu0 0
    %965 = vmatprep.subr.bf16.mxu0 0
    %966 = vmatpush1.bf16.msra.mxu0 0
    %967 = vmatprep.mubr.bf16.mxu0 0
    %968 = vmatmul.mubr.bf16.gmra.mrb[0].mxu0 %v659
    %v969 = vpop.f32.mrb[0].mxu0
    %v970 = vadd.f32 0.0, %v969
    %v971 = vpop.f32.mrb[0].mxu0
    %v972 = vpop.f32.mrb[0].mxu0
    %v973 = vpop.f32.mrb[0].mxu0
    %974 = vdwg.mxu0
    %v976 = vrot.slane %v970, 1
    %v979 = vadd.f32 %v928, %v970
    %v980 = vadd.f32 %v934, %v976
    %v981 = vadd.f32 %v979, %v623
    %v982 = vadd.f32 %v980, %v623
    %v983 = vxor.u32 %v981, 2147483648
    %v984 = vxor.u32 %v982, 2147483648
    %v985 = vmul.f32 %v983, 1.442695
    %v986 = vpow.pop %v985
    %v987 = vmul.f32 %v984, 1.442695
    %v988 = vpow.pop %v987
    %v989 = vadd.f32 %v986, 1.0
    %v990 = vadd.f32 %v988, 1.0
    %v991 = vrcp.pop %v989
    %v992 = vmul.f32 1.0, %v991
    %v993 = vrcp.pop %v990
    %v994 = vmul.f32 1.0, %v993
    %v995 = vtanh.pop %v981
    %v996 = vtanh.pop %v982
    %v998 = vrot.slane %v647, 1
    %v1001 = vmul.f32 %v992, %v647
    %v1002 = vmul.f32 %v994, %v998
    %1005 = vrot.lane.b32.xlu0 %v995, 64
    %v1006 = vpop.permute.xlu0 %1005
    %1007 = vrot.lane.b32.xlu0 %v996, 64
    %v1008 = vpop.permute.xlu0 %1007
    %v1011 = vmul.f32 %v992, %v1006
    %v1012 = vmul.f32 %v994, %v1008
    %1015 = vrot.lane.b32.xlu0 %v1011, 32
    %v1016 = vpop.permute.xlu0 %1015
    %1017 = vrot.lane.b32.xlu0 %v1012, 32
    %v1018 = vpop.permute.xlu0 %1017
    %v1021 = vadd.f32 %v1001, %v1016
    %v1022 = vadd.f32 %v1002, %v1018
    %v1023 = vtanh.pop %v1021
    %v1024 = vtanh.pop %v1022
    %1027 = vrot.lane.b32.xlu0 %v1023, 64
    %v1028 = vpop.permute.xlu0 %1027
    %1029 = vrot.lane.b32.xlu0 %v1024, 64
    %v1030 = vpop.permute.xlu0 %1029
    %v1033 = vmul.f32 %v992, %v1028
    %v1034 = vmul.f32 %v994, %v1030
    %v1035 = vpack.c.bf16 %v1033, %v1033
    %v1036 = vpack.c.bf16 %v1034, %v1034
    %v1039 = vunpack.c.l.b16 %v1035
    %v1040 = vunpack.c.l.b16 %v1036
    %v1041 = vrot.slane %v1040, 7
    %v1042 = vsel %vm762, %v1041, %v1039
    %v1043 = vpack.c.b16 %v1042, %v1042
    %1044 = vrot.lane.b32.xlu0 %v1043, 32
    %v1045 = vpop.permute.xlu0 %1044
    %v1047 = vsel %vm272, %v1045, 0
    %1049 = vmatprep.subr.bf16.mxu0 0
    %1050 = vmatpush1.bf16.msra.mxu0 %v208
    %1051 = vmatprep.subr.bf16.mxu0 0
    %1052 = vmatpush1.bf16.msra.mxu0 %v209
    %1053 = vmatprep.subr.bf16.mxu0 0
    %1054 = vmatpush1.bf16.msra.mxu0 0
    %1055 = vmatprep.subr.bf16.mxu0 0
    %1056 = vmatpush1.bf16.msra.mxu0 0
    %1057 = vmatprep.subr.bf16.mxu0 0
    %1058 = vmatpush1.bf16.msra.mxu0 0
    %1059 = vmatprep.subr.bf16.mxu0 0
    %1060 = vmatpush1.bf16.msra.mxu0 0
    %1061 = vmatprep.subr.bf16.mxu0 0
    %1062 = vmatpush1.bf16.msra.mxu0 0
    %1063 = vmatprep.subr.bf16.mxu0 0
    %1064 = vmatpush1.bf16.msra.mxu0 0
    %1065 = vmatprep.subr.bf16.mxu0 0
    %1066 = vmatpush1.bf16.msra.mxu0 0
    %1067 = vmatprep.subr.bf16.mxu0 0
    %1068 = vmatpush1.bf16.msra.mxu0 0
    %1069 = vmatprep.subr.bf16.mxu0 0
    %1070 = vmatpush1.bf16.msra.mxu0 0
    %1071 = vmatprep.subr.bf16.mxu0 0
    %1072 = vmatpush1.bf16.msra.mxu0 0
    %1073 = vmatprep.subr.bf16.mxu0 0
    %1074 = vmatpush1.bf16.msra.mxu0 0
    %1075 = vmatprep.subr.bf16.mxu0 0
    %1076 = vmatpush1.bf16.msra.mxu0 0
    %1077 = vmatprep.subr.bf16.mxu0 0
    %1078 = vmatpush1.bf16.msra.mxu0 0
    %1079 = vmatprep.subr.bf16.mxu0 0
    %1080 = vmatpush1.bf16.msra.mxu0 0
    %1081 = vmatprep.mubr.bf16.mxu0 0
    %1082 = vmatmul.mubr.bf16.gmra.mrb[0].mxu0 %v1047
    %v1083 = vpop.f32.mrb[0].mxu0
    %v1084 = vadd.f32 0.0, %v1083
    %v1085 = vpop.f32.mrb[0].mxu0
    %v1086 = vpop.f32.mrb[0].mxu0
    %v1087 = vpop.f32.mrb[0].mxu0
    %1088 = vdwg.mxu0
    %v1091 = vunpack.c.l.s4 1966171168
    %v1092 = vunpack.c.0.s8 %v1091
    %v1093 = vlaneseq
    %v1094 = vshrl.u32 %v1093, 7
    %v1095 = vsub.s32 %v1092, %v1094
    %v1096 = vrot.slane %v1084, %v1095
    %v1097 = vcombine.high %v1096, %v1096
    %v1099 = vunpack.c.l.s4 1966171168
    %v1100 = vunpack.c.0.s8 %v1099
    %v1101 = vlaneseq
    %v1102 = vshrl.u32 %v1101, 7
    %v1103 = vsub.s32 %v1100, %v1102
    %v1104 = vrot.slane %v1096, %v1103
    %v1106 = vunpack.c.l.s4 1966171168
    %v1107 = vunpack.c.0.s8 %v1106
    %v1108 = vlaneseq
    %v1109 = vshrl.u32 %v1108, 7
    %v1110 = vsub.s32 %v1107, %v1109
    %v1111 = vrot.slane %v1097, %v1110
    %v1112 = vlaneseq
    %v1113 = vshrl.u32 %v1112, 7
    %v1114 = vsub.s32 0, %v1113
    %v1115 = vrot.slane %v1104, %v1114
    %v1116 = vlaneseq
    %v1117 = vshrl.u32 %v1116, 7
    %v1118 = vsub.s32 0, %v1117
    %v1119 = vrot.slane %v1111, %v1118
    %v1122 = vadd.f32 %v513, %v1115
    %v1123 = vadd.f32 %v516, %v1119
    %v1124 = vtanh.pop %v1122
    %v1125 = vtanh.pop %v1123
    %v1126 = vmul.f32 %v1124, %v742
    %v1127 = vmul.f32 %v1125, %v742
    %v1128 = vsel %vm272, %v1126, 0.0
    %1129 = vadd.xlane.f32.xlu0 %v1128
    %v1130 = vpop.xlane.xlu0 %1129
    %v1131 = vsel %vm272, %v1127, 0.0
    %1132 = vadd.xlane.f32.xlu0 %v1131
    %v1133 = vpop.xlane.xlu0 %1132
    %v1134 = vmul.f32 %v906, 1e+09
    %v1136 = vlaneseq
    %v1137 = vshrl.u32 %v1136, 7
    %v1138 = vsub.s32 0, %v1137
    %v1139 = vrot.slane %v1134, %v1138
    %1141 = vbcast.lane.b32.xlu0 %v1139, 256
    %v1142 = vpop.permute.xlu0 %1141
    %v1143 = vlaneseq
    %v1144 = vshrl.u32 %v1143, 7
    %v1145 = vsub.s32 1, %v1144
    %v1146 = vrot.slane %v1134, %v1145
    %1148 = vbcast.lane.b32.xlu0 %v1146, 256
    %v1149 = vpop.permute.xlu0 %1148
    %v1152 = vsub.f32 %v1130, %v1142
    %v1153 = vsub.f32 %v1133, %v1149
    %1156 = vset.pattern.permute.xlu0 0
    %1157 = vperm.xlu0 %1156, %v1152
    %v1158 = vpop.permute.xlu0 %1157
    %1159 = vset.pattern.permute.xlu0 0
    %1160 = vperm.xlu0 %1159, %v1153
    %v1161 = vpop.permute.xlu0 %1160
    %v1162 = vlaneseq
    %v1163 = vshrl.u32 %v1162, 7
    %v1164 = vsub.s32 %v522, %v1163
    %v1165 = vrot.slane %v1158, %v1164
    %v1166 = vlaneseq
    %v1167 = vshrl.u32 %v1166, 7
    %v1168 = vsub.s32 %v522, %v1167
    %v1169 = vrot.slane %v1161, %v1168
    %v1170 = vsel %vm762, %v1169, %v1165
    %v1172 = vsel %vm765, %v1170, -inf
    %1173 = vmax.xlane.f32.xlu0 %v1172
    %v1174 = vpop.xlane.xlu0 %1173
    %v1176 = vlaneseq
    %v1177 = vshrl.u32 %v1176, 7
    %v1178 = vsub.s32 0, %v1177
    %v1179 = vrot.slane %v1174, %v1178
    %v1180 = vlaneseq
    %v1181 = vshrl.u32 %v1180, 7
    %v1182 = vsub.s32 1, %v1181
    %v1183 = vrot.slane %v1174, %v1182
    %v1186 = vsub.f32 %v1152, %v1179
    %v1187 = vsub.f32 %v1153, %v1183
    %v1188 = vmul.f32 %v1186, 1.442695
    %v1189 = vpow.pop %v1188
    %v1190 = vmul.f32 %v1187, 1.442695
    %v1191 = vpow.pop %v1190
    %1194 = vset.pattern.permute.xlu0 0
    %1195 = vperm.xlu0 %1194, %v1189
    %v1196 = vpop.permute.xlu0 %1195
    %1197 = vset.pattern.permute.xlu0 0
    %1198 = vperm.xlu0 %1197, %v1191
    %v1199 = vpop.permute.xlu0 %1198
    %v1200 = vlaneseq
    %v1201 = vshrl.u32 %v1200, 7
    %v1202 = vsub.s32 %v522, %v1201
    %v1203 = vrot.slane %v1196, %v1202
    %v1204 = vlaneseq
    %v1205 = vshrl.u32 %v1204, 7
    %v1206 = vsub.s32 %v522, %v1205
    %v1207 = vrot.slane %v1199, %v1206
    %v1208 = vsel %vm762, %v1207, %v1203
    %v1210 = vsel %vm765, %v1208, 0.0
    %1211 = vadd.xlane.f32.xlu0 %v1210
    %v1212 = vpop.xlane.xlu0 %1211
    %v1213 = vlog2.pop %v1212
    %v1214 = vmul.f32 %v1213, 0.6931472
    %v1215 = vadd.f32 %v1174, %v1214
    %v1217 = vlaneseq
    %v1218 = vshrl.u32 %v1217, 7
    %v1219 = vsub.s32 0, %v1218
    %v1220 = vrot.slane %v1215, %v1219
    %v1221 = vlaneseq
    %v1222 = vshrl.u32 %v1221, 7
    %v1223 = vsub.s32 1, %v1222
    %v1224 = vrot.slane %v1215, %v1223
    %v1227 = vsub.f32 %v1152, %v1220
    %v1228 = vsub.f32 %v1153, %v1224
    %vm1229 = vcmp.eq.f32.partialorder %v1152, %v1179
    %vm1230 = vcmp.eq.f32.partialorder %v1153, %v1183
    %v1231 = vsel %vm1229, %v827, 8
    %v1232 = vsel %vm1230, %v827, 8
    %1233 = vset.pattern.permute.xlu0 0
    %1234 = vperm.xlu0 %1233, %v1231
    %v1235 = vpop.permute.xlu0 %1234
    %1236 = vset.pattern.permute.xlu0 0
    %1237 = vperm.xlu0 %1236, %v1232
    %v1238 = vpop.permute.xlu0 %1237
    %v1239 = vlaneseq
    %v1240 = vshrl.u32 %v1239, 7
    %v1241 = vsub.s32 %v522, %v1240
    %v1242 = vrot.slane %v1235, %v1241
    %v1243 = vlaneseq
    %v1244 = vshrl.u32 %v1243, 7
    %v1245 = vsub.s32 %v522, %v1244
    %v1246 = vrot.slane %v1238, %v1245
    %v1247 = vsel %vm762, %v1246, %v1242
    %v1248 = vsel %vm765, %v1247, 2147483647
    %v1249 = vand.u32 %v1248, 65535
    %v1250 = vshra.s32 %v1248, 16
    %v1251 = vcvt.s32.f32 %v1249
    %v1252 = vcvt.s32.f32 %v1250
    %1253 = vmin.xlane.f32.xlu0 %v1252
    %v1254 = vpop.xlane.xlu0 %1253
    %vm1255 = vcmp.eq.f32.partialorder %v1252, %v1254
    %v1256 = vsel %vm1255, %v1251, inf
    %1257 = vmin.xlane.f32.xlu0 %v1256
    %v1258 = vpop.xlane.xlu0 %1257
    %v1259 = vcvt.f32.s32 %v1258
    %v1260 = vcvt.f32.s32 %v1254
    %v1261 = vshll.u32 %v1260, 16
    %v1262 = vadd.s32 %v1261, %v1259
    %vm1263 = vcmp.eq.s32.totalorder %v522, %v1262
    %v1264 = vsel %vm1263, 1, 0
    %v1265 = vcvt.s32.f32 %v1264
    %vm1266 = vcmp.eq.s32.totalorder %v522, 1
    %v1267 = vsel %vm1266, %v1262, %v864
    %v1269 = vlaneseq
    %v1270 = vshrl.u32 %v1269, 7
    %v1271 = vsub.s32 0, %v1270
    %v1272 = vrot.slane %v1265, %v1271
    %1274 = vbcast.lane.b32.xlu0 %v1272, 256
    %v1275 = vpop.permute.xlu0 %1274
    %v1276 = vlaneseq
    %v1277 = vshrl.u32 %v1276, 7
    %v1278 = vsub.s32 1, %v1277
    %v1279 = vrot.slane %v1265, %v1278
    %1281 = vbcast.lane.b32.xlu0 %v1279, 256
    %v1282 = vpop.permute.xlu0 %1281
    %v1285 = vmul.f32 %v1227, %v1275
    %v1286 = vmul.f32 %v1228, %v1282
    %1289 = vset.pattern.permute.xlu0 0
    %1290 = vperm.xlu0 %1289, %v1285
    %v1291 = vpop.permute.xlu0 %1290
    %1292 = vset.pattern.permute.xlu0 0
    %1293 = vperm.xlu0 %1292, %v1286
    %v1294 = vpop.permute.xlu0 %1293
    %v1295 = vlaneseq
    %v1296 = vshrl.u32 %v1295, 7
    %v1297 = vsub.s32 %v522, %v1296
    %v1298 = vrot.slane %v1291, %v1297
    %v1299 = vlaneseq
    %v1300 = vshrl.u32 %v1299, 7
    %v1301 = vsub.s32 %v522, %v1300
    %v1302 = vrot.slane %v1294, %v1301
    %v1303 = vsel %vm762, %v1302, %v1298
    %v1305 = vsel %vm765, %v1303, 0.0
    %1306 = vadd.xlane.f32.xlu0 %v1305
    %v1307 = vpop.xlane.xlu0 %1306
    %v1308 = vsel %vm1266, %v1307, %v905
    %v1309 = vadd.f32 %v906, %v1265
    %v1310 = vlaneseq
    %v1311 = vshrl.u32 %v1310, 7
    %v1312 = vsub.s32 0, %v1311
    %v1313 = vrot.slane %v1265, %v1312
    %1315 = vbcast.lane.b32.xlu0 %v1313, 256
    %v1316 = vpop.permute.xlu0 %1315
    %v1317 = vlaneseq
    %v1318 = vshrl.u32 %v1317, 7
    %v1319 = vsub.s32 1, %v1318
    %v1320 = vrot.slane %v1265, %v1319
    %1322 = vbcast.lane.b32.xlu0 %v1320, 256
    %v1323 = vpop.permute.xlu0 %1322
    %v1324 = vmul.f32 %v1316, %v472
    %v1325 = vmul.f32 %v1323, %v475
    %v1326 = vrot.slane %v1324, 4
    %v1327 = vadd.f32 %v1324, %v1326
    %v1328 = vrot.slane %v1327, 2
    %v1329 = vadd.f32 %v1327, %v1328
    %v1330 = vrot.slane %v1329, 1
    %v1331 = vadd.f32 %v1329, %v1330
    %v1332 = vrot.slane %v1325, 4
    %v1333 = vadd.f32 %v1325, %v1332
    %v1334 = vrot.slane %v1333, 2
    %v1335 = vadd.f32 %v1333, %v1334
    %v1336 = vrot.slane %v1335, 1
    %v1337 = vadd.f32 %v1335, %v1336
    %1338 = vmatprep.subr.bf16.mxu0 0
    %1339 = vmatpush1.bf16.msra.mxu0 %v196
    %1340 = vmatprep.subr.bf16.mxu0 0
    %1341 = vmatpush1.bf16.msra.mxu0 %v197
    %1342 = vmatprep.subr.bf16.mxu0 0
    %1343 = vmatpush1.bf16.msra.mxu0 0
    %1344 = vmatprep.subr.bf16.mxu0 0
    %1345 = vmatpush1.bf16.msra.mxu0 0
    %1346 = vmatprep.subr.bf16.mxu0 0
    %1347 = vmatpush1.bf16.msra.mxu0 0
    %1348 = vmatprep.subr.bf16.mxu0 0
    %1349 = vmatpush1.bf16.msra.mxu0 0
    %1350 = vmatprep.subr.bf16.mxu0 0
    %1351 = vmatpush1.bf16.msra.mxu0 0
    %1352 = vmatprep.subr.bf16.mxu0 0
    %1353 = vmatpush1.bf16.msra.mxu0 0
    %1354 = vmatprep.subr.bf16.mxu0 0
    %1355 = vmatpush1.bf16.msra.mxu0 0
    %1356 = vmatprep.subr.bf16.mxu0 0
    %1357 = vmatpush1.bf16.msra.mxu0 0
    %1358 = vmatprep.subr.bf16.mxu0 0
    %1359 = vmatpush1.bf16.msra.mxu0 0
    %1360 = vmatprep.subr.bf16.mxu0 0
    %1361 = vmatpush1.bf16.msra.mxu0 0
    %1362 = vmatprep.subr.bf16.mxu0 0
    %1363 = vmatpush1.bf16.msra.mxu0 0
    %1364 = vmatprep.subr.bf16.mxu0 0
    %1365 = vmatpush1.bf16.msra.mxu0 0
    %1366 = vmatprep.subr.bf16.mxu0 0
    %1367 = vmatpush1.bf16.msra.mxu0 0
    %1368 = vmatprep.subr.bf16.mxu0 0
    %1369 = vmatpush1.bf16.msra.mxu0 0
    %1370 = vmatprep.mubr.bf16.mxu0 0
    %1371 = vmatmul.mubr.bf16.gmra.mrb[0].mxu0 %v1047
    %v1372 = vpop.f32.mrb[0].mxu0
    %v1373 = vadd.f32 0.0, %v1372
    %v1374 = vpop.f32.mrb[0].mxu0
    %v1375 = vpop.f32.mrb[0].mxu0
    %v1376 = vpop.f32.mrb[0].mxu0
    %1377 = vdwg.mxu0
    %v1379 = vrot.slane %v1373, 1
    %v1382 = vadd.f32 %v1331, %v1373
    %v1383 = vadd.f32 %v1337, %v1379
    %v1384 = vadd.f32 %v1382, %v623
    %v1385 = vadd.f32 %v1383, %v623
    %v1386 = vxor.u32 %v1384, 2147483648
    %v1387 = vxor.u32 %v1385, 2147483648
    %v1388 = vmul.f32 %v1386, 1.442695
    %v1389 = vpow.pop %v1388
    %v1390 = vmul.f32 %v1387, 1.442695
    %v1391 = vpow.pop %v1390
    %v1392 = vadd.f32 %v1389, 1.0
    %v1393 = vadd.f32 %v1391, 1.0
    %v1394 = vrcp.pop %v1392
    %v1395 = vmul.f32 1.0, %v1394
    %v1396 = vrcp.pop %v1393
    %v1397 = vmul.f32 1.0, %v1396
    %v1398 = vtanh.pop %v1384
    %v1399 = vtanh.pop %v1385
    %v1400 = vmul.f32 %v1395, %v1021
    %v1401 = vmul.f32 %v1397, %v1022
    %1404 = vrot.lane.b32.xlu0 %v1398, 64
    %v1405 = vpop.permute.xlu0 %1404
    %1406 = vrot.lane.b32.xlu0 %v1399, 64
    %v1407 = vpop.permute.xlu0 %1406
    %v1410 = vmul.f32 %v1395, %v1405
    %v1411 = vmul.f32 %v1397, %v1407
    %1414 = vrot.lane.b32.xlu0 %v1410, 32
    %v1415 = vpop.permute.xlu0 %1414
    %1416 = vrot.lane.b32.xlu0 %v1411, 32
    %v1417 = vpop.permute.xlu0 %1416
    %v1420 = vadd.f32 %v1400, %v1415
    %v1421 = vadd.f32 %v1401, %v1417
    %v1422 = vtanh.pop %v1420
    %v1423 = vtanh.pop %v1421
    %1426 = vrot.lane.b32.xlu0 %v1422, 64
    %v1427 = vpop.permute.xlu0 %1426
    %1428 = vrot.lane.b32.xlu0 %v1423, 64
    %v1429 = vpop.permute.xlu0 %1428
    %v1432 = vmul.f32 %v1395, %v1427
    %v1433 = vmul.f32 %v1397, %v1429
    %v1434 = vpack.c.bf16 %v1432, %v1432
    %v1435 = vpack.c.bf16 %v1433, %v1433
    %v1438 = vunpack.c.l.b16 %v1434
    %v1439 = vunpack.c.l.b16 %v1435
    %v1440 = vrot.slane %v1439, 7
    %v1441 = vsel %vm762, %v1440, %v1438
    %v1442 = vpack.c.b16 %v1441, %v1441
    %1443 = vrot.lane.b32.xlu0 %v1442, 32
    %v1444 = vpop.permute.xlu0 %1443
    %v1446 = vsel %vm272, %v1444, 0
    %1448 = vmatprep.subr.bf16.mxu0 0
    %1449 = vmatpush1.bf16.msra.mxu0 %v208
    %1450 = vmatprep.subr.bf16.mxu0 0
    %1451 = vmatpush1.bf16.msra.mxu0 %v209
    %1452 = vmatprep.subr.bf16.mxu0 0
    %1453 = vmatpush1.bf16.msra.mxu0 0
    %1454 = vmatprep.subr.bf16.mxu0 0
    %1455 = vmatpush1.bf16.msra.mxu0 0
    %1456 = vmatprep.subr.bf16.mxu0 0
    %1457 = vmatpush1.bf16.msra.mxu0 0
    %1458 = vmatprep.subr.bf16.mxu0 0
    %1459 = vmatpush1.bf16.msra.mxu0 0
    %1460 = vmatprep.subr.bf16.mxu0 0
    %1461 = vmatpush1.bf16.msra.mxu0 0
    %1462 = vmatprep.subr.bf16.mxu0 0
    %1463 = vmatpush1.bf16.msra.mxu0 0
    %1464 = vmatprep.subr.bf16.mxu0 0
    %1465 = vmatpush1.bf16.msra.mxu0 0
    %1466 = vmatprep.subr.bf16.mxu0 0
    %1467 = vmatpush1.bf16.msra.mxu0 0
    %1468 = vmatprep.subr.bf16.mxu0 0
    %1469 = vmatpush1.bf16.msra.mxu0 0
    %1470 = vmatprep.subr.bf16.mxu0 0
    %1471 = vmatpush1.bf16.msra.mxu0 0
    %1472 = vmatprep.subr.bf16.mxu0 0
    %1473 = vmatpush1.bf16.msra.mxu0 0
    %1474 = vmatprep.subr.bf16.mxu0 0
    %1475 = vmatpush1.bf16.msra.mxu0 0
    %1476 = vmatprep.subr.bf16.mxu0 0
    %1477 = vmatpush1.bf16.msra.mxu0 0
    %1478 = vmatprep.subr.bf16.mxu0 0
    %1479 = vmatpush1.bf16.msra.mxu0 0
    %1480 = vmatprep.mubr.bf16.mxu0 0
    %1481 = vmatmul.mubr.bf16.gmra.mrb[0].mxu0 %v1446
    %v1482 = vpop.f32.mrb[0].mxu0
    %v1483 = vadd.f32 0.0, %v1482
    %v1484 = vpop.f32.mrb[0].mxu0
    %v1485 = vpop.f32.mrb[0].mxu0
    %v1486 = vpop.f32.mrb[0].mxu0
    %1487 = vdwg.mxu0
    %v1490 = vunpack.c.l.s4 1966171168
    %v1491 = vunpack.c.0.s8 %v1490
    %v1492 = vlaneseq
    %v1493 = vshrl.u32 %v1492, 7
    %v1494 = vsub.s32 %v1491, %v1493
    %v1495 = vrot.slane %v1483, %v1494
    %v1496 = vcombine.high %v1495, %v1495
    %v1498 = vunpack.c.l.s4 1966171168
    %v1499 = vunpack.c.0.s8 %v1498
    %v1500 = vlaneseq
    %v1501 = vshrl.u32 %v1500, 7
    %v1502 = vsub.s32 %v1499, %v1501
    %v1503 = vrot.slane %v1495, %v1502
    %v1505 = vunpack.c.l.s4 1966171168
    %v1506 = vunpack.c.0.s8 %v1505
    %v1507 = vlaneseq
    %v1508 = vshrl.u32 %v1507, 7
    %v1509 = vsub.s32 %v1506, %v1508
    %v1510 = vrot.slane %v1496, %v1509
    %v1511 = vlaneseq
    %v1512 = vshrl.u32 %v1511, 7
    %v1513 = vsub.s32 0, %v1512
    %v1514 = vrot.slane %v1503, %v1513
    %v1515 = vlaneseq
    %v1516 = vshrl.u32 %v1515, 7
    %v1517 = vsub.s32 0, %v1516
    %v1518 = vrot.slane %v1510, %v1517
    %v1521 = vadd.f32 %v513, %v1514
    %v1522 = vadd.f32 %v516, %v1518
    %v1523 = vtanh.pop %v1521
    %v1524 = vtanh.pop %v1522
    %v1525 = vmul.f32 %v1523, %v742
    %v1526 = vmul.f32 %v1524, %v742
    %v1527 = vsel %vm272, %v1525, 0.0
    %1528 = vadd.xlane.f32.xlu0 %v1527
    %v1529 = vpop.xlane.xlu0 %1528
    %v1530 = vsel %vm272, %v1526, 0.0
    %1531 = vadd.xlane.f32.xlu0 %v1530
    %v1532 = vpop.xlane.xlu0 %1531
    %v1533 = vmul.f32 %v1309, 1e+09
    %v1535 = vlaneseq
    %v1536 = vshrl.u32 %v1535, 7
    %v1537 = vsub.s32 0, %v1536
    %v1538 = vrot.slane %v1533, %v1537
    %1540 = vbcast.lane.b32.xlu0 %v1538, 256
    %v1541 = vpop.permute.xlu0 %1540
    %v1542 = vlaneseq
    %v1543 = vshrl.u32 %v1542, 7
    %v1544 = vsub.s32 1, %v1543
    %v1545 = vrot.slane %v1533, %v1544
    %1547 = vbcast.lane.b32.xlu0 %v1545, 256
    %v1548 = vpop.permute.xlu0 %1547
    %v1551 = vsub.f32 %v1529, %v1541
    %v1552 = vsub.f32 %v1532, %v1548
    %1555 = vset.pattern.permute.xlu0 0
    %1556 = vperm.xlu0 %1555, %v1551
    %v1557 = vpop.permute.xlu0 %1556
    %1558 = vset.pattern.permute.xlu0 0
    %1559 = vperm.xlu0 %1558, %v1552
    %v1560 = vpop.permute.xlu0 %1559
    %v1561 = vlaneseq
    %v1562 = vshrl.u32 %v1561, 7
    %v1563 = vsub.s32 %v522, %v1562
    %v1564 = vrot.slane %v1557, %v1563
    %v1565 = vlaneseq
    %v1566 = vshrl.u32 %v1565, 7
    %v1567 = vsub.s32 %v522, %v1566
    %v1568 = vrot.slane %v1560, %v1567
    %v1569 = vsel %vm762, %v1568, %v1564
    %v1571 = vsel %vm765, %v1569, -inf
    %1572 = vmax.xlane.f32.xlu0 %v1571
    %v1573 = vpop.xlane.xlu0 %1572
    %v1575 = vlaneseq
    %v1576 = vshrl.u32 %v1575, 7
    %v1577 = vsub.s32 0, %v1576
    %v1578 = vrot.slane %v1573, %v1577
    %v1579 = vlaneseq
    %v1580 = vshrl.u32 %v1579, 7
    %v1581 = vsub.s32 1, %v1580
    %v1582 = vrot.slane %v1573, %v1581
    %v1585 = vsub.f32 %v1551, %v1578
    %v1586 = vsub.f32 %v1552, %v1582
    %v1587 = vmul.f32 %v1585, 1.442695
    %v1588 = vpow.pop %v1587
    %v1589 = vmul.f32 %v1586, 1.442695
    %v1590 = vpow.pop %v1589
    %1593 = vset.pattern.permute.xlu0 0
    %1594 = vperm.xlu0 %1593, %v1588
    %v1595 = vpop.permute.xlu0 %1594
    %1596 = vset.pattern.permute.xlu0 0
    %1597 = vperm.xlu0 %1596, %v1590
    %v1598 = vpop.permute.xlu0 %1597
    %v1599 = vlaneseq
    %v1600 = vshrl.u32 %v1599, 7
    %v1601 = vsub.s32 %v522, %v1600
    %v1602 = vrot.slane %v1595, %v1601
    %v1603 = vlaneseq
    %v1604 = vshrl.u32 %v1603, 7
    %v1605 = vsub.s32 %v522, %v1604
    %v1606 = vrot.slane %v1598, %v1605
    %v1607 = vsel %vm762, %v1606, %v1602
    %v1609 = vsel %vm765, %v1607, 0.0
    %1610 = vadd.xlane.f32.xlu0 %v1609
    %v1611 = vpop.xlane.xlu0 %1610
    %v1612 = vlog2.pop %v1611
    %v1613 = vmul.f32 %v1612, 0.6931472
    %v1614 = vadd.f32 %v1573, %v1613
    %v1616 = vlaneseq
    %v1617 = vshrl.u32 %v1616, 7
    %v1618 = vsub.s32 0, %v1617
    %v1619 = vrot.slane %v1614, %v1618
    %v1620 = vlaneseq
    %v1621 = vshrl.u32 %v1620, 7
    %v1622 = vsub.s32 1, %v1621
    %v1623 = vrot.slane %v1614, %v1622
    %v1626 = vsub.f32 %v1551, %v1619
    %v1627 = vsub.f32 %v1552, %v1623
    %vm1628 = vcmp.eq.f32.partialorder %v1551, %v1578
    %vm1629 = vcmp.eq.f32.partialorder %v1552, %v1582
    %v1630 = vsel %vm1628, %v827, 8
    %v1631 = vsel %vm1629, %v827, 8
    %1632 = vset.pattern.permute.xlu0 0
    %1633 = vperm.xlu0 %1632, %v1630
    %v1634 = vpop.permute.xlu0 %1633
    %1635 = vset.pattern.permute.xlu0 0
    %1636 = vperm.xlu0 %1635, %v1631
    %v1637 = vpop.permute.xlu0 %1636
    %v1638 = vlaneseq
    %v1639 = vshrl.u32 %v1638, 7
    %v1640 = vsub.s32 %v522, %v1639
    %v1641 = vrot.slane %v1634, %v1640
    %v1642 = vlaneseq
    %v1643 = vshrl.u32 %v1642, 7
    %v1644 = vsub.s32 %v522, %v1643
    %v1645 = vrot.slane %v1637, %v1644
    %v1646 = vsel %vm762, %v1645, %v1641
    %v1647 = vsel %vm765, %v1646, 2147483647
    %v1648 = vand.u32 %v1647, 65535
    %v1649 = vshra.s32 %v1647, 16
    %v1650 = vcvt.s32.f32 %v1648
    %v1651 = vcvt.s32.f32 %v1649
    %1652 = vmin.xlane.f32.xlu0 %v1651
    %v1653 = vpop.xlane.xlu0 %1652
    %vm1654 = vcmp.eq.f32.partialorder %v1651, %v1653
    %v1655 = vsel %vm1654, %v1650, inf
    %1656 = vmin.xlane.f32.xlu0 %v1655
    %v1657 = vpop.xlane.xlu0 %1656
    %v1658 = vcvt.f32.s32 %v1657
    %v1659 = vcvt.f32.s32 %v1653
    %v1660 = vshll.u32 %v1659, 16
    %v1661 = vadd.s32 %v1660, %v1658
    %vm1662 = vcmp.eq.s32.totalorder %v522, %v1661
    %v1663 = vsel %vm1662, 1, 0
    %v1664 = vcvt.s32.f32 %v1663
    %vm1665 = vcmp.eq.s32.totalorder %v522, 2
    %v1666 = vsel %vm1665, %v1661, %v1267
    %v1668 = vlaneseq
    %v1669 = vshrl.u32 %v1668, 7
    %v1670 = vsub.s32 0, %v1669
    %v1671 = vrot.slane %v1664, %v1670
    %1673 = vbcast.lane.b32.xlu0 %v1671, 256
    %v1674 = vpop.permute.xlu0 %1673
    %v1675 = vlaneseq
    %v1676 = vshrl.u32 %v1675, 7
    %v1677 = vsub.s32 1, %v1676
    %v1678 = vrot.slane %v1664, %v1677
    %1680 = vbcast.lane.b32.xlu0 %v1678, 256
    %v1681 = vpop.permute.xlu0 %1680
    %v1684 = vmul.f32 %v1626, %v1674
    %v1685 = vmul.f32 %v1627, %v1681
    %1688 = vset.pattern.permute.xlu0 0
    %1689 = vperm.xlu0 %1688, %v1684
    %v1690 = vpop.permute.xlu0 %1689
    %1691 = vset.pattern.permute.xlu0 0
    %1692 = vperm.xlu0 %1691, %v1685
    %v1693 = vpop.permute.xlu0 %1692
    %v1694 = vlaneseq
    %v1695 = vshrl.u32 %v1694, 7
    %v1696 = vsub.s32 %v522, %v1695
    %v1697 = vrot.slane %v1690, %v1696
    %v1698 = vlaneseq
    %v1699 = vshrl.u32 %v1698, 7
    %v1700 = vsub.s32 %v522, %v1699
    %v1701 = vrot.slane %v1693, %v1700
    %v1702 = vsel %vm762, %v1701, %v1697
    %v1704 = vsel %vm765, %v1702, 0.0
    %1705 = vadd.xlane.f32.xlu0 %v1704
    %v1706 = vpop.xlane.xlu0 %1705
    %v1707 = vsel %vm1665, %v1706, %v1308
    %v1708 = vadd.f32 %v1309, %v1664
    %v1709 = vlaneseq
    %v1710 = vshrl.u32 %v1709, 7
    %v1711 = vsub.s32 0, %v1710
    %v1712 = vrot.slane %v1664, %v1711
    %1714 = vbcast.lane.b32.xlu0 %v1712, 256
    %v1715 = vpop.permute.xlu0 %1714
    %v1716 = vlaneseq
    %v1717 = vshrl.u32 %v1716, 7
    %v1718 = vsub.s32 1, %v1717
    %v1719 = vrot.slane %v1664, %v1718
    %1721 = vbcast.lane.b32.xlu0 %v1719, 256
    %v1722 = vpop.permute.xlu0 %1721
    %v1723 = vmul.f32 %v1715, %v472
    %v1724 = vmul.f32 %v1722, %v475
    %v1725 = vrot.slane %v1723, 4
    %v1726 = vadd.f32 %v1723, %v1725
    %v1727 = vrot.slane %v1726, 2
    %v1728 = vadd.f32 %v1726, %v1727
    %v1729 = vrot.slane %v1728, 1
    %v1730 = vadd.f32 %v1728, %v1729
    %v1731 = vrot.slane %v1724, 4
    %v1732 = vadd.f32 %v1724, %v1731
    %v1733 = vrot.slane %v1732, 2
    %v1734 = vadd.f32 %v1732, %v1733
    %v1735 = vrot.slane %v1734, 1
    %v1736 = vadd.f32 %v1734, %v1735
    %1737 = vmatprep.subr.bf16.mxu0 0
    %1738 = vmatpush1.bf16.msra.mxu0 %v196
    %1739 = vmatprep.subr.bf16.mxu0 0
    %1740 = vmatpush1.bf16.msra.mxu0 %v197
    %1741 = vmatprep.subr.bf16.mxu0 0
    %1742 = vmatpush1.bf16.msra.mxu0 0
    %1743 = vmatprep.subr.bf16.mxu0 0
    %1744 = vmatpush1.bf16.msra.mxu0 0
    %1745 = vmatprep.subr.bf16.mxu0 0
    %1746 = vmatpush1.bf16.msra.mxu0 0
    %1747 = vmatprep.subr.bf16.mxu0 0
    %1748 = vmatpush1.bf16.msra.mxu0 0
    %1749 = vmatprep.subr.bf16.mxu0 0
    %1750 = vmatpush1.bf16.msra.mxu0 0
    %1751 = vmatprep.subr.bf16.mxu0 0
    %1752 = vmatpush1.bf16.msra.mxu0 0
    %1753 = vmatprep.subr.bf16.mxu0 0
    %1754 = vmatpush1.bf16.msra.mxu0 0
    %1755 = vmatprep.subr.bf16.mxu0 0
    %1756 = vmatpush1.bf16.msra.mxu0 0
    %1757 = vmatprep.subr.bf16.mxu0 0
    %1758 = vmatpush1.bf16.msra.mxu0 0
    %1759 = vmatprep.subr.bf16.mxu0 0
    %1760 = vmatpush1.bf16.msra.mxu0 0
    %1761 = vmatprep.subr.bf16.mxu0 0
    %1762 = vmatpush1.bf16.msra.mxu0 0
    %1763 = vmatprep.subr.bf16.mxu0 0
    %1764 = vmatpush1.bf16.msra.mxu0 0
    %1765 = vmatprep.subr.bf16.mxu0 0
    %1766 = vmatpush1.bf16.msra.mxu0 0
    %1767 = vmatprep.subr.bf16.mxu0 0
    %1768 = vmatpush1.bf16.msra.mxu0 0
    %1769 = vmatprep.mubr.bf16.mxu0 0
    %1770 = vmatmul.mubr.bf16.gmra.mrb[0].mxu0 %v1446
    %v1771 = vpop.f32.mrb[0].mxu0
    %v1772 = vadd.f32 0.0, %v1771
    %v1773 = vpop.f32.mrb[0].mxu0
    %v1774 = vpop.f32.mrb[0].mxu0
    %v1775 = vpop.f32.mrb[0].mxu0
    %1776 = vdwg.mxu0
    %v1778 = vrot.slane %v1772, 1
    %v1781 = vadd.f32 %v1730, %v1772
    %v1782 = vadd.f32 %v1736, %v1778
    %v1783 = vadd.f32 %v1781, %v623
    %v1784 = vadd.f32 %v1782, %v623
    %v1785 = vxor.u32 %v1783, 2147483648
    %v1786 = vxor.u32 %v1784, 2147483648
    %v1787 = vmul.f32 %v1785, 1.442695
    %v1788 = vpow.pop %v1787
    %v1789 = vmul.f32 %v1786, 1.442695
    %v1790 = vpow.pop %v1789
    %v1791 = vadd.f32 %v1788, 1.0
    %v1792 = vadd.f32 %v1790, 1.0
    %v1793 = vrcp.pop %v1791
    %v1794 = vmul.f32 1.0, %v1793
    %v1795 = vrcp.pop %v1792
    %v1796 = vmul.f32 1.0, %v1795
    %v1797 = vtanh.pop %v1783
    %v1798 = vtanh.pop %v1784
    %v1799 = vmul.f32 %v1794, %v1420
    %v1800 = vmul.f32 %v1796, %v1421
    %1803 = vrot.lane.b32.xlu0 %v1797, 64
    %v1804 = vpop.permute.xlu0 %1803
    %1805 = vrot.lane.b32.xlu0 %v1798, 64
    %v1806 = vpop.permute.xlu0 %1805
    %v1809 = vmul.f32 %v1794, %v1804
    %v1810 = vmul.f32 %v1796, %v1806
    %1813 = vrot.lane.b32.xlu0 %v1809, 32
    %v1814 = vpop.permute.xlu0 %1813
    %1815 = vrot.lane.b32.xlu0 %v1810, 32
    %v1816 = vpop.permute.xlu0 %1815
    %v1819 = vadd.f32 %v1799, %v1814
    %v1820 = vadd.f32 %v1800, %v1816
    %v1821 = vtanh.pop %v1819
    %v1822 = vtanh.pop %v1820
    %1825 = vrot.lane.b32.xlu0 %v1821, 64
    %v1826 = vpop.permute.xlu0 %1825
    %1827 = vrot.lane.b32.xlu0 %v1822, 64
    %v1828 = vpop.permute.xlu0 %1827
    %v1831 = vmul.f32 %v1794, %v1826
    %v1832 = vmul.f32 %v1796, %v1828
    %v1833 = vpack.c.bf16 %v1831, %v1831
    %v1834 = vpack.c.bf16 %v1832, %v1832
    %v1837 = vunpack.c.l.b16 %v1833
    %v1838 = vunpack.c.l.b16 %v1834
    %v1839 = vrot.slane %v1838, 7
    %v1840 = vsel %vm762, %v1839, %v1837
    %v1841 = vpack.c.b16 %v1840, %v1840
    %1842 = vrot.lane.b32.xlu0 %v1841, 32
    %v1843 = vpop.permute.xlu0 %1842
    %v1845 = vsel %vm272, %v1843, 0
    %1847 = vmatprep.subr.bf16.mxu0 0
    %1848 = vmatpush1.bf16.msra.mxu0 %v208
    %1849 = vmatprep.subr.bf16.mxu0 0
    %1850 = vmatpush1.bf16.msra.mxu0 %v209
    %1851 = vmatprep.subr.bf16.mxu0 0
    %1852 = vmatpush1.bf16.msra.mxu0 0
    %1853 = vmatprep.subr.bf16.mxu0 0
    %1854 = vmatpush1.bf16.msra.mxu0 0
    %1855 = vmatprep.subr.bf16.mxu0 0
    %1856 = vmatpush1.bf16.msra.mxu0 0
    %1857 = vmatprep.subr.bf16.mxu0 0
    %1858 = vmatpush1.bf16.msra.mxu0 0
    %1859 = vmatprep.subr.bf16.mxu0 0
    %1860 = vmatpush1.bf16.msra.mxu0 0
    %1861 = vmatprep.subr.bf16.mxu0 0
    %1862 = vmatpush1.bf16.msra.mxu0 0
    %1863 = vmatprep.subr.bf16.mxu0 0
    %1864 = vmatpush1.bf16.msra.mxu0 0
    %1865 = vmatprep.subr.bf16.mxu0 0
    %1866 = vmatpush1.bf16.msra.mxu0 0
    %1867 = vmatprep.subr.bf16.mxu0 0
    %1868 = vmatpush1.bf16.msra.mxu0 0
    %1869 = vmatprep.subr.bf16.mxu0 0
    %1870 = vmatpush1.bf16.msra.mxu0 0
    %1871 = vmatprep.subr.bf16.mxu0 0
    %1872 = vmatpush1.bf16.msra.mxu0 0
    %1873 = vmatprep.subr.bf16.mxu0 0
    %1874 = vmatpush1.bf16.msra.mxu0 0
    %1875 = vmatprep.subr.bf16.mxu0 0
    %1876 = vmatpush1.bf16.msra.mxu0 0
    %1877 = vmatprep.subr.bf16.mxu0 0
    %1878 = vmatpush1.bf16.msra.mxu0 0
    %1879 = vmatprep.mubr.bf16.mxu0 0
    %1880 = vmatmul.mubr.bf16.gmra.mrb[0].mxu0 %v1845
    %v1881 = vpop.f32.mrb[0].mxu0
    %v1882 = vadd.f32 0.0, %v1881
    %v1883 = vpop.f32.mrb[0].mxu0
    %v1884 = vpop.f32.mrb[0].mxu0
    %v1885 = vpop.f32.mrb[0].mxu0
    %1886 = vdwg.mxu0
    %v1889 = vunpack.c.l.s4 1966171168
    %v1890 = vunpack.c.0.s8 %v1889
    %v1891 = vlaneseq
    %v1892 = vshrl.u32 %v1891, 7
    %v1893 = vsub.s32 %v1890, %v1892
    %v1894 = vrot.slane %v1882, %v1893
    %v1895 = vcombine.high %v1894, %v1894
    %v1897 = vunpack.c.l.s4 1966171168
    %v1898 = vunpack.c.0.s8 %v1897
    %v1899 = vlaneseq
    %v1900 = vshrl.u32 %v1899, 7
    %v1901 = vsub.s32 %v1898, %v1900
    %v1902 = vrot.slane %v1894, %v1901
    %v1904 = vunpack.c.l.s4 1966171168
    %v1905 = vunpack.c.0.s8 %v1904
    %v1906 = vlaneseq
    %v1907 = vshrl.u32 %v1906, 7
    %v1908 = vsub.s32 %v1905, %v1907
    %v1909 = vrot.slane %v1895, %v1908
    %v1910 = vlaneseq
    %v1911 = vshrl.u32 %v1910, 7
    %v1912 = vsub.s32 0, %v1911
    %v1913 = vrot.slane %v1902, %v1912
    %v1914 = vlaneseq
    %v1915 = vshrl.u32 %v1914, 7
    %v1916 = vsub.s32 0, %v1915
    %v1917 = vrot.slane %v1909, %v1916
    %v1920 = vadd.f32 %v513, %v1913
    %v1921 = vadd.f32 %v516, %v1917
    %v1922 = vtanh.pop %v1920
    %v1923 = vtanh.pop %v1921
    %v1924 = vmul.f32 %v1922, %v742
    %v1925 = vmul.f32 %v1923, %v742
    %v1926 = vsel %vm272, %v1924, 0.0
    %1927 = vadd.xlane.f32.xlu0 %v1926
    %v1928 = vpop.xlane.xlu0 %1927
    %v1929 = vsel %vm272, %v1925, 0.0
    %1930 = vadd.xlane.f32.xlu0 %v1929
    %v1931 = vpop.xlane.xlu0 %1930
    %v1932 = vmul.f32 %v1708, 1e+09
    %v1934 = vlaneseq
    %v1935 = vshrl.u32 %v1934, 7
    %v1936 = vsub.s32 0, %v1935
    %v1937 = vrot.slane %v1932, %v1936
    %1939 = vbcast.lane.b32.xlu0 %v1937, 256
    %v1940 = vpop.permute.xlu0 %1939
    %v1941 = vlaneseq
    %v1942 = vshrl.u32 %v1941, 7
    %v1943 = vsub.s32 1, %v1942
    %v1944 = vrot.slane %v1932, %v1943
    %1946 = vbcast.lane.b32.xlu0 %v1944, 256
    %v1947 = vpop.permute.xlu0 %1946
    %v1950 = vsub.f32 %v1928, %v1940
    %v1951 = vsub.f32 %v1931, %v1947
    %1954 = vset.pattern.permute.xlu0 0
    %1955 = vperm.xlu0 %1954, %v1950
    %v1956 = vpop.permute.xlu0 %1955
    %1957 = vset.pattern.permute.xlu0 0
    %1958 = vperm.xlu0 %1957, %v1951
    %v1959 = vpop.permute.xlu0 %1958
    %v1960 = vlaneseq
    %v1961 = vshrl.u32 %v1960, 7
    %v1962 = vsub.s32 %v522, %v1961
    %v1963 = vrot.slane %v1956, %v1962
    %v1964 = vlaneseq
    %v1965 = vshrl.u32 %v1964, 7
    %v1966 = vsub.s32 %v522, %v1965
    %v1967 = vrot.slane %v1959, %v1966
    %v1968 = vsel %vm762, %v1967, %v1963
    %v1970 = vsel %vm765, %v1968, -inf
    %1971 = vmax.xlane.f32.xlu0 %v1970
    %v1972 = vpop.xlane.xlu0 %1971
    %v1974 = vlaneseq
    %v1975 = vshrl.u32 %v1974, 7
    %v1976 = vsub.s32 0, %v1975
    %v1977 = vrot.slane %v1972, %v1976
    %v1978 = vlaneseq
    %v1979 = vshrl.u32 %v1978, 7
    %v1980 = vsub.s32 1, %v1979
    %v1981 = vrot.slane %v1972, %v1980
    %v1984 = vsub.f32 %v1950, %v1977
    %v1985 = vsub.f32 %v1951, %v1981
    %v1986 = vmul.f32 %v1984, 1.442695
    %v1987 = vpow.pop %v1986
    %v1988 = vmul.f32 %v1985, 1.442695
    %v1989 = vpow.pop %v1988
    %1992 = vset.pattern.permute.xlu0 0
    %1993 = vperm.xlu0 %1992, %v1987
    %v1994 = vpop.permute.xlu0 %1993
    %1995 = vset.pattern.permute.xlu0 0
    %1996 = vperm.xlu0 %1995, %v1989
    %v1997 = vpop.permute.xlu0 %1996
    %v1998 = vlaneseq
    %v1999 = vshrl.u32 %v1998, 7
    %v2000 = vsub.s32 %v522, %v1999
    %v2001 = vrot.slane %v1994, %v2000
    %v2002 = vlaneseq
    %v2003 = vshrl.u32 %v2002, 7
    %v2004 = vsub.s32 %v522, %v2003
    %v2005 = vrot.slane %v1997, %v2004
    %v2006 = vsel %vm762, %v2005, %v2001
    %v2008 = vsel %vm765, %v2006, 0.0
    %2009 = vadd.xlane.f32.xlu0 %v2008
    %v2010 = vpop.xlane.xlu0 %2009
    %v2011 = vlog2.pop %v2010
    %v2012 = vmul.f32 %v2011, 0.6931472
    %v2013 = vadd.f32 %v1972, %v2012
    %v2015 = vlaneseq
    %v2016 = vshrl.u32 %v2015, 7
    %v2017 = vsub.s32 0, %v2016
    %v2018 = vrot.slane %v2013, %v2017
    %v2019 = vlaneseq
    %v2020 = vshrl.u32 %v2019, 7
    %v2021 = vsub.s32 1, %v2020
    %v2022 = vrot.slane %v2013, %v2021
    %v2025 = vsub.f32 %v1950, %v2018
    %v2026 = vsub.f32 %v1951, %v2022
    %vm2027 = vcmp.eq.f32.partialorder %v1950, %v1977
    %vm2028 = vcmp.eq.f32.partialorder %v1951, %v1981
    %v2029 = vsel %vm2027, %v827, 8
    %v2030 = vsel %vm2028, %v827, 8
    %2031 = vset.pattern.permute.xlu0 0
    %2032 = vperm.xlu0 %2031, %v2029
    %v2033 = vpop.permute.xlu0 %2032
    %2034 = vset.pattern.permute.xlu0 0
    %2035 = vperm.xlu0 %2034, %v2030
    %v2036 = vpop.permute.xlu0 %2035
    %v2037 = vlaneseq
    %v2038 = vshrl.u32 %v2037, 7
    %v2039 = vsub.s32 %v522, %v2038
    %v2040 = vrot.slane %v2033, %v2039
    %v2041 = vlaneseq
    %v2042 = vshrl.u32 %v2041, 7
    %v2043 = vsub.s32 %v522, %v2042
    %v2044 = vrot.slane %v2036, %v2043
    %v2045 = vsel %vm762, %v2044, %v2040
    %v2046 = vsel %vm765, %v2045, 2147483647
    %v2047 = vand.u32 %v2046, 65535
    %v2048 = vshra.s32 %v2046, 16
    %v2049 = vcvt.s32.f32 %v2047
    %v2050 = vcvt.s32.f32 %v2048
    %2051 = vmin.xlane.f32.xlu0 %v2050
    %v2052 = vpop.xlane.xlu0 %2051
    %vm2053 = vcmp.eq.f32.partialorder %v2050, %v2052
    %v2054 = vsel %vm2053, %v2049, inf
    %2055 = vmin.xlane.f32.xlu0 %v2054
    %v2056 = vpop.xlane.xlu0 %2055
    %v2057 = vcvt.f32.s32 %v2056
    %v2058 = vcvt.f32.s32 %v2052
    %v2059 = vshll.u32 %v2058, 16
    %v2060 = vadd.s32 %v2059, %v2057
    %vm2061 = vcmp.eq.s32.totalorder %v522, %v2060
    %v2062 = vsel %vm2061, 1, 0
    %v2063 = vcvt.s32.f32 %v2062
    %vm2064 = vcmp.eq.s32.totalorder %v522, 3
    %v2065 = vsel %vm2064, %v2060, %v1666
    %v2067 = vlaneseq
    %v2068 = vshrl.u32 %v2067, 7
    %v2069 = vsub.s32 0, %v2068
    %v2070 = vrot.slane %v2063, %v2069
    %2072 = vbcast.lane.b32.xlu0 %v2070, 256
    %v2073 = vpop.permute.xlu0 %2072
    %v2074 = vlaneseq
    %v2075 = vshrl.u32 %v2074, 7
    %v2076 = vsub.s32 1, %v2075
    %v2077 = vrot.slane %v2063, %v2076
    %2079 = vbcast.lane.b32.xlu0 %v2077, 256
    %v2080 = vpop.permute.xlu0 %2079
    %v2083 = vmul.f32 %v2025, %v2073
    %v2084 = vmul.f32 %v2026, %v2080
    %2087 = vset.pattern.permute.xlu0 0
    %2088 = vperm.xlu0 %2087, %v2083
    %v2089 = vpop.permute.xlu0 %2088
    %2090 = vset.pattern.permute.xlu0 0
    %2091 = vperm.xlu0 %2090, %v2084
    %v2092 = vpop.permute.xlu0 %2091
    %v2093 = vlaneseq
    %v2094 = vshrl.u32 %v2093, 7
    %v2095 = vsub.s32 %v522, %v2094
    %v2096 = vrot.slane %v2089, %v2095
    %v2097 = vlaneseq
    %v2098 = vshrl.u32 %v2097, 7
    %v2099 = vsub.s32 %v522, %v2098
    %v2100 = vrot.slane %v2092, %v2099
    %v2101 = vsel %vm762, %v2100, %v2096
    %v2103 = vsel %vm765, %v2101, 0.0
    %2104 = vadd.xlane.f32.xlu0 %v2103
    %v2105 = vpop.xlane.xlu0 %2104
    %v2106 = vsel %vm2064, %v2105, %v1707
    %v2107 = vadd.f32 %v1708, %v2063
    %v2108 = vlaneseq
    %v2109 = vshrl.u32 %v2108, 7
    %v2110 = vsub.s32 0, %v2109
    %v2111 = vrot.slane %v2063, %v2110
    %2113 = vbcast.lane.b32.xlu0 %v2111, 256
    %v2114 = vpop.permute.xlu0 %2113
    %v2115 = vlaneseq
    %v2116 = vshrl.u32 %v2115, 7
    %v2117 = vsub.s32 1, %v2116
    %v2118 = vrot.slane %v2063, %v2117
    %2120 = vbcast.lane.b32.xlu0 %v2118, 256
    %v2121 = vpop.permute.xlu0 %2120
    %v2122 = vmul.f32 %v2114, %v472
    %v2123 = vmul.f32 %v2121, %v475
    %v2124 = vrot.slane %v2122, 4
    %v2125 = vadd.f32 %v2122, %v2124
    %v2126 = vrot.slane %v2125, 2
    %v2127 = vadd.f32 %v2125, %v2126
    %v2128 = vrot.slane %v2127, 1
    %v2129 = vadd.f32 %v2127, %v2128
    %v2130 = vrot.slane %v2123, 4
    %v2131 = vadd.f32 %v2123, %v2130
    %v2132 = vrot.slane %v2131, 2
    %v2133 = vadd.f32 %v2131, %v2132
    %v2134 = vrot.slane %v2133, 1
    %v2135 = vadd.f32 %v2133, %v2134
    %2136 = vmatprep.subr.bf16.mxu0 0
    %2137 = vmatpush1.bf16.msra.mxu0 %v196
    %2138 = vmatprep.subr.bf16.mxu0 0
    %2139 = vmatpush1.bf16.msra.mxu0 %v197
    %2140 = vmatprep.subr.bf16.mxu0 0
    %2141 = vmatpush1.bf16.msra.mxu0 0
    %2142 = vmatprep.subr.bf16.mxu0 0
    %2143 = vmatpush1.bf16.msra.mxu0 0
    %2144 = vmatprep.subr.bf16.mxu0 0
    %2145 = vmatpush1.bf16.msra.mxu0 0
    %2146 = vmatprep.subr.bf16.mxu0 0
    %2147 = vmatpush1.bf16.msra.mxu0 0
    %2148 = vmatprep.subr.bf16.mxu0 0
    %2149 = vmatpush1.bf16.msra.mxu0 0
    %2150 = vmatprep.subr.bf16.mxu0 0
    %2151 = vmatpush1.bf16.msra.mxu0 0
    %2152 = vmatprep.subr.bf16.mxu0 0
    %2153 = vmatpush1.bf16.msra.mxu0 0
    %2154 = vmatprep.subr.bf16.mxu0 0
    %2155 = vmatpush1.bf16.msra.mxu0 0
    %2156 = vmatprep.subr.bf16.mxu0 0
    %2157 = vmatpush1.bf16.msra.mxu0 0
    %2158 = vmatprep.subr.bf16.mxu0 0
    %2159 = vmatpush1.bf16.msra.mxu0 0
    %2160 = vmatprep.subr.bf16.mxu0 0
    %2161 = vmatpush1.bf16.msra.mxu0 0
    %2162 = vmatprep.subr.bf16.mxu0 0
    %2163 = vmatpush1.bf16.msra.mxu0 0
    %2164 = vmatprep.subr.bf16.mxu0 0
    %2165 = vmatpush1.bf16.msra.mxu0 0
    %2166 = vmatprep.subr.bf16.mxu0 0
    %2167 = vmatpush1.bf16.msra.mxu0 0
    %2168 = vmatprep.mubr.bf16.mxu0 0
    %2169 = vmatmul.mubr.bf16.gmra.mrb[0].mxu0 %v1845
    %v2170 = vpop.f32.mrb[0].mxu0
    %v2171 = vadd.f32 0.0, %v2170
    %v2172 = vpop.f32.mrb[0].mxu0
    %v2173 = vpop.f32.mrb[0].mxu0
    %v2174 = vpop.f32.mrb[0].mxu0
    %2175 = vdwg.mxu0
    %v2177 = vrot.slane %v2171, 1
    %v2180 = vadd.f32 %v2129, %v2171
    %v2181 = vadd.f32 %v2135, %v2177
    %v2182 = vadd.f32 %v2180, %v623
    %v2183 = vadd.f32 %v2181, %v623
    %v2184 = vxor.u32 %v2182, 2147483648
    %v2185 = vxor.u32 %v2183, 2147483648
    %v2186 = vmul.f32 %v2184, 1.442695
    %v2187 = vpow.pop %v2186
    %v2188 = vmul.f32 %v2185, 1.442695
    %v2189 = vpow.pop %v2188
    %v2190 = vadd.f32 %v2187, 1.0
    %v2191 = vadd.f32 %v2189, 1.0
    %v2192 = vrcp.pop %v2190
    %v2193 = vmul.f32 1.0, %v2192
    %v2194 = vrcp.pop %v2191
    %v2195 = vmul.f32 1.0, %v2194
    %v2196 = vtanh.pop %v2182
    %v2197 = vtanh.pop %v2183
    %v2198 = vmul.f32 %v2193, %v1819
    %v2199 = vmul.f32 %v2195, %v1820
    %2202 = vrot.lane.b32.xlu0 %v2196, 64
    %v2203 = vpop.permute.xlu0 %2202
    %2204 = vrot.lane.b32.xlu0 %v2197, 64
    %v2205 = vpop.permute.xlu0 %2204
    %v2208 = vmul.f32 %v2193, %v2203
    %v2209 = vmul.f32 %v2195, %v2205
    %2212 = vrot.lane.b32.xlu0 %v2208, 32
    %v2213 = vpop.permute.xlu0 %2212
    %2214 = vrot.lane.b32.xlu0 %v2209, 32
    %v2215 = vpop.permute.xlu0 %2214
    %v2218 = vadd.f32 %v2198, %v2213
    %v2219 = vadd.f32 %v2199, %v2215
    %v2220 = vtanh.pop %v2218
    %v2221 = vtanh.pop %v2219
    %2224 = vrot.lane.b32.xlu0 %v2220, 64
    %v2225 = vpop.permute.xlu0 %2224
    %2226 = vrot.lane.b32.xlu0 %v2221, 64
    %v2227 = vpop.permute.xlu0 %2226
    %v2230 = vmul.f32 %v2193, %v2225
    %v2231 = vmul.f32 %v2195, %v2227
    %v2232 = vpack.c.bf16 %v2230, %v2230
    %v2233 = vpack.c.bf16 %v2231, %v2231
    %v2236 = vunpack.c.l.b16 %v2232
    %v2237 = vunpack.c.l.b16 %v2233
    %v2238 = vrot.slane %v2237, 7
    %v2239 = vsel %vm762, %v2238, %v2236
    %v2240 = vpack.c.b16 %v2239, %v2239
    %2241 = vrot.lane.b32.xlu0 %v2240, 32
    %v2242 = vpop.permute.xlu0 %2241
    %v2244 = vsel %vm272, %v2242, 0
    %2246 = vmatprep.subr.bf16.mxu0 0
    %2247 = vmatpush1.bf16.msra.mxu0 %v208
    %2248 = vmatprep.subr.bf16.mxu0 0
    %2249 = vmatpush1.bf16.msra.mxu0 %v209
    %2250 = vmatprep.subr.bf16.mxu0 0
    %2251 = vmatpush1.bf16.msra.mxu0 0
    %2252 = vmatprep.subr.bf16.mxu0 0
    %2253 = vmatpush1.bf16.msra.mxu0 0
    %2254 = vmatprep.subr.bf16.mxu0 0
    %2255 = vmatpush1.bf16.msra.mxu0 0
    %2256 = vmatprep.subr.bf16.mxu0 0
    %2257 = vmatpush1.bf16.msra.mxu0 0
    %2258 = vmatprep.subr.bf16.mxu0 0
    %2259 = vmatpush1.bf16.msra.mxu0 0
    %2260 = vmatprep.subr.bf16.mxu0 0
    %2261 = vmatpush1.bf16.msra.mxu0 0
    %2262 = vmatprep.subr.bf16.mxu0 0
    %2263 = vmatpush1.bf16.msra.mxu0 0
    %2264 = vmatprep.subr.bf16.mxu0 0
    %2265 = vmatpush1.bf16.msra.mxu0 0
    %2266 = vmatprep.subr.bf16.mxu0 0
    %2267 = vmatpush1.bf16.msra.mxu0 0
    %2268 = vmatprep.subr.bf16.mxu0 0
    %2269 = vmatpush1.bf16.msra.mxu0 0
    %2270 = vmatprep.subr.bf16.mxu0 0
    %2271 = vmatpush1.bf16.msra.mxu0 0
    %2272 = vmatprep.subr.bf16.mxu0 0
    %2273 = vmatpush1.bf16.msra.mxu0 0
    %2274 = vmatprep.subr.bf16.mxu0 0
    %2275 = vmatpush1.bf16.msra.mxu0 0
    %2276 = vmatprep.subr.bf16.mxu0 0
    %2277 = vmatpush1.bf16.msra.mxu0 0
    %2278 = vmatprep.mubr.bf16.mxu0 0
    %2279 = vmatmul.mubr.bf16.gmra.mrb[0].mxu0 %v2244
    %v2280 = vpop.f32.mrb[0].mxu0
    %v2281 = vadd.f32 0.0, %v2280
    %v2282 = vpop.f32.mrb[0].mxu0
    %v2283 = vpop.f32.mrb[0].mxu0
    %v2284 = vpop.f32.mrb[0].mxu0
    %2285 = vdwg.mxu0
    %v2288 = vunpack.c.l.s4 1966171168
    %v2289 = vunpack.c.0.s8 %v2288
    %v2290 = vlaneseq
    %v2291 = vshrl.u32 %v2290, 7
    %v2292 = vsub.s32 %v2289, %v2291
    %v2293 = vrot.slane %v2281, %v2292
    %v2294 = vcombine.high %v2293, %v2293
    %v2296 = vunpack.c.l.s4 1966171168
    %v2297 = vunpack.c.0.s8 %v2296
    %v2298 = vlaneseq
    %v2299 = vshrl.u32 %v2298, 7
    %v2300 = vsub.s32 %v2297, %v2299
    %v2301 = vrot.slane %v2293, %v2300
    %v2303 = vunpack.c.l.s4 1966171168
    %v2304 = vunpack.c.0.s8 %v2303
    %v2305 = vlaneseq
    %v2306 = vshrl.u32 %v2305, 7
    %v2307 = vsub.s32 %v2304, %v2306
    %v2308 = vrot.slane %v2294, %v2307
    %v2309 = vlaneseq
    %v2310 = vshrl.u32 %v2309, 7
    %v2311 = vsub.s32 0, %v2310
    %v2312 = vrot.slane %v2301, %v2311
    %v2313 = vlaneseq
    %v2314 = vshrl.u32 %v2313, 7
    %v2315 = vsub.s32 0, %v2314
    %v2316 = vrot.slane %v2308, %v2315
    %v2319 = vadd.f32 %v513, %v2312
    %v2320 = vadd.f32 %v516, %v2316
    %v2321 = vtanh.pop %v2319
    %v2322 = vtanh.pop %v2320
    %v2323 = vmul.f32 %v2321, %v742
    %v2324 = vmul.f32 %v2322, %v742
    %v2325 = vsel %vm272, %v2323, 0.0
    %2326 = vadd.xlane.f32.xlu0 %v2325
    %v2327 = vpop.xlane.xlu0 %2326
    %v2328 = vsel %vm272, %v2324, 0.0
    %2329 = vadd.xlane.f32.xlu0 %v2328
    %v2330 = vpop.xlane.xlu0 %2329
    %v2331 = vmul.f32 %v2107, 1e+09
    %v2333 = vlaneseq
    %v2334 = vshrl.u32 %v2333, 7
    %v2335 = vsub.s32 0, %v2334
    %v2336 = vrot.slane %v2331, %v2335
    %2338 = vbcast.lane.b32.xlu0 %v2336, 256
    %v2339 = vpop.permute.xlu0 %2338
    %v2340 = vlaneseq
    %v2341 = vshrl.u32 %v2340, 7
    %v2342 = vsub.s32 1, %v2341
    %v2343 = vrot.slane %v2331, %v2342
    %2345 = vbcast.lane.b32.xlu0 %v2343, 256
    %v2346 = vpop.permute.xlu0 %2345
    %v2349 = vsub.f32 %v2327, %v2339
    %v2350 = vsub.f32 %v2330, %v2346
    %2353 = vset.pattern.permute.xlu0 0
    %2354 = vperm.xlu0 %2353, %v2349
    %v2355 = vpop.permute.xlu0 %2354
    %2356 = vset.pattern.permute.xlu0 0
    %2357 = vperm.xlu0 %2356, %v2350
    %v2358 = vpop.permute.xlu0 %2357
    %v2359 = vlaneseq
    %v2360 = vshrl.u32 %v2359, 7
    %v2361 = vsub.s32 %v522, %v2360
    %v2362 = vrot.slane %v2355, %v2361
    %v2363 = vlaneseq
    %v2364 = vshrl.u32 %v2363, 7
    %v2365 = vsub.s32 %v522, %v2364
    %v2366 = vrot.slane %v2358, %v2365
    %v2367 = vsel %vm762, %v2366, %v2362
    %v2369 = vsel %vm765, %v2367, -inf
    %2370 = vmax.xlane.f32.xlu0 %v2369
    %v2371 = vpop.xlane.xlu0 %2370
    %v2373 = vlaneseq
    %v2374 = vshrl.u32 %v2373, 7
    %v2375 = vsub.s32 0, %v2374
    %v2376 = vrot.slane %v2371, %v2375
    %v2377 = vlaneseq
    %v2378 = vshrl.u32 %v2377, 7
    %v2379 = vsub.s32 1, %v2378
    %v2380 = vrot.slane %v2371, %v2379
    %v2383 = vsub.f32 %v2349, %v2376
    %v2384 = vsub.f32 %v2350, %v2380
    %v2385 = vmul.f32 %v2383, 1.442695
    %v2386 = vpow.pop %v2385
    %v2387 = vmul.f32 %v2384, 1.442695
    %v2388 = vpow.pop %v2387
    %2391 = vset.pattern.permute.xlu0 0
    %2392 = vperm.xlu0 %2391, %v2386
    %v2393 = vpop.permute.xlu0 %2392
    %2394 = vset.pattern.permute.xlu0 0
    %2395 = vperm.xlu0 %2394, %v2388
    %v2396 = vpop.permute.xlu0 %2395
    %v2397 = vlaneseq
    %v2398 = vshrl.u32 %v2397, 7
    %v2399 = vsub.s32 %v522, %v2398
    %v2400 = vrot.slane %v2393, %v2399
    %v2401 = vlaneseq
    %v2402 = vshrl.u32 %v2401, 7
    %v2403 = vsub.s32 %v522, %v2402
    %v2404 = vrot.slane %v2396, %v2403
    %v2405 = vsel %vm762, %v2404, %v2400
    %v2407 = vsel %vm765, %v2405, 0.0
    %2408 = vadd.xlane.f32.xlu0 %v2407
    %v2409 = vpop.xlane.xlu0 %2408
    %v2410 = vlog2.pop %v2409
    %v2411 = vmul.f32 %v2410, 0.6931472
    %v2412 = vadd.f32 %v2371, %v2411
    %v2414 = vlaneseq
    %v2415 = vshrl.u32 %v2414, 7
    %v2416 = vsub.s32 0, %v2415
    %v2417 = vrot.slane %v2412, %v2416
    %v2418 = vlaneseq
    %v2419 = vshrl.u32 %v2418, 7
    %v2420 = vsub.s32 1, %v2419
    %v2421 = vrot.slane %v2412, %v2420
    %v2424 = vsub.f32 %v2349, %v2417
    %v2425 = vsub.f32 %v2350, %v2421
    %vm2426 = vcmp.eq.f32.partialorder %v2349, %v2376
    %vm2427 = vcmp.eq.f32.partialorder %v2350, %v2380
    %v2428 = vsel %vm2426, %v827, 8
    %v2429 = vsel %vm2427, %v827, 8
    %2430 = vset.pattern.permute.xlu0 0
    %2431 = vperm.xlu0 %2430, %v2428
    %v2432 = vpop.permute.xlu0 %2431
    %2433 = vset.pattern.permute.xlu0 0
    %2434 = vperm.xlu0 %2433, %v2429
    %v2435 = vpop.permute.xlu0 %2434
    %v2436 = vlaneseq
    %v2437 = vshrl.u32 %v2436, 7
    %v2438 = vsub.s32 %v522, %v2437
    %v2439 = vrot.slane %v2432, %v2438
    %v2440 = vlaneseq
    %v2441 = vshrl.u32 %v2440, 7
    %v2442 = vsub.s32 %v522, %v2441
    %v2443 = vrot.slane %v2435, %v2442
    %v2444 = vsel %vm762, %v2443, %v2439
    %v2445 = vsel %vm765, %v2444, 2147483647
    %v2446 = vand.u32 %v2445, 65535
    %v2447 = vshra.s32 %v2445, 16
    %v2448 = vcvt.s32.f32 %v2446
    %v2449 = vcvt.s32.f32 %v2447
    %2450 = vmin.xlane.f32.xlu0 %v2449
    %v2451 = vpop.xlane.xlu0 %2450
    %vm2452 = vcmp.eq.f32.partialorder %v2449, %v2451
    %v2453 = vsel %vm2452, %v2448, inf
    %2454 = vmin.xlane.f32.xlu0 %v2453
    %v2455 = vpop.xlane.xlu0 %2454
    %v2456 = vcvt.f32.s32 %v2455
    %v2457 = vcvt.f32.s32 %v2451
    %v2458 = vshll.u32 %v2457, 16
    %v2459 = vadd.s32 %v2458, %v2456
    %vm2460 = vcmp.eq.s32.totalorder %v522, %v2459
    %v2461 = vsel %vm2460, 1, 0
    %v2462 = vcvt.s32.f32 %v2461
    %vm2463 = vcmp.eq.s32.totalorder %v522, 4
    %v2464 = vsel %vm2463, %v2459, %v2065
    %v2466 = vlaneseq
    %v2467 = vshrl.u32 %v2466, 7
    %v2468 = vsub.s32 0, %v2467
    %v2469 = vrot.slane %v2462, %v2468
    %2471 = vbcast.lane.b32.xlu0 %v2469, 256
    %v2472 = vpop.permute.xlu0 %2471
    %v2473 = vlaneseq
    %v2474 = vshrl.u32 %v2473, 7
    %v2475 = vsub.s32 1, %v2474
    %v2476 = vrot.slane %v2462, %v2475
    %2478 = vbcast.lane.b32.xlu0 %v2476, 256
    %v2479 = vpop.permute.xlu0 %2478
    %v2482 = vmul.f32 %v2424, %v2472
    %v2483 = vmul.f32 %v2425, %v2479
    %2486 = vset.pattern.permute.xlu0 0
    %2487 = vperm.xlu0 %2486, %v2482
    %v2488 = vpop.permute.xlu0 %2487
    %2489 = vset.pattern.permute.xlu0 0
    %2490 = vperm.xlu0 %2489, %v2483
    %v2491 = vpop.permute.xlu0 %2490
    %v2492 = vlaneseq
    %v2493 = vshrl.u32 %v2492, 7
    %v2494 = vsub.s32 %v522, %v2493
    %v2495 = vrot.slane %v2488, %v2494
    %v2496 = vlaneseq
    %v2497 = vshrl.u32 %v2496, 7
    %v2498 = vsub.s32 %v522, %v2497
    %v2499 = vrot.slane %v2491, %v2498
    %v2500 = vsel %vm762, %v2499, %v2495
    %v2502 = vsel %vm765, %v2500, 0.0
    %2503 = vadd.xlane.f32.xlu0 %v2502
    %v2504 = vpop.xlane.xlu0 %2503
    %v2505 = vsel %vm2463, %v2504, %v2106
    %v2506 = vadd.f32 %v2107, %v2462
    %v2507 = vlaneseq
    %v2508 = vshrl.u32 %v2507, 7
    %v2509 = vsub.s32 0, %v2508
    %v2510 = vrot.slane %v2462, %v2509
    %2512 = vbcast.lane.b32.xlu0 %v2510, 256
    %v2513 = vpop.permute.xlu0 %2512
    %v2514 = vlaneseq
    %v2515 = vshrl.u32 %v2514, 7
    %v2516 = vsub.s32 1, %v2515
    %v2517 = vrot.slane %v2462, %v2516
    %2519 = vbcast.lane.b32.xlu0 %v2517, 256
    %v2520 = vpop.permute.xlu0 %2519
    %v2521 = vmul.f32 %v2513, %v472
    %v2522 = vmul.f32 %v2520, %v475
    %v2523 = vrot.slane %v2521, 4
    %v2524 = vadd.f32 %v2521, %v2523
    %v2525 = vrot.slane %v2524, 2
    %v2526 = vadd.f32 %v2524, %v2525
    %v2527 = vrot.slane %v2526, 1
    %v2528 = vadd.f32 %v2526, %v2527
    %v2529 = vrot.slane %v2522, 4
    %v2530 = vadd.f32 %v2522, %v2529
    %v2531 = vrot.slane %v2530, 2
    %v2532 = vadd.f32 %v2530, %v2531
    %v2533 = vrot.slane %v2532, 1
    %v2534 = vadd.f32 %v2532, %v2533
    %2535 = vmatprep.subr.bf16.mxu0 0
    %2536 = vmatpush1.bf16.msra.mxu0 %v196
    %2537 = vmatprep.subr.bf16.mxu0 0
    %2538 = vmatpush1.bf16.msra.mxu0 %v197
    %2539 = vmatprep.subr.bf16.mxu0 0
    %2540 = vmatpush1.bf16.msra.mxu0 0
    %2541 = vmatprep.subr.bf16.mxu0 0
    %2542 = vmatpush1.bf16.msra.mxu0 0
    %2543 = vmatprep.subr.bf16.mxu0 0
    %2544 = vmatpush1.bf16.msra.mxu0 0
    %2545 = vmatprep.subr.bf16.mxu0 0
    %2546 = vmatpush1.bf16.msra.mxu0 0
    %2547 = vmatprep.subr.bf16.mxu0 0
    %2548 = vmatpush1.bf16.msra.mxu0 0
    %2549 = vmatprep.subr.bf16.mxu0 0
    %2550 = vmatpush1.bf16.msra.mxu0 0
    %2551 = vmatprep.subr.bf16.mxu0 0
    %2552 = vmatpush1.bf16.msra.mxu0 0
    %2553 = vmatprep.subr.bf16.mxu0 0
    %2554 = vmatpush1.bf16.msra.mxu0 0
    %2555 = vmatprep.subr.bf16.mxu0 0
    %2556 = vmatpush1.bf16.msra.mxu0 0
    %2557 = vmatprep.subr.bf16.mxu0 0
    %2558 = vmatpush1.bf16.msra.mxu0 0
    %2559 = vmatprep.subr.bf16.mxu0 0
    %2560 = vmatpush1.bf16.msra.mxu0 0
    %2561 = vmatprep.subr.bf16.mxu0 0
    %2562 = vmatpush1.bf16.msra.mxu0 0
    %2563 = vmatprep.subr.bf16.mxu0 0
    %2564 = vmatpush1.bf16.msra.mxu0 0
    %2565 = vmatprep.subr.bf16.mxu0 0
    %2566 = vmatpush1.bf16.msra.mxu0 0
    %2567 = vmatprep.mubr.bf16.mxu0 0
    %2568 = vmatmul.mubr.bf16.gmra.mrb[0].mxu0 %v2244
    %v2569 = vpop.f32.mrb[0].mxu0
    %v2570 = vadd.f32 0.0, %v2569
    %v2571 = vpop.f32.mrb[0].mxu0
    %v2572 = vpop.f32.mrb[0].mxu0
    %v2573 = vpop.f32.mrb[0].mxu0
    %2574 = vdwg.mxu0
    %v2576 = vrot.slane %v2570, 1
    %v2579 = vadd.f32 %v2528, %v2570
    %v2580 = vadd.f32 %v2534, %v2576
    %v2581 = vadd.f32 %v2579, %v623
    %v2582 = vadd.f32 %v2580, %v623
    %v2583 = vxor.u32 %v2581, 2147483648
    %v2584 = vxor.u32 %v2582, 2147483648
    %v2585 = vmul.f32 %v2583, 1.442695
    %v2586 = vpow.pop %v2585
    %v2587 = vmul.f32 %v2584, 1.442695
    %v2588 = vpow.pop %v2587
    %v2589 = vadd.f32 %v2586, 1.0
    %v2590 = vadd.f32 %v2588, 1.0
    %v2591 = vrcp.pop %v2589
    %v2592 = vmul.f32 1.0, %v2591
    %v2593 = vrcp.pop %v2590
    %v2594 = vmul.f32 1.0, %v2593
    %v2595 = vtanh.pop %v2581
    %v2596 = vtanh.pop %v2582
    %v2597 = vmul.f32 %v2592, %v2218
    %v2598 = vmul.f32 %v2594, %v2219
    %2601 = vrot.lane.b32.xlu0 %v2595, 64
    %v2602 = vpop.permute.xlu0 %2601
    %2603 = vrot.lane.b32.xlu0 %v2596, 64
    %v2604 = vpop.permute.xlu0 %2603
    %v2607 = vmul.f32 %v2592, %v2602
    %v2608 = vmul.f32 %v2594, %v2604
    %2611 = vrot.lane.b32.xlu0 %v2607, 32
    %v2612 = vpop.permute.xlu0 %2611
    %2613 = vrot.lane.b32.xlu0 %v2608, 32
    %v2614 = vpop.permute.xlu0 %2613
    %v2617 = vadd.f32 %v2597, %v2612
    %v2618 = vadd.f32 %v2598, %v2614
    %v2619 = vtanh.pop %v2617
    %v2620 = vtanh.pop %v2618
    %2623 = vrot.lane.b32.xlu0 %v2619, 64
    %v2624 = vpop.permute.xlu0 %2623
    %2625 = vrot.lane.b32.xlu0 %v2620, 64
    %v2626 = vpop.permute.xlu0 %2625
    %v2629 = vmul.f32 %v2592, %v2624
    %v2630 = vmul.f32 %v2594, %v2626
    %v2631 = vpack.c.bf16 %v2629, %v2629
    %v2632 = vpack.c.bf16 %v2630, %v2630
    %v2635 = vunpack.c.l.b16 %v2631
    %v2636 = vunpack.c.l.b16 %v2632
    %v2637 = vrot.slane %v2636, 7
    %v2638 = vsel %vm762, %v2637, %v2635
    %v2639 = vpack.c.b16 %v2638, %v2638
    %2640 = vrot.lane.b32.xlu0 %v2639, 32
    %v2641 = vpop.permute.xlu0 %2640
    %v2643 = vsel %vm272, %v2641, 0
    %2645 = vmatprep.subr.bf16.mxu0 0
    %2646 = vmatpush1.bf16.msra.mxu0 %v208
    %2647 = vmatprep.subr.bf16.mxu0 0
    %2648 = vmatpush1.bf16.msra.mxu0 %v209
    %2649 = vmatprep.subr.bf16.mxu0 0
    %2650 = vmatpush1.bf16.msra.mxu0 0
    %2651 = vmatprep.subr.bf16.mxu0 0
    %2652 = vmatpush1.bf16.msra.mxu0 0
    %2653 = vmatprep.subr.bf16.mxu0 0
    %2654 = vmatpush1.bf16.msra.mxu0 0
    %2655 = vmatprep.subr.bf16.mxu0 0
    %2656 = vmatpush1.bf16.msra.mxu0 0
    %2657 = vmatprep.subr.bf16.mxu0 0
    %2658 = vmatpush1.bf16.msra.mxu0 0
    %2659 = vmatprep.subr.bf16.mxu0 0
    %2660 = vmatpush1.bf16.msra.mxu0 0
    %2661 = vmatprep.subr.bf16.mxu0 0
    %2662 = vmatpush1.bf16.msra.mxu0 0
    %2663 = vmatprep.subr.bf16.mxu0 0
    %2664 = vmatpush1.bf16.msra.mxu0 0
    %2665 = vmatprep.subr.bf16.mxu0 0
    %2666 = vmatpush1.bf16.msra.mxu0 0
    %2667 = vmatprep.subr.bf16.mxu0 0
    %2668 = vmatpush1.bf16.msra.mxu0 0
    %2669 = vmatprep.subr.bf16.mxu0 0
    %2670 = vmatpush1.bf16.msra.mxu0 0
    %2671 = vmatprep.subr.bf16.mxu0 0
    %2672 = vmatpush1.bf16.msra.mxu0 0
    %2673 = vmatprep.subr.bf16.mxu0 0
    %2674 = vmatpush1.bf16.msra.mxu0 0
    %2675 = vmatprep.subr.bf16.mxu0 0
    %2676 = vmatpush1.bf16.msra.mxu0 0
    %2677 = vmatprep.mubr.bf16.mxu0 0
    %2678 = vmatmul.mubr.bf16.gmra.mrb[0].mxu0 %v2643
    %v2679 = vpop.f32.mrb[0].mxu0
    %v2680 = vadd.f32 0.0, %v2679
    %v2681 = vpop.f32.mrb[0].mxu0
    %v2682 = vpop.f32.mrb[0].mxu0
    %v2683 = vpop.f32.mrb[0].mxu0
    %2684 = vdwg.mxu0
    %v2687 = vunpack.c.l.s4 1966171168
    %v2688 = vunpack.c.0.s8 %v2687
    %v2689 = vlaneseq
    %v2690 = vshrl.u32 %v2689, 7
    %v2691 = vsub.s32 %v2688, %v2690
    %v2692 = vrot.slane %v2680, %v2691
    %v2693 = vcombine.high %v2692, %v2692
    %v2695 = vunpack.c.l.s4 1966171168
    %v2696 = vunpack.c.0.s8 %v2695
    %v2697 = vlaneseq
    %v2698 = vshrl.u32 %v2697, 7
    %v2699 = vsub.s32 %v2696, %v2698
    %v2700 = vrot.slane %v2692, %v2699
    %v2702 = vunpack.c.l.s4 1966171168
    %v2703 = vunpack.c.0.s8 %v2702
    %v2704 = vlaneseq
    %v2705 = vshrl.u32 %v2704, 7
    %v2706 = vsub.s32 %v2703, %v2705
    %v2707 = vrot.slane %v2693, %v2706
    %v2708 = vlaneseq
    %v2709 = vshrl.u32 %v2708, 7
    %v2710 = vsub.s32 0, %v2709
    %v2711 = vrot.slane %v2700, %v2710
    %v2712 = vlaneseq
    %v2713 = vshrl.u32 %v2712, 7
    %v2714 = vsub.s32 0, %v2713
    %v2715 = vrot.slane %v2707, %v2714
    %v2718 = vadd.f32 %v513, %v2711
    %v2719 = vadd.f32 %v516, %v2715
    %v2720 = vtanh.pop %v2718
    %v2721 = vtanh.pop %v2719
    %v2722 = vmul.f32 %v2720, %v742
    %v2723 = vmul.f32 %v2721, %v742
    %v2724 = vsel %vm272, %v2722, 0.0
    %2725 = vadd.xlane.f32.xlu0 %v2724
    %v2726 = vpop.xlane.xlu0 %2725
    %v2727 = vsel %vm272, %v2723, 0.0
    %2728 = vadd.xlane.f32.xlu0 %v2727
    %v2729 = vpop.xlane.xlu0 %2728
    %v2730 = vmul.f32 %v2506, 1e+09
    %v2732 = vlaneseq
    %v2733 = vshrl.u32 %v2732, 7
    %v2734 = vsub.s32 0, %v2733
    %v2735 = vrot.slane %v2730, %v2734
    %2737 = vbcast.lane.b32.xlu0 %v2735, 256
    %v2738 = vpop.permute.xlu0 %2737
    %v2739 = vlaneseq
    %v2740 = vshrl.u32 %v2739, 7
    %v2741 = vsub.s32 1, %v2740
    %v2742 = vrot.slane %v2730, %v2741
    %2744 = vbcast.lane.b32.xlu0 %v2742, 256
    %v2745 = vpop.permute.xlu0 %2744
    %v2748 = vsub.f32 %v2726, %v2738
    %v2749 = vsub.f32 %v2729, %v2745
    %2752 = vset.pattern.permute.xlu0 0
    %2753 = vperm.xlu0 %2752, %v2748
    %v2754 = vpop.permute.xlu0 %2753
    %2755 = vset.pattern.permute.xlu0 0
    %2756 = vperm.xlu0 %2755, %v2749
    %v2757 = vpop.permute.xlu0 %2756
    %v2758 = vlaneseq
    %v2759 = vshrl.u32 %v2758, 7
    %v2760 = vsub.s32 %v522, %v2759
    %v2761 = vrot.slane %v2754, %v2760
    %v2762 = vlaneseq
    %v2763 = vshrl.u32 %v2762, 7
    %v2764 = vsub.s32 %v522, %v2763
    %v2765 = vrot.slane %v2757, %v2764
    %v2766 = vsel %vm762, %v2765, %v2761
    %v2768 = vsel %vm765, %v2766, -inf
    %2769 = vmax.xlane.f32.xlu0 %v2768
    %v2770 = vpop.xlane.xlu0 %2769
    %v2772 = vlaneseq
    %v2773 = vshrl.u32 %v2772, 7
    %v2774 = vsub.s32 0, %v2773
    %v2775 = vrot.slane %v2770, %v2774
    %v2776 = vlaneseq
    %v2777 = vshrl.u32 %v2776, 7
    %v2778 = vsub.s32 1, %v2777
    %v2779 = vrot.slane %v2770, %v2778
    %v2782 = vsub.f32 %v2748, %v2775
    %v2783 = vsub.f32 %v2749, %v2779
    %v2784 = vmul.f32 %v2782, 1.442695
    %v2785 = vpow.pop %v2784
    %v2786 = vmul.f32 %v2783, 1.442695
    %v2787 = vpow.pop %v2786
    %2790 = vset.pattern.permute.xlu0 0
    %2791 = vperm.xlu0 %2790, %v2785
    %v2792 = vpop.permute.xlu0 %2791
    %2793 = vset.pattern.permute.xlu0 0
    %2794 = vperm.xlu0 %2793, %v2787
    %v2795 = vpop.permute.xlu0 %2794
    %v2796 = vlaneseq
    %v2797 = vshrl.u32 %v2796, 7
    %v2798 = vsub.s32 %v522, %v2797
    %v2799 = vrot.slane %v2792, %v2798
    %v2800 = vlaneseq
    %v2801 = vshrl.u32 %v2800, 7
    %v2802 = vsub.s32 %v522, %v2801
    %v2803 = vrot.slane %v2795, %v2802
    %v2804 = vsel %vm762, %v2803, %v2799
    %v2806 = vsel %vm765, %v2804, 0.0
    %2807 = vadd.xlane.f32.xlu0 %v2806
    %v2808 = vpop.xlane.xlu0 %2807
    %v2809 = vlog2.pop %v2808
    %v2810 = vmul.f32 %v2809, 0.6931472
    %v2811 = vadd.f32 %v2770, %v2810
    %v2813 = vlaneseq
    %v2814 = vshrl.u32 %v2813, 7
    %v2815 = vsub.s32 0, %v2814
    %v2816 = vrot.slane %v2811, %v2815
    %v2817 = vlaneseq
    %v2818 = vshrl.u32 %v2817, 7
    %v2819 = vsub.s32 1, %v2818
    %v2820 = vrot.slane %v2811, %v2819
    %v2823 = vsub.f32 %v2748, %v2816
    %v2824 = vsub.f32 %v2749, %v2820
    %vm2825 = vcmp.eq.f32.partialorder %v2748, %v2775
    %vm2826 = vcmp.eq.f32.partialorder %v2749, %v2779
    %v2827 = vsel %vm2825, %v827, 8
    %v2828 = vsel %vm2826, %v827, 8
    %2829 = vset.pattern.permute.xlu0 0
    %2830 = vperm.xlu0 %2829, %v2827
    %v2831 = vpop.permute.xlu0 %2830
    %2832 = vset.pattern.permute.xlu0 0
    %2833 = vperm.xlu0 %2832, %v2828
    %v2834 = vpop.permute.xlu0 %2833
    %v2835 = vlaneseq
    %v2836 = vshrl.u32 %v2835, 7
    %v2837 = vsub.s32 %v522, %v2836
    %v2838 = vrot.slane %v2831, %v2837
    %v2839 = vlaneseq
    %v2840 = vshrl.u32 %v2839, 7
    %v2841 = vsub.s32 %v522, %v2840
    %v2842 = vrot.slane %v2834, %v2841
    %v2843 = vsel %vm762, %v2842, %v2838
    %v2844 = vsel %vm765, %v2843, 2147483647
    %v2845 = vand.u32 %v2844, 65535
    %v2846 = vshra.s32 %v2844, 16
    %v2847 = vcvt.s32.f32 %v2845
    %v2848 = vcvt.s32.f32 %v2846
    %2849 = vmin.xlane.f32.xlu0 %v2848
    %v2850 = vpop.xlane.xlu0 %2849
    %vm2851 = vcmp.eq.f32.partialorder %v2848, %v2850
    %v2852 = vsel %vm2851, %v2847, inf
    %2853 = vmin.xlane.f32.xlu0 %v2852
    %v2854 = vpop.xlane.xlu0 %2853
    %v2855 = vcvt.f32.s32 %v2854
    %v2856 = vcvt.f32.s32 %v2850
    %v2857 = vshll.u32 %v2856, 16
    %v2858 = vadd.s32 %v2857, %v2855
    %vm2859 = vcmp.eq.s32.totalorder %v522, %v2858
    %v2860 = vsel %vm2859, 1, 0
    %v2861 = vcvt.s32.f32 %v2860
    %vm2862 = vcmp.eq.s32.totalorder %v522, 5
    %v2863 = vsel %vm2862, %v2858, %v2464
    %v2865 = vlaneseq
    %v2866 = vshrl.u32 %v2865, 7
    %v2867 = vsub.s32 0, %v2866
    %v2868 = vrot.slane %v2861, %v2867
    %2870 = vbcast.lane.b32.xlu0 %v2868, 256
    %v2871 = vpop.permute.xlu0 %2870
    %v2872 = vlaneseq
    %v2873 = vshrl.u32 %v2872, 7
    %v2874 = vsub.s32 1, %v2873
    %v2875 = vrot.slane %v2861, %v2874
    %2877 = vbcast.lane.b32.xlu0 %v2875, 256
    %v2878 = vpop.permute.xlu0 %2877
    %v2881 = vmul.f32 %v2823, %v2871
    %v2882 = vmul.f32 %v2824, %v2878
    %2885 = vset.pattern.permute.xlu0 0
    %2886 = vperm.xlu0 %2885, %v2881
    %v2887 = vpop.permute.xlu0 %2886
    %2888 = vset.pattern.permute.xlu0 0
    %2889 = vperm.xlu0 %2888, %v2882
    %v2890 = vpop.permute.xlu0 %2889
    %v2891 = vlaneseq
    %v2892 = vshrl.u32 %v2891, 7
    %v2893 = vsub.s32 %v522, %v2892
    %v2894 = vrot.slane %v2887, %v2893
    %v2895 = vlaneseq
    %v2896 = vshrl.u32 %v2895, 7
    %v2897 = vsub.s32 %v522, %v2896
    %v2898 = vrot.slane %v2890, %v2897
    %v2899 = vsel %vm762, %v2898, %v2894
    %v2901 = vsel %vm765, %v2899, 0.0
    %2902 = vadd.xlane.f32.xlu0 %v2901
    %v2903 = vpop.xlane.xlu0 %2902
    %v2904 = vsel %vm2862, %v2903, %v2505
    %v2905 = vadd.f32 %v2506, %v2861
    %v2906 = vlaneseq
    %v2907 = vshrl.u32 %v2906, 7
    %v2908 = vsub.s32 0, %v2907
    %v2909 = vrot.slane %v2861, %v2908
    %2911 = vbcast.lane.b32.xlu0 %v2909, 256
    %v2912 = vpop.permute.xlu0 %2911
    %v2913 = vlaneseq
    %v2914 = vshrl.u32 %v2913, 7
    %v2915 = vsub.s32 1, %v2914
    %v2916 = vrot.slane %v2861, %v2915
    %2918 = vbcast.lane.b32.xlu0 %v2916, 256
    %v2919 = vpop.permute.xlu0 %2918
    %v2920 = vmul.f32 %v2912, %v472
    %v2921 = vmul.f32 %v2919, %v475
    %v2922 = vrot.slane %v2920, 4
    %v2923 = vadd.f32 %v2920, %v2922
    %v2924 = vrot.slane %v2923, 2
    %v2925 = vadd.f32 %v2923, %v2924
    %v2926 = vrot.slane %v2925, 1
    %v2927 = vadd.f32 %v2925, %v2926
    %v2928 = vrot.slane %v2921, 4
    %v2929 = vadd.f32 %v2921, %v2928
    %v2930 = vrot.slane %v2929, 2
    %v2931 = vadd.f32 %v2929, %v2930
    %v2932 = vrot.slane %v2931, 1
    %v2933 = vadd.f32 %v2931, %v2932
    %2934 = vmatprep.subr.bf16.mxu0 0
    %2935 = vmatpush1.bf16.msra.mxu0 %v196
    %2936 = vmatprep.subr.bf16.mxu0 0
    %2937 = vmatpush1.bf16.msra.mxu0 %v197
    %2938 = vmatprep.subr.bf16.mxu0 0
    %2939 = vmatpush1.bf16.msra.mxu0 0
    %2940 = vmatprep.subr.bf16.mxu0 0
    %2941 = vmatpush1.bf16.msra.mxu0 0
    %2942 = vmatprep.subr.bf16.mxu0 0
    %2943 = vmatpush1.bf16.msra.mxu0 0
    %2944 = vmatprep.subr.bf16.mxu0 0
    %2945 = vmatpush1.bf16.msra.mxu0 0
    %2946 = vmatprep.subr.bf16.mxu0 0
    %2947 = vmatpush1.bf16.msra.mxu0 0
    %2948 = vmatprep.subr.bf16.mxu0 0
    %2949 = vmatpush1.bf16.msra.mxu0 0
    %2950 = vmatprep.subr.bf16.mxu0 0
    %2951 = vmatpush1.bf16.msra.mxu0 0
    %2952 = vmatprep.subr.bf16.mxu0 0
    %2953 = vmatpush1.bf16.msra.mxu0 0
    %2954 = vmatprep.subr.bf16.mxu0 0
    %2955 = vmatpush1.bf16.msra.mxu0 0
    %2956 = vmatprep.subr.bf16.mxu0 0
    %2957 = vmatpush1.bf16.msra.mxu0 0
    %2958 = vmatprep.subr.bf16.mxu0 0
    %2959 = vmatpush1.bf16.msra.mxu0 0
    %2960 = vmatprep.subr.bf16.mxu0 0
    %2961 = vmatpush1.bf16.msra.mxu0 0
    %2962 = vmatprep.subr.bf16.mxu0 0
    %2963 = vmatpush1.bf16.msra.mxu0 0
    %2964 = vmatprep.subr.bf16.mxu0 0
    %2965 = vmatpush1.bf16.msra.mxu0 0
    %2966 = vmatprep.mubr.bf16.mxu0 0
    %2967 = vmatmul.mubr.bf16.gmra.mrb[0].mxu0 %v2643
    %v2968 = vpop.f32.mrb[0].mxu0
    %v2969 = vadd.f32 0.0, %v2968
    %v2970 = vpop.f32.mrb[0].mxu0
    %v2971 = vpop.f32.mrb[0].mxu0
    %v2972 = vpop.f32.mrb[0].mxu0
    %2973 = vdwg.mxu0
    %v2975 = vrot.slane %v2969, 1
    %v2978 = vadd.f32 %v2927, %v2969
    %v2979 = vadd.f32 %v2933, %v2975
    %v2980 = vadd.f32 %v2978, %v623
    %v2981 = vadd.f32 %v2979, %v623
    %v2982 = vxor.u32 %v2980, 2147483648
    %v2983 = vxor.u32 %v2981, 2147483648
    %v2984 = vmul.f32 %v2982, 1.442695
    %v2985 = vpow.pop %v2984
    %v2986 = vmul.f32 %v2983, 1.442695
    %v2987 = vpow.pop %v2986
    %v2988 = vadd.f32 %v2985, 1.0
    %v2989 = vadd.f32 %v2987, 1.0
    %v2990 = vrcp.pop %v2988
    %v2991 = vmul.f32 1.0, %v2990
    %v2992 = vrcp.pop %v2989
    %v2993 = vmul.f32 1.0, %v2992
    %v2994 = vtanh.pop %v2980
    %v2995 = vtanh.pop %v2981
    %v2996 = vmul.f32 %v2991, %v2617
    %v2997 = vmul.f32 %v2993, %v2618
    %3000 = vrot.lane.b32.xlu0 %v2994, 64
    %v3001 = vpop.permute.xlu0 %3000
    %3002 = vrot.lane.b32.xlu0 %v2995, 64
    %v3003 = vpop.permute.xlu0 %3002
    %v3006 = vmul.f32 %v2991, %v3001
    %v3007 = vmul.f32 %v2993, %v3003
    %3010 = vrot.lane.b32.xlu0 %v3006, 32
    %v3011 = vpop.permute.xlu0 %3010
    %3012 = vrot.lane.b32.xlu0 %v3007, 32
    %v3013 = vpop.permute.xlu0 %3012
    %v3016 = vadd.f32 %v2996, %v3011
    %v3017 = vadd.f32 %v2997, %v3013
    %v3018 = vtanh.pop %v3016
    %v3019 = vtanh.pop %v3017
    %3022 = vrot.lane.b32.xlu0 %v3018, 64
    %v3023 = vpop.permute.xlu0 %3022
    %3024 = vrot.lane.b32.xlu0 %v3019, 64
    %v3025 = vpop.permute.xlu0 %3024
    %v3028 = vmul.f32 %v2991, %v3023
    %v3029 = vmul.f32 %v2993, %v3025
    %v3030 = vpack.c.bf16 %v3028, %v3028
    %v3031 = vpack.c.bf16 %v3029, %v3029
    %v3034 = vunpack.c.l.b16 %v3030
    %v3035 = vunpack.c.l.b16 %v3031
    %v3036 = vrot.slane %v3035, 7
    %v3037 = vsel %vm762, %v3036, %v3034
    %v3038 = vpack.c.b16 %v3037, %v3037
    %3039 = vrot.lane.b32.xlu0 %v3038, 32
    %v3040 = vpop.permute.xlu0 %3039
    %v3042 = vsel %vm272, %v3040, 0
    %3044 = vmatprep.subr.bf16.mxu0 0
    %3045 = vmatpush1.bf16.msra.mxu0 %v208
    %3046 = vmatprep.subr.bf16.mxu0 0
    %3047 = vmatpush1.bf16.msra.mxu0 %v209
    %3048 = vmatprep.subr.bf16.mxu0 0
    %3049 = vmatpush1.bf16.msra.mxu0 0
    %3050 = vmatprep.subr.bf16.mxu0 0
    %3051 = vmatpush1.bf16.msra.mxu0 0
    %3052 = vmatprep.subr.bf16.mxu0 0
    %3053 = vmatpush1.bf16.msra.mxu0 0
    %3054 = vmatprep.subr.bf16.mxu0 0
    %3055 = vmatpush1.bf16.msra.mxu0 0
    %3056 = vmatprep.subr.bf16.mxu0 0
    %3057 = vmatpush1.bf16.msra.mxu0 0
    %3058 = vmatprep.subr.bf16.mxu0 0
    %3059 = vmatpush1.bf16.msra.mxu0 0
    %3060 = vmatprep.subr.bf16.mxu0 0
    %3061 = vmatpush1.bf16.msra.mxu0 0
    %3062 = vmatprep.subr.bf16.mxu0 0
    %3063 = vmatpush1.bf16.msra.mxu0 0
    %3064 = vmatprep.subr.bf16.mxu0 0
    %3065 = vmatpush1.bf16.msra.mxu0 0
    %3066 = vmatprep.subr.bf16.mxu0 0
    %3067 = vmatpush1.bf16.msra.mxu0 0
    %3068 = vmatprep.subr.bf16.mxu0 0
    %3069 = vmatpush1.bf16.msra.mxu0 0
    %3070 = vmatprep.subr.bf16.mxu0 0
    %3071 = vmatpush1.bf16.msra.mxu0 0
    %3072 = vmatprep.subr.bf16.mxu0 0
    %3073 = vmatpush1.bf16.msra.mxu0 0
    %3074 = vmatprep.subr.bf16.mxu0 0
    %3075 = vmatpush1.bf16.msra.mxu0 0
    %3076 = vmatprep.mubr.bf16.mxu0 0
    %3077 = vmatmul.mubr.bf16.gmra.mrb[0].mxu0 %v3042
    %v3078 = vpop.f32.mrb[0].mxu0
    %v3079 = vadd.f32 0.0, %v3078
    %v3080 = vpop.f32.mrb[0].mxu0
    %v3081 = vpop.f32.mrb[0].mxu0
    %v3082 = vpop.f32.mrb[0].mxu0
    %3083 = vdwg.mxu0
    %v3086 = vunpack.c.l.s4 1966171168
    %v3087 = vunpack.c.0.s8 %v3086
    %v3088 = vlaneseq
    %v3089 = vshrl.u32 %v3088, 7
    %v3090 = vsub.s32 %v3087, %v3089
    %v3091 = vrot.slane %v3079, %v3090
    %v3092 = vcombine.high %v3091, %v3091
    %v3094 = vunpack.c.l.s4 1966171168
    %v3095 = vunpack.c.0.s8 %v3094
    %v3096 = vlaneseq
    %v3097 = vshrl.u32 %v3096, 7
    %v3098 = vsub.s32 %v3095, %v3097
    %v3099 = vrot.slane %v3091, %v3098
    %v3101 = vunpack.c.l.s4 1966171168
    %v3102 = vunpack.c.0.s8 %v3101
    %v3103 = vlaneseq
    %v3104 = vshrl.u32 %v3103, 7
    %v3105 = vsub.s32 %v3102, %v3104
    %v3106 = vrot.slane %v3092, %v3105
    %v3107 = vlaneseq
    %v3108 = vshrl.u32 %v3107, 7
    %v3109 = vsub.s32 0, %v3108
    %v3110 = vrot.slane %v3099, %v3109
    %v3111 = vlaneseq
    %v3112 = vshrl.u32 %v3111, 7
    %v3113 = vsub.s32 0, %v3112
    %v3114 = vrot.slane %v3106, %v3113
    %v3117 = vadd.f32 %v513, %v3110
    %v3118 = vadd.f32 %v516, %v3114
    %v3119 = vtanh.pop %v3117
    %v3120 = vtanh.pop %v3118
    %v3121 = vmul.f32 %v3119, %v742
    %v3122 = vmul.f32 %v3120, %v742
    %v3123 = vsel %vm272, %v3121, 0.0
    %3124 = vadd.xlane.f32.xlu0 %v3123
    %v3125 = vpop.xlane.xlu0 %3124
    %v3126 = vsel %vm272, %v3122, 0.0
    %3127 = vadd.xlane.f32.xlu0 %v3126
    %v3128 = vpop.xlane.xlu0 %3127
    %v3129 = vmul.f32 %v2905, 1e+09
    %v3131 = vlaneseq
    %v3132 = vshrl.u32 %v3131, 7
    %v3133 = vsub.s32 0, %v3132
    %v3134 = vrot.slane %v3129, %v3133
    %3136 = vbcast.lane.b32.xlu0 %v3134, 256
    %v3137 = vpop.permute.xlu0 %3136
    %v3138 = vlaneseq
    %v3139 = vshrl.u32 %v3138, 7
    %v3140 = vsub.s32 1, %v3139
    %v3141 = vrot.slane %v3129, %v3140
    %3143 = vbcast.lane.b32.xlu0 %v3141, 256
    %v3144 = vpop.permute.xlu0 %3143
    %v3147 = vsub.f32 %v3125, %v3137
    %v3148 = vsub.f32 %v3128, %v3144
    %3151 = vset.pattern.permute.xlu0 0
    %3152 = vperm.xlu0 %3151, %v3147
    %v3153 = vpop.permute.xlu0 %3152
    %3154 = vset.pattern.permute.xlu0 0
    %3155 = vperm.xlu0 %3154, %v3148
    %v3156 = vpop.permute.xlu0 %3155
    %v3157 = vlaneseq
    %v3158 = vshrl.u32 %v3157, 7
    %v3159 = vsub.s32 %v522, %v3158
    %v3160 = vrot.slane %v3153, %v3159
    %v3161 = vlaneseq
    %v3162 = vshrl.u32 %v3161, 7
    %v3163 = vsub.s32 %v522, %v3162
    %v3164 = vrot.slane %v3156, %v3163
    %v3165 = vsel %vm762, %v3164, %v3160
    %v3167 = vsel %vm765, %v3165, -inf
    %3168 = vmax.xlane.f32.xlu0 %v3167
    %v3169 = vpop.xlane.xlu0 %3168
    %v3171 = vlaneseq
    %v3172 = vshrl.u32 %v3171, 7
    %v3173 = vsub.s32 0, %v3172
    %v3174 = vrot.slane %v3169, %v3173
    %v3175 = vlaneseq
    %v3176 = vshrl.u32 %v3175, 7
    %v3177 = vsub.s32 1, %v3176
    %v3178 = vrot.slane %v3169, %v3177
    %v3181 = vsub.f32 %v3147, %v3174
    %v3182 = vsub.f32 %v3148, %v3178
    %v3183 = vmul.f32 %v3181, 1.442695
    %v3184 = vpow.pop %v3183
    %v3185 = vmul.f32 %v3182, 1.442695
    %v3186 = vpow.pop %v3185
    %3189 = vset.pattern.permute.xlu0 0
    %3190 = vperm.xlu0 %3189, %v3184
    %v3191 = vpop.permute.xlu0 %3190
    %3192 = vset.pattern.permute.xlu0 0
    %3193 = vperm.xlu0 %3192, %v3186
    %v3194 = vpop.permute.xlu0 %3193
    %v3195 = vlaneseq
    %v3196 = vshrl.u32 %v3195, 7
    %v3197 = vsub.s32 %v522, %v3196
    %v3198 = vrot.slane %v3191, %v3197
    %v3199 = vlaneseq
    %v3200 = vshrl.u32 %v3199, 7
    %v3201 = vsub.s32 %v522, %v3200
    %v3202 = vrot.slane %v3194, %v3201
    %v3203 = vsel %vm762, %v3202, %v3198
    %v3205 = vsel %vm765, %v3203, 0.0
    %3206 = vadd.xlane.f32.xlu0 %v3205
    %v3207 = vpop.xlane.xlu0 %3206
    %v3208 = vlog2.pop %v3207
    %v3209 = vmul.f32 %v3208, 0.6931472
    %v3210 = vadd.f32 %v3169, %v3209
    %v3212 = vlaneseq
    %v3213 = vshrl.u32 %v3212, 7
    %v3214 = vsub.s32 0, %v3213
    %v3215 = vrot.slane %v3210, %v3214
    %v3216 = vlaneseq
    %v3217 = vshrl.u32 %v3216, 7
    %v3218 = vsub.s32 1, %v3217
    %v3219 = vrot.slane %v3210, %v3218
    %v3222 = vsub.f32 %v3147, %v3215
    %v3223 = vsub.f32 %v3148, %v3219
    %vm3224 = vcmp.eq.f32.partialorder %v3147, %v3174
    %vm3225 = vcmp.eq.f32.partialorder %v3148, %v3178
    %v3226 = vsel %vm3224, %v827, 8
    %v3227 = vsel %vm3225, %v827, 8
    %3228 = vset.pattern.permute.xlu0 0
    %3229 = vperm.xlu0 %3228, %v3226
    %v3230 = vpop.permute.xlu0 %3229
    %3231 = vset.pattern.permute.xlu0 0
    %3232 = vperm.xlu0 %3231, %v3227
    %v3233 = vpop.permute.xlu0 %3232
    %v3234 = vlaneseq
    %v3235 = vshrl.u32 %v3234, 7
    %v3236 = vsub.s32 %v522, %v3235
    %v3237 = vrot.slane %v3230, %v3236
    %v3238 = vlaneseq
    %v3239 = vshrl.u32 %v3238, 7
    %v3240 = vsub.s32 %v522, %v3239
    %v3241 = vrot.slane %v3233, %v3240
    %v3242 = vsel %vm762, %v3241, %v3237
    %v3243 = vsel %vm765, %v3242, 2147483647
    %v3244 = vand.u32 %v3243, 65535
    %v3245 = vshra.s32 %v3243, 16
    %v3246 = vcvt.s32.f32 %v3244
    %v3247 = vcvt.s32.f32 %v3245
    %3248 = vmin.xlane.f32.xlu0 %v3247
    %v3249 = vpop.xlane.xlu0 %3248
    %vm3250 = vcmp.eq.f32.partialorder %v3247, %v3249
    %v3251 = vsel %vm3250, %v3246, inf
    %3252 = vmin.xlane.f32.xlu0 %v3251
    %v3253 = vpop.xlane.xlu0 %3252
    %v3254 = vcvt.f32.s32 %v3253
    %v3255 = vcvt.f32.s32 %v3249
    %v3256 = vshll.u32 %v3255, 16
    %v3257 = vadd.s32 %v3256, %v3254
    %vm3258 = vcmp.eq.s32.totalorder %v522, %v3257
    %v3259 = vsel %vm3258, 1, 0
    %v3260 = vcvt.s32.f32 %v3259
    %vm3261 = vcmp.eq.s32.totalorder %v522, 6
    %v3262 = vsel %vm3261, %v3257, %v2863
    %v3264 = vlaneseq
    %v3265 = vshrl.u32 %v3264, 7
    %v3266 = vsub.s32 0, %v3265
    %v3267 = vrot.slane %v3260, %v3266
    %3269 = vbcast.lane.b32.xlu0 %v3267, 256
    %v3270 = vpop.permute.xlu0 %3269
    %v3271 = vlaneseq
    %v3272 = vshrl.u32 %v3271, 7
    %v3273 = vsub.s32 1, %v3272
    %v3274 = vrot.slane %v3260, %v3273
    %3276 = vbcast.lane.b32.xlu0 %v3274, 256
    %v3277 = vpop.permute.xlu0 %3276
    %v3280 = vmul.f32 %v3222, %v3270
    %v3281 = vmul.f32 %v3223, %v3277
    %3284 = vset.pattern.permute.xlu0 0
    %3285 = vperm.xlu0 %3284, %v3280
    %v3286 = vpop.permute.xlu0 %3285
    %3287 = vset.pattern.permute.xlu0 0
    %3288 = vperm.xlu0 %3287, %v3281
    %v3289 = vpop.permute.xlu0 %3288
    %v3290 = vlaneseq
    %v3291 = vshrl.u32 %v3290, 7
    %v3292 = vsub.s32 %v522, %v3291
    %v3293 = vrot.slane %v3286, %v3292
    %v3294 = vlaneseq
    %v3295 = vshrl.u32 %v3294, 7
    %v3296 = vsub.s32 %v522, %v3295
    %v3297 = vrot.slane %v3289, %v3296
    %v3298 = vsel %vm762, %v3297, %v3293
    %v3300 = vsel %vm765, %v3298, 0.0
    %3301 = vadd.xlane.f32.xlu0 %v3300
    %v3302 = vpop.xlane.xlu0 %3301
    %v3303 = vsel %vm3261, %v3302, %v2904
    %v3304 = vadd.f32 %v2905, %v3260
    %v3305 = vlaneseq
    %v3306 = vshrl.u32 %v3305, 7
    %v3307 = vsub.s32 0, %v3306
    %v3308 = vrot.slane %v3260, %v3307
    %3310 = vbcast.lane.b32.xlu0 %v3308, 256
    %v3311 = vpop.permute.xlu0 %3310
    %v3312 = vlaneseq
    %v3313 = vshrl.u32 %v3312, 7
    %v3314 = vsub.s32 1, %v3313
    %v3315 = vrot.slane %v3260, %v3314
    %3317 = vbcast.lane.b32.xlu0 %v3315, 256
    %v3318 = vpop.permute.xlu0 %3317
    %v3319 = vmul.f32 %v3311, %v472
    %v3320 = vmul.f32 %v3318, %v475
    %v3321 = vrot.slane %v3319, 4
    %v3322 = vadd.f32 %v3319, %v3321
    %v3323 = vrot.slane %v3322, 2
    %v3324 = vadd.f32 %v3322, %v3323
    %v3325 = vrot.slane %v3324, 1
    %v3326 = vadd.f32 %v3324, %v3325
    %v3327 = vrot.slane %v3320, 4
    %v3328 = vadd.f32 %v3320, %v3327
    %v3329 = vrot.slane %v3328, 2
    %v3330 = vadd.f32 %v3328, %v3329
    %v3331 = vrot.slane %v3330, 1
    %v3332 = vadd.f32 %v3330, %v3331
    %3333 = vmatprep.subr.bf16.mxu0 0
    %3334 = vmatpush1.bf16.msra.mxu0 %v196
    %3335 = vmatprep.subr.bf16.mxu0 0
    %3336 = vmatpush1.bf16.msra.mxu0 %v197
    %3337 = vmatprep.subr.bf16.mxu0 0
    %3338 = vmatpush1.bf16.msra.mxu0 0
    %3339 = vmatprep.subr.bf16.mxu0 0
    %3340 = vmatpush1.bf16.msra.mxu0 0
    %3341 = vmatprep.subr.bf16.mxu0 0
    %3342 = vmatpush1.bf16.msra.mxu0 0
    %3343 = vmatprep.subr.bf16.mxu0 0
    %3344 = vmatpush1.bf16.msra.mxu0 0
    %3345 = vmatprep.subr.bf16.mxu0 0
    %3346 = vmatpush1.bf16.msra.mxu0 0
    %3347 = vmatprep.subr.bf16.mxu0 0
    %3348 = vmatpush1.bf16.msra.mxu0 0
    %3349 = vmatprep.subr.bf16.mxu0 0
    %3350 = vmatpush1.bf16.msra.mxu0 0
    %3351 = vmatprep.subr.bf16.mxu0 0
    %3352 = vmatpush1.bf16.msra.mxu0 0
    %3353 = vmatprep.subr.bf16.mxu0 0
    %3354 = vmatpush1.bf16.msra.mxu0 0
    %3355 = vmatprep.subr.bf16.mxu0 0
    %3356 = vmatpush1.bf16.msra.mxu0 0
    %3357 = vmatprep.subr.bf16.mxu0 0
    %3358 = vmatpush1.bf16.msra.mxu0 0
    %3359 = vmatprep.subr.bf16.mxu0 0
    %3360 = vmatpush1.bf16.msra.mxu0 0
    %3361 = vmatprep.subr.bf16.mxu0 0
    %3362 = vmatpush1.bf16.msra.mxu0 0
    %3363 = vmatprep.subr.bf16.mxu0 0
    %3364 = vmatpush1.bf16.msra.mxu0 0
    %3365 = vmatprep.mubr.bf16.mxu0 0
    %3366 = vmatmul.mubr.bf16.gmra.mrb[0].mxu0 %v3042
    %v3367 = vpop.f32.mrb[0].mxu0
    %v3368 = vadd.f32 0.0, %v3367
    %v3369 = vpop.f32.mrb[0].mxu0
    %v3370 = vpop.f32.mrb[0].mxu0
    %v3371 = vpop.f32.mrb[0].mxu0
    %3372 = vdwg.mxu0
    %v3374 = vrot.slane %v3368, 1
    %v3377 = vadd.f32 %v3326, %v3368
    %v3378 = vadd.f32 %v3332, %v3374
    %v3379 = vadd.f32 %v3377, %v623
    %v3380 = vadd.f32 %v3378, %v623
    %v3381 = vxor.u32 %v3379, 2147483648
    %v3382 = vxor.u32 %v3380, 2147483648
    %v3383 = vmul.f32 %v3381, 1.442695
    %v3384 = vpow.pop %v3383
    %v3385 = vmul.f32 %v3382, 1.442695
    %v3386 = vpow.pop %v3385
    %v3387 = vadd.f32 %v3384, 1.0
    %v3388 = vadd.f32 %v3386, 1.0
    %v3389 = vrcp.pop %v3387
    %v3390 = vmul.f32 1.0, %v3389
    %v3391 = vrcp.pop %v3388
    %v3392 = vmul.f32 1.0, %v3391
    %v3393 = vtanh.pop %v3379
    %v3394 = vtanh.pop %v3380
    %v3395 = vmul.f32 %v3390, %v3016
    %v3396 = vmul.f32 %v3392, %v3017
    %3399 = vrot.lane.b32.xlu0 %v3393, 64
    %v3400 = vpop.permute.xlu0 %3399
    %3401 = vrot.lane.b32.xlu0 %v3394, 64
    %v3402 = vpop.permute.xlu0 %3401
    %v3405 = vmul.f32 %v3390, %v3400
    %v3406 = vmul.f32 %v3392, %v3402
    %3409 = vrot.lane.b32.xlu0 %v3405, 32
    %v3410 = vpop.permute.xlu0 %3409
    %3411 = vrot.lane.b32.xlu0 %v3406, 32
    %v3412 = vpop.permute.xlu0 %3411
    %v3415 = vadd.f32 %v3395, %v3410
    %v3416 = vadd.f32 %v3396, %v3412
    %v3417 = vtanh.pop %v3415
    %v3418 = vtanh.pop %v3416
    %3421 = vrot.lane.b32.xlu0 %v3417, 64
    %v3422 = vpop.permute.xlu0 %3421
    %3423 = vrot.lane.b32.xlu0 %v3418, 64
    %v3424 = vpop.permute.xlu0 %3423
    %v3427 = vmul.f32 %v3390, %v3422
    %v3428 = vmul.f32 %v3392, %v3424
    %v3429 = vpack.c.bf16 %v3427, %v3427
    %v3430 = vpack.c.bf16 %v3428, %v3428
    %v3433 = vunpack.c.l.b16 %v3429
    %v3434 = vunpack.c.l.b16 %v3430
    %v3435 = vrot.slane %v3434, 7
    %v3436 = vsel %vm762, %v3435, %v3433
    %v3437 = vpack.c.b16 %v3436, %v3436
    %3438 = vrot.lane.b32.xlu0 %v3437, 32
    %v3439 = vpop.permute.xlu0 %3438
    %v3441 = vsel %vm272, %v3439, 0
    %3443 = vmatprep.subr.bf16.mxu0 0
    %3444 = vmatpush1.bf16.msra.mxu0 %v208
    %3445 = vmatprep.subr.bf16.mxu0 0
    %3446 = vmatpush1.bf16.msra.mxu0 %v209
    %3447 = vmatprep.subr.bf16.mxu0 0
    %3448 = vmatpush1.bf16.msra.mxu0 0
    %3449 = vmatprep.subr.bf16.mxu0 0
    %3450 = vmatpush1.bf16.msra.mxu0 0
    %3451 = vmatprep.subr.bf16.mxu0 0
    %3452 = vmatpush1.bf16.msra.mxu0 0
    %3453 = vmatprep.subr.bf16.mxu0 0
    %3454 = vmatpush1.bf16.msra.mxu0 0
    %3455 = vmatprep.subr.bf16.mxu0 0
    %3456 = vmatpush1.bf16.msra.mxu0 0
    %3457 = vmatprep.subr.bf16.mxu0 0
    %3458 = vmatpush1.bf16.msra.mxu0 0
    %3459 = vmatprep.subr.bf16.mxu0 0
    %3460 = vmatpush1.bf16.msra.mxu0 0
    %3461 = vmatprep.subr.bf16.mxu0 0
    %3462 = vmatpush1.bf16.msra.mxu0 0
    %3463 = vmatprep.subr.bf16.mxu0 0
    %3464 = vmatpush1.bf16.msra.mxu0 0
    %3465 = vmatprep.subr.bf16.mxu0 0
    %3466 = vmatpush1.bf16.msra.mxu0 0
    %3467 = vmatprep.subr.bf16.mxu0 0
    %3468 = vmatpush1.bf16.msra.mxu0 0
    %3469 = vmatprep.subr.bf16.mxu0 0
    %3470 = vmatpush1.bf16.msra.mxu0 0
    %3471 = vmatprep.subr.bf16.mxu0 0
    %3472 = vmatpush1.bf16.msra.mxu0 0
    %3473 = vmatprep.subr.bf16.mxu0 0
    %3474 = vmatpush1.bf16.msra.mxu0 0
    %3475 = vmatprep.mubr.bf16.mxu0 0
    %3476 = vmatmul.mubr.bf16.gmra.mrb[0].mxu0 %v3441
    %v3477 = vpop.f32.mrb[0].mxu0
    %v3478 = vadd.f32 0.0, %v3477
    %v3479 = vpop.f32.mrb[0].mxu0
    %v3480 = vpop.f32.mrb[0].mxu0
    %v3481 = vpop.f32.mrb[0].mxu0
    %3482 = vdwg.mxu0
    %v3485 = vunpack.c.l.s4 1966171168
    %v3486 = vunpack.c.0.s8 %v3485
    %v3487 = vlaneseq
    %v3488 = vshrl.u32 %v3487, 7
    %v3489 = vsub.s32 %v3486, %v3488
    %v3490 = vrot.slane %v3478, %v3489
    %v3491 = vcombine.high %v3490, %v3490
    %v3493 = vunpack.c.l.s4 1966171168
    %v3494 = vunpack.c.0.s8 %v3493
    %v3495 = vlaneseq
    %v3496 = vshrl.u32 %v3495, 7
    %v3497 = vsub.s32 %v3494, %v3496
    %v3498 = vrot.slane %v3490, %v3497
    %v3500 = vunpack.c.l.s4 1966171168
    %v3501 = vunpack.c.0.s8 %v3500
    %v3502 = vlaneseq
    %v3503 = vshrl.u32 %v3502, 7
    %v3504 = vsub.s32 %v3501, %v3503
    %v3505 = vrot.slane %v3491, %v3504
    %v3506 = vlaneseq
    %v3507 = vshrl.u32 %v3506, 7
    %v3508 = vsub.s32 0, %v3507
    %v3509 = vrot.slane %v3498, %v3508
    %v3510 = vlaneseq
    %v3511 = vshrl.u32 %v3510, 7
    %v3512 = vsub.s32 0, %v3511
    %v3513 = vrot.slane %v3505, %v3512
    %v3516 = vadd.f32 %v513, %v3509
    %v3517 = vadd.f32 %v516, %v3513
    %v3518 = vtanh.pop %v3516
    %v3519 = vtanh.pop %v3517
    %v3520 = vmul.f32 %v3518, %v742
    %v3521 = vmul.f32 %v3519, %v742
    %v3522 = vsel %vm272, %v3520, 0.0
    %3523 = vadd.xlane.f32.xlu0 %v3522
    %v3524 = vpop.xlane.xlu0 %3523
    %v3525 = vsel %vm272, %v3521, 0.0
    %3526 = vadd.xlane.f32.xlu0 %v3525
    %v3527 = vpop.xlane.xlu0 %3526
    %v3528 = vmul.f32 %v3304, 1e+09
    %v3530 = vlaneseq
    %v3531 = vshrl.u32 %v3530, 7
    %v3532 = vsub.s32 0, %v3531
    %v3533 = vrot.slane %v3528, %v3532
    %3535 = vbcast.lane.b32.xlu0 %v3533, 256
    %v3536 = vpop.permute.xlu0 %3535
    %v3537 = vlaneseq
    %v3538 = vshrl.u32 %v3537, 7
    %v3539 = vsub.s32 1, %v3538
    %v3540 = vrot.slane %v3528, %v3539
    %3542 = vbcast.lane.b32.xlu0 %v3540, 256
    %v3543 = vpop.permute.xlu0 %3542
    %v3546 = vsub.f32 %v3524, %v3536
    %v3547 = vsub.f32 %v3527, %v3543
    %3550 = vset.pattern.permute.xlu0 0
    %3551 = vperm.xlu0 %3550, %v3546
    %v3552 = vpop.permute.xlu0 %3551
    %3553 = vset.pattern.permute.xlu0 0
    %3554 = vperm.xlu0 %3553, %v3547
    %v3555 = vpop.permute.xlu0 %3554
    %v3556 = vlaneseq
    %v3557 = vshrl.u32 %v3556, 7
    %v3558 = vsub.s32 %v522, %v3557
    %v3559 = vrot.slane %v3552, %v3558
    %v3560 = vlaneseq
    %v3561 = vshrl.u32 %v3560, 7
    %v3562 = vsub.s32 %v522, %v3561
    %v3563 = vrot.slane %v3555, %v3562
    %v3564 = vsel %vm762, %v3563, %v3559
    %v3566 = vsel %vm765, %v3564, -inf
    %3567 = vmax.xlane.f32.xlu0 %v3566
    %v3568 = vpop.xlane.xlu0 %3567
    %v3570 = vlaneseq
    %v3571 = vshrl.u32 %v3570, 7
    %v3572 = vsub.s32 0, %v3571
    %v3573 = vrot.slane %v3568, %v3572
    %v3574 = vlaneseq
    %v3575 = vshrl.u32 %v3574, 7
    %v3576 = vsub.s32 1, %v3575
    %v3577 = vrot.slane %v3568, %v3576
    %v3580 = vsub.f32 %v3546, %v3573
    %v3581 = vsub.f32 %v3547, %v3577
    %v3582 = vmul.f32 %v3580, 1.442695
    %v3583 = vpow.pop %v3582
    %v3584 = vmul.f32 %v3581, 1.442695
    %v3585 = vpow.pop %v3584
    %3588 = vset.pattern.permute.xlu0 0
    %3589 = vperm.xlu0 %3588, %v3583
    %v3590 = vpop.permute.xlu0 %3589
    %3591 = vset.pattern.permute.xlu0 0
    %3592 = vperm.xlu0 %3591, %v3585
    %v3593 = vpop.permute.xlu0 %3592
    %v3594 = vlaneseq
    %v3595 = vshrl.u32 %v3594, 7
    %v3596 = vsub.s32 %v522, %v3595
    %v3597 = vrot.slane %v3590, %v3596
    %v3598 = vlaneseq
    %v3599 = vshrl.u32 %v3598, 7
    %v3600 = vsub.s32 %v522, %v3599
    %v3601 = vrot.slane %v3593, %v3600
    %v3602 = vsel %vm762, %v3601, %v3597
    %v3604 = vsel %vm765, %v3602, 0.0
    %3605 = vadd.xlane.f32.xlu0 %v3604
    %v3606 = vpop.xlane.xlu0 %3605
    %v3607 = vlog2.pop %v3606
    %v3608 = vmul.f32 %v3607, 0.6931472
    %v3609 = vadd.f32 %v3568, %v3608
    %v3611 = vlaneseq
    %v3612 = vshrl.u32 %v3611, 7
    %v3613 = vsub.s32 0, %v3612
    %v3614 = vrot.slane %v3609, %v3613
    %v3615 = vlaneseq
    %v3616 = vshrl.u32 %v3615, 7
    %v3617 = vsub.s32 1, %v3616
    %v3618 = vrot.slane %v3609, %v3617
    %v3621 = vsub.f32 %v3546, %v3614
    %v3622 = vsub.f32 %v3547, %v3618
    %vm3623 = vcmp.eq.f32.partialorder %v3546, %v3573
    %vm3624 = vcmp.eq.f32.partialorder %v3547, %v3577
    %v3625 = vsel %vm3623, %v827, 8
    %v3626 = vsel %vm3624, %v827, 8
    %3627 = vset.pattern.permute.xlu0 0
    %3628 = vperm.xlu0 %3627, %v3625
    %v3629 = vpop.permute.xlu0 %3628
    %3630 = vset.pattern.permute.xlu0 0
    %3631 = vperm.xlu0 %3630, %v3626
    %v3632 = vpop.permute.xlu0 %3631
    %v3633 = vlaneseq
    %v3634 = vshrl.u32 %v3633, 7
    %v3635 = vsub.s32 %v522, %v3634
    %v3636 = vrot.slane %v3629, %v3635
    %v3637 = vlaneseq
    %v3638 = vshrl.u32 %v3637, 7
    %v3639 = vsub.s32 %v522, %v3638
    %v3640 = vrot.slane %v3632, %v3639
    %v3641 = vsel %vm762, %v3640, %v3636
    %v3642 = vsel %vm765, %v3641, 2147483647
    %v3643 = vand.u32 %v3642, 65535
    %v3644 = vshra.s32 %v3642, 16
    %v3645 = vcvt.s32.f32 %v3643
    %v3646 = vcvt.s32.f32 %v3644
    %3647 = vmin.xlane.f32.xlu0 %v3646
    %v3648 = vpop.xlane.xlu0 %3647
    %vm3649 = vcmp.eq.f32.partialorder %v3646, %v3648
    %v3650 = vsel %vm3649, %v3645, inf
    %3651 = vmin.xlane.f32.xlu0 %v3650
    %v3652 = vpop.xlane.xlu0 %3651
    %v3653 = vcvt.f32.s32 %v3652
    %v3654 = vcvt.f32.s32 %v3648
    %v3655 = vshll.u32 %v3654, 16
    %v3656 = vadd.s32 %v3655, %v3653
    %vm3657 = vcmp.eq.s32.totalorder %v522, %v3656
    %v3658 = vsel %vm3657, 1, 0
    %v3659 = vcvt.s32.f32 %v3658
    %vm3660 = vcmp.eq.s32.totalorder %v522, 7
    %v3661 = vsel %vm3660, %v3656, %v3262
    %v3663 = vlaneseq
    %v3664 = vshrl.u32 %v3663, 7
    %v3665 = vsub.s32 0, %v3664
    %v3666 = vrot.slane %v3659, %v3665
    %3668 = vbcast.lane.b32.xlu0 %v3666, 256
    %v3669 = vpop.permute.xlu0 %3668
    %v3670 = vlaneseq
    %v3671 = vshrl.u32 %v3670, 7
    %v3672 = vsub.s32 1, %v3671
    %v3673 = vrot.slane %v3659, %v3672
    %3675 = vbcast.lane.b32.xlu0 %v3673, 256
    %v3676 = vpop.permute.xlu0 %3675
    %v3679 = vmul.f32 %v3621, %v3669
    %v3680 = vmul.f32 %v3622, %v3676
    %3683 = vset.pattern.permute.xlu0 0
    %3684 = vperm.xlu0 %3683, %v3679
    %v3685 = vpop.permute.xlu0 %3684
    %3686 = vset.pattern.permute.xlu0 0
    %3687 = vperm.xlu0 %3686, %v3680
    %v3688 = vpop.permute.xlu0 %3687
    %v3689 = vlaneseq
    %v3690 = vshrl.u32 %v3689, 7
    %v3691 = vsub.s32 %v522, %v3690
    %v3692 = vrot.slane %v3685, %v3691
    %v3693 = vlaneseq
    %v3694 = vshrl.u32 %v3693, 7
    %v3695 = vsub.s32 %v522, %v3694
    %v3696 = vrot.slane %v3688, %v3695
    %v3697 = vsel %vm762, %v3696, %v3692
    %v3699 = vsel %vm765, %v3697, 0.0
    %3700 = vadd.xlane.f32.xlu0 %v3699
    %v3701 = vpop.xlane.xlu0 %3700
    %v3702 = vsel %vm3660, %v3701, %v3303
    %3703 = vst.msk [vmem:[#allocation17] sm:$0x3] %vm765, %v3661
    %3704 = vst.msk [vmem:[#allocation18] sm:$0x3] %vm765, %v3702
    // Predicated region
    $region110: #{pfspnet_forward.1} parent=1 // pred_check
      _
    $region111: #{pfspnet_forward.1} parent=1 // pred_check_branch
      %3706 = sbr.rel (0) target = $region113
    $region112: #{pfspnet_forward.1} parent=1 // pred_region
      %s3708 = ssub.s32 32, 32
      %3709 = vsyncadd [#allocation4], %s3708
      %s3711 = sshll.u32 [#allocation17], 4
      %s3712 = int_to_ptr.vmem [resolvable:$true] %s3711
      %3714 = dma.vmem_to_hbm [thread:$0]  %s3712, 32, %s18, [#allocation4]
    $region113: #{pfspnet_forward.1} parent=1 // pred_fallthru
      _
    // Predicated region
    $region114: #{pfspnet_forward.1} parent=1 // pred_check
      _
    $region115: #{pfspnet_forward.1} parent=1 // pred_check_branch
      %3716 = sbr.rel (0) target = $region117
    $region116: #{pfspnet_forward.1} parent=1 // pred_region
      %s3718 = ssub.s32 32, 32
      %3719 = vsyncadd [#allocation19], %s3718
      %s3721 = sshll.u32 [#allocation18], 4
      %s3722 = int_to_ptr.vmem [resolvable:$true] %s3721
      %3724 = dma.vmem_to_hbm [thread:$0]  %s3722, 32, %s19, [#allocation19]
    $region117: #{pfspnet_forward.1} parent=1 // pred_fallthru
      _
    // Predicated region
    $region118: #{pfspnet_forward.1} parent=1 // pred_check
      _
    $region119: #{pfspnet_forward.1} parent=1 // pred_check_branch
      %3726 = sbr.rel (0) target = $region121
    $region120: #{pfspnet_forward.1} parent=1 // pred_region
      %s3728 = ssub.s32 256, 256
      %3729 = vsyncadd [#allocation19], %s3728
      %s3730 = sshll.u32 [#allocation20], 4
      %s3731 = int_to_ptr.vmem [resolvable:$true] %s3730
      %3736 = dma.vmem_to_hbm [thread:$0]  %s3731, 256, %s20, [#allocation19], 128, 128, 8
    $region121: #{pfspnet_forward.1} parent=1 // pred_fallthru
      _
    // Predicated region
    $region122: #{pfspnet_forward.1} parent=1 // pred_check
      _
    $region123: #{pfspnet_forward.1} parent=1 // pred_check_branch
      %3738 = sbr.rel (0) target = $region125
    $region124: #{pfspnet_forward.1} parent=1 // pred_region
      %3739 = dma.done [#allocation4], 32
    $region125: #{pfspnet_forward.1} parent=1 // pred_fallthru
      _
    // Predicated region
    $region126: #{pfspnet_forward.1} parent=1 // pred_check
      _
    $region127: #{pfspnet_forward.1} parent=1 // pred_check_branch
      %3741 = sbr.rel (0) target = $region129
    $region128: #{pfspnet_forward.1} parent=1 // pred_region
      %3742 = dma.done [#allocation19], 32
    $region129: #{pfspnet_forward.1} parent=1 // pred_fallthru
      _
    // Predicated region
    $region130: #{pfspnet_forward.1} parent=1 // pred_check
      _
    $region131: #{pfspnet_forward.1} parent=1 // pred_check_branch
      %3744 = sbr.rel (0) target = $region133
    $region132: #{pfspnet_forward.1} parent=1 // pred_region
      %3745 = dma.done [#allocation19], 256
    $region133: #{pfspnet_forward.1} parent=1 // pred_fallthru
      _
    %3746 = vsyncpa [#allocation3], 1
    %3747 = vsyncpa [#allocation6], 1
    %3748 = vsyncpa [#allocation9], 1
    %3749 = vsyncpa [#allocation12], 1
    %3750 = vsyncpa [#allocation15], 1
    %3751 = vsyncpa [#allocation4], 1
    %3752 = vsyncpa [#allocation19], 1

</llo_original>
